<compile_context>
chip_gen: v6e
topology: v6e:2x2x1
jax: 0.10.0
libtpu: 0.0.40
codegen_flags: <defaults>
</compile_context>

<pallas_src>
import jax
import jax.numpy as jnp
import numpy as np
from jax.experimental import pallas as pl
from jax.experimental.pallas import tpu as pltpu

# ---- model config (mirrors LSTMTagger.__init__) ----
EMBEDDING_DIM = 30
HIDDEN_DIM = 25
NUM_LAYERS = 3
NUM_DIRS = 2              # bidirectional
VOCAB_SIZE = 50
TAGSET_SIZE = 12
SEQ_LEN = 8

# ---- padded (lane-aligned) kernel layout ----
HW = 32                   # padded hidden width per direction (K rows / state lanes)
GS = 128                  # gate column stride -> gate slice starts on vreg boundaries
G4 = 4 * GS               # 512: packed gate-row width
KIN = 2 * NUM_DIRS * HW // 2  # 64: unified layer-input width (emb padded / [fwd|rev] concat)
TAGP = 128                # padded tag dim (lane-dense output store)
NEG_PAD = -1e30           # bias for padded tag lanes: exp() underflows to 0 in log_softmax

_GATE_SCALE = (0.5, 0.5, 1.0, 0.5)   # i, f, g, o — 0.5 tanh-sigmoid pre-scale folded in


def _tagger_kernel(emb_ref, wih_ref, whh_ref, b_ref, wlin_ref, blin_ref, out_ref,
                   xbuf, rbuf, xp_f, xp_r):
    """One grid step == one BiLSTM layer. Scratch:
       xbuf (T, 64): layer input/output buffer (fwd cols [0:32], rev cols [32:64]),
       rbuf (T, 32): reverse-direction staging, xp_f/xp_r (T, 512): hoisted projections."""
    l = pl.program_id(0)
    T = xbuf.shape[0]

    @pl.when(l == 0)
    def _():
        xbuf[...] = emb_ref[...]                     # layer-0 input = padded embeddings

    # ---- hoisted input projection for the whole sequence: one K=64 dot per direction ----
    x = xbuf[...]                                    # (T, 64)
    xp_f[...] = (jnp.dot(x, wih_ref[0, :, :], preferred_element_type=jnp.float32)
                 + b_ref[0, :, :])
    xp_r[...] = (jnp.dot(x, wih_ref[1, :, :], preferred_element_type=jnp.float32)
                 + b_ref[1, :, :])

    def cell(g_pre, h, c, d):
        # Recurrent weight streamed from VMEM at each use (not hoisted across the
        # unrolled loop) so its live range never spans the recurrence.
        g = g_pre + jnp.dot(h, whh_ref[d, :, :], preferred_element_type=jnp.float32)  # (1,512)
        t_all = jnp.tanh(g)          # one EUP stream; 0.5 pre-scale folded into i/f/o weights
        i_g = 0.5 * t_all[:, 0 * GS:0 * GS + HW] + 0.5
        f_g = 0.5 * t_all[:, 1 * GS:1 * GS + HW] + 0.5
        g_g = t_all[:, 2 * GS:2 * GS + HW]
        o_g = 0.5 * t_all[:, 3 * GS:3 * GS + HW] + 0.5
        c_new = f_g * c + i_g * g_g
        h_new = o_g * jnp.tanh(c_new)
        return h_new, c_new

    zero = jnp.zeros((1, HW), jnp.float32)
    h_f, c_f, h_r, c_r = zero, zero, zero, zero

    # ---- fully unrolled recurrence (T static); fwd & rev chains interleaved ----
    for t in range(T):
        tr = T - 1 - t
        h_f, c_f = cell(xp_f[t:t + 1, :], h_f, c_f, 0)
        h_r, c_r = cell(xp_r[tr:tr + 1, :], h_r, c_r, 1)
        xbuf[t:t + 1, 0:HW] = h_f                    # lane-aligned column-0 stores
        rbuf[tr:tr + 1, :] = h_r

    xbuf[:, HW:2 * HW] = rbuf[...]                   # single bulk offset store per layer

    # ---- last layer: hidden2tag + log_softmax (padded tag lanes biased to -1e30) ----
    @pl.when(l == pl.num_programs(0) - 1)
    def _():
        logits = (jnp.dot(xbuf[...], wlin_ref[...], preferred_element_type=jnp.float32)
                  + blin_ref[...])
        m = jnp.max(logits, axis=-1, keepdims=True)
        z = logits - m
        out_ref[...] = z - jnp.log(jnp.sum(jnp.exp(z), axis=-1, keepdims=True))


# ---------------- wrapper: pack / pad PyTorch-layout weights and call the kernel ----------------

def _pack_wih(wih, layer):
    """(4H, in_dim) gate-stacked W_ih -> (KIN, G4): gate k's transposed block at
    cols [k*GS : k*GS+H]; input rows at [0:E] (layer 0) or fwd->[0:H], rev->[HW:HW+H]
    (layers >= 1). The 0.5 sigmoid pre-scale is folded into i/f/o columns."""
    H = HIDDEN_DIM
    out = jnp.zeros((KIN, G4), jnp.float32)
    for k in range(4):
        blk = jnp.transpose(wih[k * H:(k + 1) * H, :]).astype(jnp.float32) * _GATE_SCALE[k]
        if layer == 0:
            out = out.at[:EMBEDDING_DIM, k * GS:k * GS + H].set(blk)
        else:
            out = out.at[:H, k * GS:k * GS + H].set(blk[:H])          # fwd-input rows
            out = out.at[HW:HW + H, k * GS:k * GS + H].set(blk[H:])   # rev-input rows
    return out


def _pack_whh(whh):
    H = HIDDEN_DIM
    out = jnp.zeros((HW, G4), jnp.float32)
    for k in range(4):
        out = out.at[:H, k * GS:k * GS + H].set(
            jnp.transpose(whh[k * H:(k + 1) * H, :]).astype(jnp.float32) * _GATE_SCALE[k])
    return out


def _pack_bias(b):
    H = HIDDEN_DIM
    out = jnp.zeros((1, G4), jnp.float32)
    for k in range(4):
        out = out.at[0, k * GS:k * GS + H].set(
            b[k * H:(k + 1) * H].astype(jnp.float32) * _GATE_SCALE[k])
    return out


def lstm_tagger_forward(sentence_ids, params):
    T = sentence_ids.shape[0]
    H, L, TAG = HIDDEN_DIM, NUM_LAYERS, TAGSET_SIZE

    # embedding lookup = gather glue outside the kernel
    emb = params["embedding"][sentence_ids].astype(jnp.float32)           # (T, E)
    emb_p = jnp.zeros((T, KIN), jnp.float32).at[:, :EMBEDDING_DIM].set(emb)

    wih_list, whh_list, b_list = [], [], []
    for l in range(L):
        for d in range(NUM_DIRS):
            p = params["lstm"][(l, d)]
            wih_list.append(_pack_wih(p["wih"], l))
            whh_list.append(_pack_whh(p["whh"]))
            b_list.append(_pack_bias(p["bih"] + p["bhh"]))
    wih_all = jnp.stack(wih_list)                                         # (L*2, KIN, G4)
    whh_all = jnp.stack(whh_list)                                         # (L*2, HW, G4)
    b_all = jnp.stack(b_list)                                             # (L*2, 1, G4)

    wlin = params["wlin"].astype(jnp.float32)                             # (TAG, 2H)
    wlin_p = jnp.zeros((KIN, TAGP), jnp.float32)
    wlin_p = wlin_p.at[:H, :TAG].set(jnp.transpose(wlin[:, :H]))          # fwd rows
    wlin_p = wlin_p.at[HW:HW + H, :TAG].set(jnp.transpose(wlin[:, H:]))   # rev rows
    blin_p = jnp.full((1, TAGP), NEG_PAD, jnp.float32).at[0, :TAG].set(
        params["blin"].astype(jnp.float32))

    out_p = pl.pallas_call(
        _tagger_kernel,
        out_shape=jax.ShapeDtypeStruct((T, TAGP), jnp.float32),
        grid=(L,),
        in_specs=[
            pl.BlockSpec((T, KIN), lambda l: (0, 0)),                     # emb (loaded once)
            pl.BlockSpec((NUM_DIRS, KIN, G4), lambda l: (l, 0, 0)),       # layer l W_ih (both dirs)
            pl.BlockSpec((NUM_DIRS, HW, G4), lambda l: (l, 0, 0)),        # layer l W_hh
            pl.BlockSpec((NUM_DIRS, 1, G4), lambda l: (l, 0, 0)),         # layer l bias
            pl.BlockSpec((KIN, TAGP), lambda l: (0, 0)),                  # hidden2tag weight
            pl.BlockSpec((1, TAGP), lambda l: (0, 0)),                    # hidden2tag bias
        ],
        out_specs=pl.BlockSpec((T, TAGP), lambda l: (0, 0)),
        scratch_shapes=[
            pltpu.VMEM((T, KIN), jnp.float32),                            # xbuf (layer in/out)
            pltpu.VMEM((T, HW), jnp.float32),                             # rbuf (rev staging)
            pltpu.VMEM((T, G4), jnp.float32),                             # xp_f
            pltpu.VMEM((T, G4), jnp.float32),                             # xp_r
        ],
        compiler_params=pltpu.CompilerParams(dimension_semantics=("arbitrary",)),
    )(emb_p, wih_all, whh_all, b_all, wlin_p, blin_p)
    return out_p[:, :TAG]


# ---------------- synthetic init (PyTorch-shaped) + pure-JAX reference ----------------

def init_params(key):
    keys = iter(jax.random.split(key, 64))
    k_lstm = 1.0 / np.sqrt(HIDDEN_DIM)
    params = {"embedding": jax.random.normal(next(keys), (VOCAB_SIZE, EMBEDDING_DIM),
                                             jnp.float32)}
    lstm = {}
    for l in range(NUM_LAYERS):
        in_dim = EMBEDDING_DIM if l == 0 else NUM_DIRS * HIDDEN_DIM
        for d in range(NUM_DIRS):
            lstm[(l, d)] = {
                "wih": jax.random.uniform(next(keys), (4 * HIDDEN_DIM, in_dim),
                                          jnp.float32, -k_lstm, k_lstm),
                "whh": jax.random.uniform(next(keys), (4 * HIDDEN_DIM, HIDDEN_DIM),
                                          jnp.float32, -k_lstm, k_lstm),
                "bih": jax.random.uniform(next(keys), (4 * HIDDEN_DIM,),
                                          jnp.float32, -k_lstm, k_lstm),
                "bhh": jax.random.uniform(next(keys), (4 * HIDDEN_DIM,),
                                          jnp.float32, -k_lstm, k_lstm),
            }
    params["lstm"] = lstm
    k_lin = 1.0 / np.sqrt(NUM_DIRS * HIDDEN_DIM)
    params["wlin"] = jax.random.uniform(next(keys), (TAGSET_SIZE, NUM_DIRS * HIDDEN_DIM),
                                        jnp.float32, -k_lin, k_lin)
    params["blin"] = jax.random.uniform(next(keys), (TAGSET_SIZE,), jnp.float32,
                                        -k_lin, k_lin)
    return params


def reference_forward(sentence_ids, params):
    """Pure-JAX reference on the raw (unpadded) weights for correctness checking."""
    H = HIDDEN_DIM
    x = params["embedding"][sentence_ids].astype(jnp.float32)             # (T, E)
    T = x.shape[0]
    for l in range(NUM_LAYERS):
        outs = jnp.zeros((T, NUM_DIRS * H), jnp.float32)
        for d in range(NUM_DIRS):
            p = params["lstm"][(l, d)]
            wih_t = jnp.transpose(p["wih"])
            whh_t = jnp.transpose(p["whh"])
            b = (p["bih"] + p["bhh"]).reshape(1, 4 * H)
            h = jnp.zeros((1, H), jnp.float32)
            c = jnp.zeros((1, H), jnp.float32)
            order = range(T) if d == 0 else range(T - 1, -1, -1)
            for t in order:
                g = x[t:t + 1] @ wih_t + h @ whh_t + b
                i_g = jax.nn.sigmoid(g[:, 0:H])
                f_g = jax.nn.sigmoid(g[:, H:2 * H])
                g_g = jnp.tanh(g[:, 2 * H:3 * H])
                o_g = jax.nn.sigmoid(g[:, 3 * H:4 * H])
                c = f_g * c + i_g * g_g
                h = o_g * jnp.tanh(c)
                outs = outs.at[t, d * H:(d + 1) * H].set(h[0])
        x = outs
    logits = x @ jnp.transpose(params["wlin"]) + params["blin"].reshape(1, -1)
    m = jnp.max(logits, axis=-1, keepdims=True)
    z = logits - m
    return z - jnp.log(jnp.sum(jnp.exp(z), axis=-1, keepdims=True))


if __name__ == "__main__":
    key = jax.random.PRNGKey(0)
    pkey, skey = jax.random.split(key)
    params = init_params(pkey)
    sentence = jax.random.randint(skey, (SEQ_LEN,), 0, VOCAB_SIZE, jnp.int32)

    out = lstm_tagger_forward(sentence, params)
    out = jax.block_until_ready(out)

    assert out.shape == (SEQ_LEN, TAGSET_SIZE)
    assert bool(jnp.all(jnp.isfinite(out)))
    ref = reference_forward(sentence, params)
    assert bool(jnp.allclose(out, ref, atol=5e-3, rtol=5e-3)), (
        float(jnp.max(jnp.abs(out - ref))))

    print("KERNEL_OK")
</pallas_src>

<mosaic_0001>
module attributes {stable_mosaic.version = 11 : i64} {
  func.func @_tagger_kernel(%arg0: i32, %arg1: memref<8x64xf32, #tpu.memory_space<vmem>>, %arg2: memref<2x64x512xf32, #tpu.memory_space<vmem>>, %arg3: memref<2x32x512xf32, #tpu.memory_space<vmem>>, %arg4: memref<2x1x512xf32, #tpu.memory_space<vmem>>, %arg5: memref<64x128xf32, #tpu.memory_space<vmem>>, %arg6: memref<1x128xf32, #tpu.memory_space<vmem>>, %arg7: memref<8x128xf32, #tpu.memory_space<vmem>>, %arg8: memref<8x64xf32, #tpu.memory_space<vmem>>, %arg9: memref<8x32xf32, #tpu.memory_space<vmem>>, %arg10: memref<8x512xf32, #tpu.memory_space<vmem>>, %arg11: memref<8x512xf32, #tpu.memory_space<vmem>>) attributes {dimension_semantics = [#tpu.dimension_semantics<arbitrary>], iteration_bounds = array<i64: 3>, scalar_prefetch = 0 : i64, scratch_operands = 4 : i64, tpu.core_type = #tpu.core_type<tc>, window_params = [{pipeline_mode = #tpu.pipeline_mode<synchronous>, transform_indices = @transform_0, window_bounds = array<i64: 8, 64>}, {transform_indices = @transform_1, window_bounds = array<i64: 2, 64, 512>}, {transform_indices = @transform_2, window_bounds = array<i64: 2, 32, 512>}, {transform_indices = @transform_3, window_bounds = array<i64: 2, 1, 512>}, {pipeline_mode = #tpu.pipeline_mode<synchronous>, transform_indices = @transform_4, window_bounds = array<i64: 64, 128>}, {pipeline_mode = #tpu.pipeline_mode<synchronous>, transform_indices = @transform_5, window_bounds = array<i64: 1, 128>}, {pipeline_mode = #tpu.pipeline_mode<synchronous>, transform_indices = @transform_6, window_bounds = array<i64: 8, 128>}]} {
    %c0_i32 = arith.constant 0 : i32
    %0 = arith.cmpi eq, %arg0, %c0_i32 : i32
    %1 = arith.extui %0 : i1 to i32
    %c0_i32_0 = arith.constant 0 : i32
    %2 = arith.cmpi ne, %1, %c0_i32_0 : i32
    scf.if %2 {
      %c0_241 = arith.constant 0 : index
      %c0_242 = arith.constant 0 : index
      %474 = vector.load %arg1[%c0_241, %c0_242] : memref<8x64xf32, #tpu.memory_space<vmem>>, vector<8x64xf32>
      %c0_243 = arith.constant 0 : index
      %c0_244 = arith.constant 0 : index
      %475 = vector.load %arg8[%c0_243, %c0_244] : memref<8x64xf32, #tpu.memory_space<vmem>>, vector<8x64xf32>
      tpu.vector_store %arg8[%c0_243, %c0_244], %474 {strides = array<i32>} : memref<8x64xf32, #tpu.memory_space<vmem>>, vector<8x64xf32>,
    } else {
    }
    %c0 = arith.constant 0 : index
    %c0_1 = arith.constant 0 : index
    %3 = vector.load %arg8[%c0, %c0_1] : memref<8x64xf32, #tpu.memory_space<vmem>>, vector<8x64xf32>
    %c0_2 = arith.constant 0 : index
    %c0_3 = arith.constant 0 : index
    %c0_4 = arith.constant 0 : index
    %4 = vector.load %arg2[%c0_2, %c0_3, %c0_4] : memref<2x64x512xf32, #tpu.memory_space<vmem>>, vector<1x64x512xf32>
    %5 = vector.shape_cast %4 : vector<1x64x512xf32> to vector<64x512xf32>
    %cst = arith.constant dense<0.000000e+00> : vector<8x512xf32>
    %6 = tpu.matmul %3, %5, %cst {dimension_numbers = #tpu.dot_dimension_numbers<[1], [0], [0], [1], [0, 0, 1, 1], [], []>} : vector<8x64xf32>, vector<64x512xf32>, vector<8x512xf32> -> vector<8x512xf32>
    %c0_5 = arith.constant 0 : index
    %c0_6 = arith.constant 0 : index
    %c0_7 = arith.constant 0 : index
    %7 = vector.load %arg4[%c0_5, %c0_6, %c0_7] : memref<2x1x512xf32, #tpu.memory_space<vmem>>, vector<1x1x512xf32>
    %8 = vector.shape_cast %7 : vector<1x1x512xf32> to vector<1x512xf32>
    %9 = vector.broadcast %8 : vector<1x512xf32> to vector<8x512xf32>
    %10 = arith.addf %6, %9 : vector<8x512xf32>
    %c0_8 = arith.constant 0 : index
    %c0_9 = arith.constant 0 : index
    %11 = vector.load %arg10[%c0_8, %c0_9] : memref<8x512xf32, #tpu.memory_space<vmem>>, vector<8x512xf32>
    tpu.vector_store %arg10[%c0_8, %c0_9], %10 {strides = array<i32>} : memref<8x512xf32, #tpu.memory_space<vmem>>, vector<8x512xf32>,
    %c1 = arith.constant 1 : index
    %c0_10 = arith.constant 0 : index
    %c0_11 = arith.constant 0 : index
    %12 = vector.load %arg2[%c1, %c0_10, %c0_11] : memref<2x64x512xf32, #tpu.memory_space<vmem>>, vector<1x64x512xf32>
    %13 = vector.shape_cast %12 : vector<1x64x512xf32> to vector<64x512xf32>
    %cst_12 = arith.constant dense<0.000000e+00> : vector<8x512xf32>
    %14 = tpu.matmul %3, %13, %cst_12 {dimension_numbers = #tpu.dot_dimension_numbers<[1], [0], [0], [1], [0, 0, 1, 1], [], []>} : vector<8x64xf32>, vector<64x512xf32>, vector<8x512xf32> -> vector<8x512xf32>
    %c1_13 = arith.constant 1 : index
    %c0_14 = arith.constant 0 : index
    %c0_15 = arith.constant 0 : index
    %15 = vector.load %arg4[%c1_13, %c0_14, %c0_15] : memref<2x1x512xf32, #tpu.memory_space<vmem>>, vector<1x1x512xf32>
    %16 = vector.shape_cast %15 : vector<1x1x512xf32> to vector<1x512xf32>
    %17 = vector.broadcast %16 : vector<1x512xf32> to vector<8x512xf32>
    %18 = arith.addf %14, %17 : vector<8x512xf32>
    %c0_16 = arith.constant 0 : index
    %c0_17 = arith.constant 0 : index
    %19 = vector.load %arg11[%c0_16, %c0_17] : memref<8x512xf32, #tpu.memory_space<vmem>>, vector<8x512xf32>
    tpu.vector_store %arg11[%c0_16, %c0_17], %18 {strides = array<i32>} : memref<8x512xf32, #tpu.memory_space<vmem>>, vector<8x512xf32>,
    %cst_18 = arith.constant 0.000000e+00 : f32
    %20 = vector.broadcast %cst_18 : f32 to vector<1x32xf32>
    %c0_19 = arith.constant 0 : index
    %c0_20 = arith.constant 0 : index
    %21 = vector.load %arg10[%c0_19, %c0_20] : memref<8x512xf32, #tpu.memory_space<vmem>>, vector<1x512xf32>
    %c0_21 = arith.constant 0 : index
    %c0_22 = arith.constant 0 : index
    %c0_23 = arith.constant 0 : index
    %22 = vector.load %arg3[%c0_21, %c0_22, %c0_23] : memref<2x32x512xf32, #tpu.memory_space<vmem>>, vector<1x32x512xf32>
    %23 = vector.shape_cast %22 : vector<1x32x512xf32> to vector<32x512xf32>
    %cst_24 = arith.constant dense<0.000000e+00> : vector<1x512xf32>
    %24 = tpu.matmul %20, %23, %cst_24 {dimension_numbers = #tpu.dot_dimension_numbers<[1], [0], [0], [1], [0, 0, 1, 1], [], []>} : vector<1x32xf32>, vector<32x512xf32>, vector<1x512xf32> -> vector<1x512xf32>
    %25 = arith.addf %21, %24 : vector<1x512xf32>
    %26 = math.tanh %25 : vector<1x512xf32>
    %27 = vector.extract_strided_slice %26 {offsets = [0, 0], sizes = [1, 32], strides = [1, 1]} : vector<1x512xf32> to vector<1x32xf32>
    %cst_25 = arith.constant 5.000000e-01 : f32
    %28 = vector.broadcast %cst_25 : f32 to vector<1x32xf32>
    %29 = arith.mulf %28, %27 : vector<1x32xf32>
    %cst_26 = arith.constant 5.000000e-01 : f32
    %30 = vector.broadcast %cst_26 : f32 to vector<1x32xf32>
    %31 = arith.addf %29, %30 : vector<1x32xf32>
    %32 = vector.extract_strided_slice %26 {offsets = [0, 128], sizes = [1, 32], strides = [1, 1]} : vector<1x512xf32> to vector<1x32xf32>
    %cst_27 = arith.constant 5.000000e-01 : f32
    %33 = vector.broadcast %cst_27 : f32 to vector<1x32xf32>
    %34 = arith.mulf %33, %32 : vector<1x32xf32>
    %cst_28 = arith.constant 5.000000e-01 : f32
    %35 = vector.broadcast %cst_28 : f32 to vector<1x32xf32>
    %36 = arith.addf %34, %35 : vector<1x32xf32>
    %37 = vector.extract_strided_slice %26 {offsets = [0, 256], sizes = [1, 32], strides = [1, 1]} : vector<1x512xf32> to vector<1x32xf32>
    %38 = vector.extract_strided_slice %26 {offsets = [0, 384], sizes = [1, 32], strides = [1, 1]} : vector<1x512xf32> to vector<1x32xf32>
    %cst_29 = arith.constant 5.000000e-01 : f32
    %39 = vector.broadcast %cst_29 : f32 to vector<1x32xf32>
    %40 = arith.mulf %39, %38 : vector<1x32xf32>
    %cst_30 = arith.constant 5.000000e-01 : f32
    %41 = vector.broadcast %cst_30 : f32 to vector<1x32xf32>
    %42 = arith.addf %40, %41 : vector<1x32xf32>
    %43 = arith.mulf %36, %20 : vector<1x32xf32>
    %44 = arith.mulf %31, %37 : vector<1x32xf32>
    %45 = arith.addf %43, %44 : vector<1x32xf32>
    %46 = math.tanh %45 : vector<1x32xf32>
    %47 = arith.mulf %42, %46 : vector<1x32xf32>
    %c7 = arith.constant 7 : index
    %c0_31 = arith.constant 0 : index
    %48 = vector.load %arg11[%c7, %c0_31] : memref<8x512xf32, #tpu.memory_space<vmem>>, vector<1x512xf32>
    %c1_32 = arith.constant 1 : index
    %c0_33 = arith.constant 0 : index
    %c0_34 = arith.constant 0 : index
    %49 = vector.load %arg3[%c1_32, %c0_33, %c0_34] : memref<2x32x512xf32, #tpu.memory_space<vmem>>, vector<1x32x512xf32>
    %50 = vector.shape_cast %49 : vector<1x32x512xf32> to vector<32x512xf32>
    %cst_35 = arith.constant dense<0.000000e+00> : vector<1x512xf32>
    %51 = tpu.matmul %20, %50, %cst_35 {dimension_numbers = #tpu.dot_dimension_numbers<[1], [0], [0], [1], [0, 0, 1, 1], [], []>} : vector<1x32xf32>, vector<32x512xf32>, vector<1x512xf32> -> vector<1x512xf32>
    %52 = arith.addf %48, %51 : vector<1x512xf32>
    %53 = math.tanh %52 : vector<1x512xf32>
    %54 = vector.extract_strided_slice %53 {offsets = [0, 0], sizes = [1, 32], strides = [1, 1]} : vector<1x512xf32> to vector<1x32xf32>
    %cst_36 = arith.constant 5.000000e-01 : f32
    %55 = vector.broadcast %cst_36 : f32 to vector<1x32xf32>
    %56 = arith.mulf %55, %54 : vector<1x32xf32>
    %cst_37 = arith.constant 5.000000e-01 : f32
    %57 = vector.broadcast %cst_37 : f32 to vector<1x32xf32>
    %58 = arith.addf %56, %57 : vector<1x32xf32>
    %59 = vector.extract_strided_slice %53 {offsets = [0, 128], sizes = [1, 32], strides = [1, 1]} : vector<1x512xf32> to vector<1x32xf32>
    %cst_38 = arith.constant 5.000000e-01 : f32
    %60 = vector.broadcast %cst_38 : f32 to vector<1x32xf32>
    %61 = arith.mulf %60, %59 : vector<1x32xf32>
    %cst_39 = arith.constant 5.000000e-01 : f32
    %62 = vector.broadcast %cst_39 : f32 to vector<1x32xf32>
    %63 = arith.addf %61, %62 : vector<1x32xf32>
    %64 = vector.extract_strided_slice %53 {offsets = [0, 256], sizes = [1, 32], strides = [1, 1]} : vector<1x512xf32> to vector<1x32xf32>
    %65 = vector.extract_strided_slice %53 {offsets = [0, 384], sizes = [1, 32], strides = [1, 1]} : vector<1x512xf32> to vector<1x32xf32>
    %cst_40 = arith.constant 5.000000e-01 : f32
    %66 = vector.broadcast %cst_40 : f32 to vector<1x32xf32>
    %67 = arith.mulf %66, %65 : vector<1x32xf32>
    %cst_41 = arith.constant 5.000000e-01 : f32
    %68 = vector.broadcast %cst_41 : f32 to vector<1x32xf32>
    %69 = arith.addf %67, %68 : vector<1x32xf32>
    %70 = arith.mulf %63, %20 : vector<1x32xf32>
    %71 = arith.mulf %58, %64 : vector<1x32xf32>
    %72 = arith.addf %70, %71 : vector<1x32xf32>
    %73 = math.tanh %72 : vector<1x32xf32>
    %74 = arith.mulf %69, %73 : vector<1x32xf32>
    %c0_42 = arith.constant 0 : index
    %c0_43 = arith.constant 0 : index
    %75 = vector.load %arg8[%c0_42, %c0_43] : memref<8x64xf32, #tpu.memory_space<vmem>>, vector<1x32xf32>
    tpu.vector_store %arg8[%c0_42, %c0_43], %47 {strides = array<i32>} : memref<8x64xf32, #tpu.memory_space<vmem>>, vector<1x32xf32>,
    %c7_44 = arith.constant 7 : index
    %c0_45 = arith.constant 0 : index
    %76 = vector.load %arg9[%c7_44, %c0_45] : memref<8x32xf32, #tpu.memory_space<vmem>>, vector<1x32xf32>
    tpu.vector_store %arg9[%c7_44, %c0_45], %74 {strides = array<i32>} : memref<8x32xf32, #tpu.memory_space<vmem>>, vector<1x32xf32>,
    %c1_46 = arith.constant 1 : index
    %c0_47 = arith.constant 0 : index
    %77 = vector.load %arg10[%c1_46, %c0_47] : memref<8x512xf32, #tpu.memory_space<vmem>>, vector<1x512xf32>
    %c0_48 = arith.constant 0 : index
    %c0_49 = arith.constant 0 : index
    %c0_50 = arith.constant 0 : index
    %78 = vector.load %arg3[%c0_48, %c0_49, %c0_50] : memref<2x32x512xf32, #tpu.memory_space<vmem>>, vector<1x32x512xf32>
    %79 = vector.shape_cast %78 : vector<1x32x512xf32> to vector<32x512xf32>
    %cst_51 = arith.constant dense<0.000000e+00> : vector<1x512xf32>
    %80 = tpu.matmul %47, %79, %cst_51 {dimension_numbers = #tpu.dot_dimension_numbers<[1], [0], [0], [1], [0, 0, 1, 1], [], []>} : vector<1x32xf32>, vector<32x512xf32>, vector<1x512xf32> -> vector<1x512xf32>
    %81 = arith.addf %77, %80 : vector<1x512xf32>
    %82 = math.tanh %81 : vector<1x512xf32>
    %83 = vector.extract_strided_slice %82 {offsets = [0, 0], sizes = [1, 32], strides = [1, 1]} : vector<1x512xf32> to vector<1x32xf32>
    %cst_52 = arith.constant 5.000000e-01 : f32
    %84 = vector.broadcast %cst_52 : f32 to vector<1x32xf32>
    %85 = arith.mulf %84, %83 : vector<1x32xf32>
    %cst_53 = arith.constant 5.000000e-01 : f32
    %86 = vector.broadcast %cst_53 : f32 to vector<1x32xf32>
    %87 = arith.addf %85, %86 : vector<1x32xf32>
    %88 = vector.extract_strided_slice %82 {offsets = [0, 128], sizes = [1, 32], strides = [1, 1]} : vector<1x512xf32> to vector<1x32xf32>
    %cst_54 = arith.constant 5.000000e-01 : f32
    %89 = vector.broadcast %cst_54 : f32 to vector<1x32xf32>
    %90 = arith.mulf %89, %88 : vector<1x32xf32>
    %cst_55 = arith.constant 5.000000e-01 : f32
    %91 = vector.broadcast %cst_55 : f32 to vector<1x32xf32>
    %92 = arith.addf %90, %91 : vector<1x32xf32>
    %93 = vector.extract_strided_slice %82 {offsets = [0, 256], sizes = [1, 32], strides = [1, 1]} : vector<1x512xf32> to vector<1x32xf32>
    %94 = vector.extract_strided_slice %82 {offsets = [0, 384], sizes = [1, 32], strides = [1, 1]} : vector<1x512xf32> to vector<1x32xf32>
    %cst_56 = arith.constant 5.000000e-01 : f32
    %95 = vector.broadcast %cst_56 : f32 to vector<1x32xf32>
    %96 = arith.mulf %95, %94 : vector<1x32xf32>
    %cst_57 = arith.constant 5.000000e-01 : f32
    %97 = vector.broadcast %cst_57 : f32 to vector<1x32xf32>
    %98 = arith.addf %96, %97 : vector<1x32xf32>
    %99 = arith.mulf %92, %45 : vector<1x32xf32>
    %100 = arith.mulf %87, %93 : vector<1x32xf32>
    %101 = arith.addf %99, %100 : vector<1x32xf32>
    %102 = math.tanh %101 : vector<1x32xf32>
    %103 = arith.mulf %98, %102 : vector<1x32xf32>
    %c6 = arith.constant 6 : index
    %c0_58 = arith.constant 0 : index
    %104 = vector.load %arg11[%c6, %c0_58] : memref<8x512xf32, #tpu.memory_space<vmem>>, vector<1x512xf32>
    %c1_59 = arith.constant 1 : index
    %c0_60 = arith.constant 0 : index
    %c0_61 = arith.constant 0 : index
    %105 = vector.load %arg3[%c1_59, %c0_60, %c0_61] : memref<2x32x512xf32, #tpu.memory_space<vmem>>, vector<1x32x512xf32>
    %106 = vector.shape_cast %105 : vector<1x32x512xf32> to vector<32x512xf32>
    %cst_62 = arith.constant dense<0.000000e+00> : vector<1x512xf32>
    %107 = tpu.matmul %74, %106, %cst_62 {dimension_numbers = #tpu.dot_dimension_numbers<[1], [0], [0], [1], [0, 0, 1, 1], [], []>} : vector<1x32xf32>, vector<32x512xf32>, vector<1x512xf32> -> vector<1x512xf32>
    %108 = arith.addf %104, %107 : vector<1x512xf32>
    %109 = math.tanh %108 : vector<1x512xf32>
    %110 = vector.extract_strided_slice %109 {offsets = [0, 0], sizes = [1, 32], strides = [1, 1]} : vector<1x512xf32> to vector<1x32xf32>
    %cst_63 = arith.constant 5.000000e-01 : f32
    %111 = vector.broadcast %cst_63 : f32 to vector<1x32xf32>
    %112 = arith.mulf %111, %110 : vector<1x32xf32>
    %cst_64 = arith.constant 5.000000e-01 : f32
    %113 = vector.broadcast %cst_64 : f32 to vector<1x32xf32>
    %114 = arith.addf %112, %113 : vector<1x32xf32>
    %115 = vector.extract_strided_slice %109 {offsets = [0, 128], sizes = [1, 32], strides = [1, 1]} : vector<1x512xf32> to vector<1x32xf32>
    %cst_65 = arith.constant 5.000000e-01 : f32
    %116 = vector.broadcast %cst_65 : f32 to vector<1x32xf32>
    %117 = arith.mulf %116, %115 : vector<1x32xf32>
    %cst_66 = arith.constant 5.000000e-01 : f32
    %118 = vector.broadcast %cst_66 : f32 to vector<1x32xf32>
    %119 = arith.addf %117, %118 : vector<1x32xf32>
    %120 = vector.extract_strided_slice %109 {offsets = [0, 256], sizes = [1, 32], strides = [1, 1]} : vector<1x512xf32> to vector<1x32xf32>
    %121 = vector.extract_strided_slice %109 {offsets = [0, 384], sizes = [1, 32], strides = [1, 1]} : vector<1x512xf32> to vector<1x32xf32>
    %cst_67 = arith.constant 5.000000e-01 : f32
    %122 = vector.broadcast %cst_67 : f32 to vector<1x32xf32>
    %123 = arith.mulf %122, %121 : vector<1x32xf32>
    %cst_68 = arith.constant 5.000000e-01 : f32
    %124 = vector.broadcast %cst_68 : f32 to vector<1x32xf32>
    %125 = arith.addf %123, %124 : vector<1x32xf32>
    %126 = arith.mulf %119, %72 : vector<1x32xf32>
    %127 = arith.mulf %114, %120 : vector<1x32xf32>
    %128 = arith.addf %126, %127 : vector<1x32xf32>
    %129 = math.tanh %128 : vector<1x32xf32>
    %130 = arith.mulf %125, %129 : vector<1x32xf32>
    %c1_69 = arith.constant 1 : index
    %c0_70 = arith.constant 0 : index
    %131 = vector.load %arg8[%c1_69, %c0_70] : memref<8x64xf32, #tpu.memory_space<vmem>>, vector<1x32xf32>
    tpu.vector_store %arg8[%c1_69, %c0_70], %103 {strides = array<i32>} : memref<8x64xf32, #tpu.memory_space<vmem>>, vector<1x32xf32>,
    %c6_71 = arith.constant 6 : index
    %c0_72 = arith.constant 0 : index
    %132 = vector.load %arg9[%c6_71, %c0_72] : memref<8x32xf32, #tpu.memory_space<vmem>>, vector<1x32xf32>
    tpu.vector_store %arg9[%c6_71, %c0_72], %130 {strides = array<i32>} : memref<8x32xf32, #tpu.memory_space<vmem>>, vector<1x32xf32>,
    %c2 = arith.constant 2 : index
    %c0_73 = arith.constant 0 : index
    %133 = vector.load %arg10[%c2, %c0_73] : memref<8x512xf32, #tpu.memory_space<vmem>>, vector<1x512xf32>
    %c0_74 = arith.constant 0 : index
    %c0_75 = arith.constant 0 : index
    %c0_76 = arith.constant 0 : index
    %134 = vector.load %arg3[%c0_74, %c0_75, %c0_76] : memref<2x32x512xf32, #tpu.memory_space<vmem>>, vector<1x32x512xf32>
    %135 = vector.shape_cast %134 : vector<1x32x512xf32> to vector<32x512xf32>
    %cst_77 = arith.constant dense<0.000000e+00> : vector<1x512xf32>
    %136 = tpu.matmul %103, %135, %cst_77 {dimension_numbers = #tpu.dot_dimension_numbers<[1], [0], [0], [1], [0, 0, 1, 1], [], []>} : vector<1x32xf32>, vector<32x512xf32>, vector<1x512xf32> -> vector<1x512xf32>
    %137 = arith.addf %133, %136 : vector<1x512xf32>
    %138 = math.tanh %137 : vector<1x512xf32>
    %139 = vector.extract_strided_slice %138 {offsets = [0, 0], sizes = [1, 32], strides = [1, 1]} : vector<1x512xf32> to vector<1x32xf32>
    %cst_78 = arith.constant 5.000000e-01 : f32
    %140 = vector.broadcast %cst_78 : f32 to vector<1x32xf32>
    %141 = arith.mulf %140, %139 : vector<1x32xf32>
    %cst_79 = arith.constant 5.000000e-01 : f32
    %142 = vector.broadcast %cst_79 : f32 to vector<1x32xf32>
    %143 = arith.addf %141, %142 : vector<1x32xf32>
    %144 = vector.extract_strided_slice %138 {offsets = [0, 128], sizes = [1, 32], strides = [1, 1]} : vector<1x512xf32> to vector<1x32xf32>
    %cst_80 = arith.constant 5.000000e-01 : f32
    %145 = vector.broadcast %cst_80 : f32 to vector<1x32xf32>
    %146 = arith.mulf %145, %144 : vector<1x32xf32>
    %cst_81 = arith.constant 5.000000e-01 : f32
    %147 = vector.broadcast %cst_81 : f32 to vector<1x32xf32>
    %148 = arith.addf %146, %147 : vector<1x32xf32>
    %149 = vector.extract_strided_slice %138 {offsets = [0, 256], sizes = [1, 32], strides = [1, 1]} : vector<1x512xf32> to vector<1x32xf32>
    %150 = vector.extract_strided_slice %138 {offsets = [0, 384], sizes = [1, 32], strides = [1, 1]} : vector<1x512xf32> to vector<1x32xf32>
    %cst_82 = arith.constant 5.000000e-01 : f32
    %151 = vector.broadcast %cst_82 : f32 to vector<1x32xf32>
    %152 = arith.mulf %151, %150 : vector<1x32xf32>
    %cst_83 = arith.constant 5.000000e-01 : f32
    %153 = vector.broadcast %cst_83 : f32 to vector<1x32xf32>
    %154 = arith.addf %152, %153 : vector<1x32xf32>
    %155 = arith.mulf %148, %101 : vector<1x32xf32>
    %156 = arith.mulf %143, %149 : vector<1x32xf32>
    %157 = arith.addf %155, %156 : vector<1x32xf32>
    %158 = math.tanh %157 : vector<1x32xf32>
    %159 = arith.mulf %154, %158 : vector<1x32xf32>
    %c5 = arith.constant 5 : index
    %c0_84 = arith.constant 0 : index
    %160 = vector.load %arg11[%c5, %c0_84] : memref<8x512xf32, #tpu.memory_space<vmem>>, vector<1x512xf32>
    %c1_85 = arith.constant 1 : index
    %c0_86 = arith.constant 0 : index
    %c0_87 = arith.constant 0 : index
    %161 = vector.load %arg3[%c1_85, %c0_86, %c0_87] : memref<2x32x512xf32, #tpu.memory_space<vmem>>, vector<1x32x512xf32>
    %162 = vector.shape_cast %161 : vector<1x32x512xf32> to vector<32x512xf32>
    %cst_88 = arith.constant dense<0.000000e+00> : vector<1x512xf32>
    %163 = tpu.matmul %130, %162, %cst_88 {dimension_numbers = #tpu.dot_dimension_numbers<[1], [0], [0], [1], [0, 0, 1, 1], [], []>} : vector<1x32xf32>, vector<32x512xf32>, vector<1x512xf32> -> vector<1x512xf32>
    %164 = arith.addf %160, %163 : vector<1x512xf32>
    %165 = math.tanh %164 : vector<1x512xf32>
    %166 = vector.extract_strided_slice %165 {offsets = [0, 0], sizes = [1, 32], strides = [1, 1]} : vector<1x512xf32> to vector<1x32xf32>
    %cst_89 = arith.constant 5.000000e-01 : f32
    %167 = vector.broadcast %cst_89 : f32 to vector<1x32xf32>
    %168 = arith.mulf %167, %166 : vector<1x32xf32>
    %cst_90 = arith.constant 5.000000e-01 : f32
    %169 = vector.broadcast %cst_90 : f32 to vector<1x32xf32>
    %170 = arith.addf %168, %169 : vector<1x32xf32>
    %171 = vector.extract_strided_slice %165 {offsets = [0, 128], sizes = [1, 32], strides = [1, 1]} : vector<1x512xf32> to vector<1x32xf32>
    %cst_91 = arith.constant 5.000000e-01 : f32
    %172 = vector.broadcast %cst_91 : f32 to vector<1x32xf32>
    %173 = arith.mulf %172, %171 : vector<1x32xf32>
    %cst_92 = arith.constant 5.000000e-01 : f32
    %174 = vector.broadcast %cst_92 : f32 to vector<1x32xf32>
    %175 = arith.addf %173, %174 : vector<1x32xf32>
    %176 = vector.extract_strided_slice %165 {offsets = [0, 256], sizes = [1, 32], strides = [1, 1]} : vector<1x512xf32> to vector<1x32xf32>
    %177 = vector.extract_strided_slice %165 {offsets = [0, 384], sizes = [1, 32], strides = [1, 1]} : vector<1x512xf32> to vector<1x32xf32>
    %cst_93 = arith.constant 5.000000e-01 : f32
    %178 = vector.broadcast %cst_93 : f32 to vector<1x32xf32>
    %179 = arith.mulf %178, %177 : vector<1x32xf32>
    %cst_94 = arith.constant 5.000000e-01 : f32
    %180 = vector.broadcast %cst_94 : f32 to vector<1x32xf32>
    %181 = arith.addf %179, %180 : vector<1x32xf32>
    %182 = arith.mulf %175, %128 : vector<1x32xf32>
    %183 = arith.mulf %170, %176 : vector<1x32xf32>
    %184 = arith.addf %182, %183 : vector<1x32xf32>
    %185 = math.tanh %184 : vector<1x32xf32>
    %186 = arith.mulf %181, %185 : vector<1x32xf32>
    %c2_95 = arith.constant 2 : index
    %c0_96 = arith.constant 0 : index
    %187 = vector.load %arg8[%c2_95, %c0_96] : memref<8x64xf32, #tpu.memory_space<vmem>>, vector<1x32xf32>
    tpu.vector_store %arg8[%c2_95, %c0_96], %159 {strides = array<i32>} : memref<8x64xf32, #tpu.memory_space<vmem>>, vector<1x32xf32>,
    %c5_97 = arith.constant 5 : index
    %c0_98 = arith.constant 0 : index
    %188 = vector.load %arg9[%c5_97, %c0_98] : memref<8x32xf32, #tpu.memory_space<vmem>>, vector<1x32xf32>
    tpu.vector_store %arg9[%c5_97, %c0_98], %186 {strides = array<i32>} : memref<8x32xf32, #tpu.memory_space<vmem>>, vector<1x32xf32>,
    %c3 = arith.constant 3 : index
    %c0_99 = arith.constant 0 : index
    %189 = vector.load %arg10[%c3, %c0_99] : memref<8x512xf32, #tpu.memory_space<vmem>>, vector<1x512xf32>
    %c0_100 = arith.constant 0 : index
    %c0_101 = arith.constant 0 : index
    %c0_102 = arith.constant 0 : index
    %190 = vector.load %arg3[%c0_100, %c0_101, %c0_102] : memref<2x32x512xf32, #tpu.memory_space<vmem>>, vector<1x32x512xf32>
    %191 = vector.shape_cast %190 : vector<1x32x512xf32> to vector<32x512xf32>
    %cst_103 = arith.constant dense<0.000000e+00> : vector<1x512xf32>
    %192 = tpu.matmul %159, %191, %cst_103 {dimension_numbers = #tpu.dot_dimension_numbers<[1], [0], [0], [1], [0, 0, 1, 1], [], []>} : vector<1x32xf32>, vector<32x512xf32>, vector<1x512xf32> -> vector<1x512xf32>
    %193 = arith.addf %189, %192 : vector<1x512xf32>
    %194 = math.tanh %193 : vector<1x512xf32>
    %195 = vector.extract_strided_slice %194 {offsets = [0, 0], sizes = [1, 32], strides = [1, 1]} : vector<1x512xf32> to vector<1x32xf32>
    %cst_104 = arith.constant 5.000000e-01 : f32
    %196 = vector.broadcast %cst_104 : f32 to vector<1x32xf32>
    %197 = arith.mulf %196, %195 : vector<1x32xf32>
    %cst_105 = arith.constant 5.000000e-01 : f32
    %198 = vector.broadcast %cst_105 : f32 to vector<1x32xf32>
    %199 = arith.addf %197, %198 : vector<1x32xf32>
    %200 = vector.extract_strided_slice %194 {offsets = [0, 128], sizes = [1, 32], strides = [1, 1]} : vector<1x512xf32> to vector<1x32xf32>
    %cst_106 = arith.constant 5.000000e-01 : f32
    %201 = vector.broadcast %cst_106 : f32 to vector<1x32xf32>
    %202 = arith.mulf %201, %200 : vector<1x32xf32>
    %cst_107 = arith.constant 5.000000e-01 : f32
    %203 = vector.broadcast %cst_107 : f32 to vector<1x32xf32>
    %204 = arith.addf %202, %203 : vector<1x32xf32>
    %205 = vector.extract_strided_slice %194 {offsets = [0, 256], sizes = [1, 32], strides = [1, 1]} : vector<1x512xf32> to vector<1x32xf32>
    %206 = vector.extract_strided_slice %194 {offsets = [0, 384], sizes = [1, 32], strides = [1, 1]} : vector<1x512xf32> to vector<1x32xf32>
    %cst_108 = arith.constant 5.000000e-01 : f32
    %207 = vector.broadcast %cst_108 : f32 to vector<1x32xf32>
    %208 = arith.mulf %207, %206 : vector<1x32xf32>
    %cst_109 = arith.constant 5.000000e-01 : f32
    %209 = vector.broadcast %cst_109 : f32 to vector<1x32xf32>
    %210 = arith.addf %208, %209 : vector<1x32xf32>
    %211 = arith.mulf %204, %157 : vector<1x32xf32>
    %212 = arith.mulf %199, %205 : vector<1x32xf32>
    %213 = arith.addf %211, %212 : vector<1x32xf32>
    %214 = math.tanh %213 : vector<1x32xf32>
    %215 = arith.mulf %210, %214 : vector<1x32xf32>
    %c4 = arith.constant 4 : index
    %c0_110 = arith.constant 0 : index
    %216 = vector.load %arg11[%c4, %c0_110] : memref<8x512xf32, #tpu.memory_space<vmem>>, vector<1x512xf32>
    %c1_111 = arith.constant 1 : index
    %c0_112 = arith.constant 0 : index
    %c0_113 = arith.constant 0 : index
    %217 = vector.load %arg3[%c1_111, %c0_112, %c0_113] : memref<2x32x512xf32, #tpu.memory_space<vmem>>, vector<1x32x512xf32>
    %218 = vector.shape_cast %217 : vector<1x32x512xf32> to vector<32x512xf32>
    %cst_114 = arith.constant dense<0.000000e+00> : vector<1x512xf32>
    %219 = tpu.matmul %186, %218, %cst_114 {dimension_numbers = #tpu.dot_dimension_numbers<[1], [0], [0], [1], [0, 0, 1, 1], [], []>} : vector<1x32xf32>, vector<32x512xf32>, vector<1x512xf32> -> vector<1x512xf32>
    %220 = arith.addf %216, %219 : vector<1x512xf32>
    %221 = math.tanh %220 : vector<1x512xf32>
    %222 = vector.extract_strided_slice %221 {offsets = [0, 0], sizes = [1, 32], strides = [1, 1]} : vector<1x512xf32> to vector<1x32xf32>
    %cst_115 = arith.constant 5.000000e-01 : f32
    %223 = vector.broadcast %cst_115 : f32 to vector<1x32xf32>
    %224 = arith.mulf %223, %222 : vector<1x32xf32>
    %cst_116 = arith.constant 5.000000e-01 : f32
    %225 = vector.broadcast %cst_116 : f32 to vector<1x32xf32>
    %226 = arith.addf %224, %225 : vector<1x32xf32>
    %227 = vector.extract_strided_slice %221 {offsets = [0, 128], sizes = [1, 32], strides = [1, 1]} : vector<1x512xf32> to vector<1x32xf32>
    %cst_117 = arith.constant 5.000000e-01 : f32
    %228 = vector.broadcast %cst_117 : f32 to vector<1x32xf32>
    %229 = arith.mulf %228, %227 : vector<1x32xf32>
    %cst_118 = arith.constant 5.000000e-01 : f32
    %230 = vector.broadcast %cst_118 : f32 to vector<1x32xf32>
    %231 = arith.addf %229, %230 : vector<1x32xf32>
    %232 = vector.extract_strided_slice %221 {offsets = [0, 256], sizes = [1, 32], strides = [1, 1]} : vector<1x512xf32> to vector<1x32xf32>
    %233 = vector.extract_strided_slice %221 {offsets = [0, 384], sizes = [1, 32], strides = [1, 1]} : vector<1x512xf32> to vector<1x32xf32>
    %cst_119 = arith.constant 5.000000e-01 : f32
    %234 = vector.broadcast %cst_119 : f32 to vector<1x32xf32>
    %235 = arith.mulf %234, %233 : vector<1x32xf32>
    %cst_120 = arith.constant 5.000000e-01 : f32
    %236 = vector.broadcast %cst_120 : f32 to vector<1x32xf32>
    %237 = arith.addf %235, %236 : vector<1x32xf32>
    %238 = arith.mulf %231, %184 : vector<1x32xf32>
    %239 = arith.mulf %226, %232 : vector<1x32xf32>
    %240 = arith.addf %238, %239 : vector<1x32xf32>
    %241 = math.tanh %240 : vector<1x32xf32>
    %242 = arith.mulf %237, %241 : vector<1x32xf32>
    %c3_121 = arith.constant 3 : index
    %c0_122 = arith.constant 0 : index
    %243 = vector.load %arg8[%c3_121, %c0_122] : memref<8x64xf32, #tpu.memory_space<vmem>>, vector<1x32xf32>
    tpu.vector_store %arg8[%c3_121, %c0_122], %215 {strides = array<i32>} : memref<8x64xf32, #tpu.memory_space<vmem>>, vector<1x32xf32>,
    %c4_123 = arith.constant 4 : index
    %c0_124 = arith.constant 0 : index
    %244 = vector.load %arg9[%c4_123, %c0_124] : memref<8x32xf32, #tpu.memory_space<vmem>>, vector<1x32xf32>
    tpu.vector_store %arg9[%c4_123, %c0_124], %242 {strides = array<i32>} : memref<8x32xf32, #tpu.memory_space<vmem>>, vector<1x32xf32>,
    %c4_125 = arith.constant 4 : index
    %c0_126 = arith.constant 0 : index
    %245 = vector.load %arg10[%c4_125, %c0_126] : memref<8x512xf32, #tpu.memory_space<vmem>>, vector<1x512xf32>
    %c0_127 = arith.constant 0 : index
    %c0_128 = arith.constant 0 : index
    %c0_129 = arith.constant 0 : index
    %246 = vector.load %arg3[%c0_127, %c0_128, %c0_129] : memref<2x32x512xf32, #tpu.memory_space<vmem>>, vector<1x32x512xf32>
    %247 = vector.shape_cast %246 : vector<1x32x512xf32> to vector<32x512xf32>
    %cst_130 = arith.constant dense<0.000000e+00> : vector<1x512xf32>
    %248 = tpu.matmul %215, %247, %cst_130 {dimension_numbers = #tpu.dot_dimension_numbers<[1], [0], [0], [1], [0, 0, 1, 1], [], []>} : vector<1x32xf32>, vector<32x512xf32>, vector<1x512xf32> -> vector<1x512xf32>
    %249 = arith.addf %245, %248 : vector<1x512xf32>
    %250 = math.tanh %249 : vector<1x512xf32>
    %251 = vector.extract_strided_slice %250 {offsets = [0, 0], sizes = [1, 32], strides = [1, 1]} : vector<1x512xf32> to vector<1x32xf32>
    %cst_131 = arith.constant 5.000000e-01 : f32
    %252 = vector.broadcast %cst_131 : f32 to vector<1x32xf32>
    %253 = arith.mulf %252, %251 : vector<1x32xf32>
    %cst_132 = arith.constant 5.000000e-01 : f32
    %254 = vector.broadcast %cst_132 : f32 to vector<1x32xf32>
    %255 = arith.addf %253, %254 : vector<1x32xf32>
    %256 = vector.extract_strided_slice %250 {offsets = [0, 128], sizes = [1, 32], strides = [1, 1]} : vector<1x512xf32> to vector<1x32xf32>
    %cst_133 = arith.constant 5.000000e-01 : f32
    %257 = vector.broadcast %cst_133 : f32 to vector<1x32xf32>
    %258 = arith.mulf %257, %256 : vector<1x32xf32>
    %cst_134 = arith.constant 5.000000e-01 : f32
    %259 = vector.broadcast %cst_134 : f32 to vector<1x32xf32>
    %260 = arith.addf %258, %259 : vector<1x32xf32>
    %261 = vector.extract_strided_slice %250 {offsets = [0, 256], sizes = [1, 32], strides = [1, 1]} : vector<1x512xf32> to vector<1x32xf32>
    %262 = vector.extract_strided_slice %250 {offsets = [0, 384], sizes = [1, 32], strides = [1, 1]} : vector<1x512xf32> to vector<1x32xf32>
    %cst_135 = arith.constant 5.000000e-01 : f32
    %263 = vector.broadcast %cst_135 : f32 to vector<1x32xf32>
    %264 = arith.mulf %263, %262 : vector<1x32xf32>
    %cst_136 = arith.constant 5.000000e-01 : f32
    %265 = vector.broadcast %cst_136 : f32 to vector<1x32xf32>
    %266 = arith.addf %264, %265 : vector<1x32xf32>
    %267 = arith.mulf %260, %213 : vector<1x32xf32>
    %268 = arith.mulf %255, %261 : vector<1x32xf32>
    %269 = arith.addf %267, %268 : vector<1x32xf32>
    %270 = math.tanh %269 : vector<1x32xf32>
    %271 = arith.mulf %266, %270 : vector<1x32xf32>
    %c3_137 = arith.constant 3 : index
    %c0_138 = arith.constant 0 : index
    %272 = vector.load %arg11[%c3_137, %c0_138] : memref<8x512xf32, #tpu.memory_space<vmem>>, vector<1x512xf32>
    %c1_139 = arith.constant 1 : index
    %c0_140 = arith.constant 0 : index
    %c0_141 = arith.constant 0 : index
    %273 = vector.load %arg3[%c1_139, %c0_140, %c0_141] : memref<2x32x512xf32, #tpu.memory_space<vmem>>, vector<1x32x512xf32>
    %274 = vector.shape_cast %273 : vector<1x32x512xf32> to vector<32x512xf32>
    %cst_142 = arith.constant dense<0.000000e+00> : vector<1x512xf32>
    %275 = tpu.matmul %242, %274, %cst_142 {dimension_numbers = #tpu.dot_dimension_numbers<[1], [0], [0], [1], [0, 0, 1, 1], [], []>} : vector<1x32xf32>, vector<32x512xf32>, vector<1x512xf32> -> vector<1x512xf32>
    %276 = arith.addf %272, %275 : vector<1x512xf32>
    %277 = math.tanh %276 : vector<1x512xf32>
    %278 = vector.extract_strided_slice %277 {offsets = [0, 0], sizes = [1, 32], strides = [1, 1]} : vector<1x512xf32> to vector<1x32xf32>
    %cst_143 = arith.constant 5.000000e-01 : f32
    %279 = vector.broadcast %cst_143 : f32 to vector<1x32xf32>
    %280 = arith.mulf %279, %278 : vector<1x32xf32>
    %cst_144 = arith.constant 5.000000e-01 : f32
    %281 = vector.broadcast %cst_144 : f32 to vector<1x32xf32>
    %282 = arith.addf %280, %281 : vector<1x32xf32>
    %283 = vector.extract_strided_slice %277 {offsets = [0, 128], sizes = [1, 32], strides = [1, 1]} : vector<1x512xf32> to vector<1x32xf32>
    %cst_145 = arith.constant 5.000000e-01 : f32
    %284 = vector.broadcast %cst_145 : f32 to vector<1x32xf32>
    %285 = arith.mulf %284, %283 : vector<1x32xf32>
    %cst_146 = arith.constant 5.000000e-01 : f32
    %286 = vector.broadcast %cst_146 : f32 to vector<1x32xf32>
    %287 = arith.addf %285, %286 : vector<1x32xf32>
    %288 = vector.extract_strided_slice %277 {offsets = [0, 256], sizes = [1, 32], strides = [1, 1]} : vector<1x512xf32> to vector<1x32xf32>
    %289 = vector.extract_strided_slice %277 {offsets = [0, 384], sizes = [1, 32], strides = [1, 1]} : vector<1x512xf32> to vector<1x32xf32>
    %cst_147 = arith.constant 5.000000e-01 : f32
    %290 = vector.broadcast %cst_147 : f32 to vector<1x32xf32>
    %291 = arith.mulf %290, %289 : vector<1x32xf32>
    %cst_148 = arith.constant 5.000000e-01 : f32
    %292 = vector.broadcast %cst_148 : f32 to vector<1x32xf32>
    %293 = arith.addf %291, %292 : vector<1x32xf32>
    %294 = arith.mulf %287, %240 : vector<1x32xf32>
    %295 = arith.mulf %282, %288 : vector<1x32xf32>
    %296 = arith.addf %294, %295 : vector<1x32xf32>
    %297 = math.tanh %296 : vector<1x32xf32>
    %298 = arith.mulf %293, %297 : vector<1x32xf32>
    %c4_149 = arith.constant 4 : index
    %c0_150 = arith.constant 0 : index
    %299 = vector.load %arg8[%c4_149, %c0_150] : memref<8x64xf32, #tpu.memory_space<vmem>>, vector<1x32xf32>
    tpu.vector_store %arg8[%c4_149, %c0_150], %271 {strides = array<i32>} : memref<8x64xf32, #tpu.memory_space<vmem>>, vector<1x32xf32>,
    %c3_151 = arith.constant 3 : index
    %c0_152 = arith.constant 0 : index
    %300 = vector.load %arg9[%c3_151, %c0_152] : memref<8x32xf32, #tpu.memory_space<vmem>>, vector<1x32xf32>
    tpu.vector_store %arg9[%c3_151, %c0_152], %298 {strides = array<i32>} : memref<8x32xf32, #tpu.memory_space<vmem>>, vector<1x32xf32>,
    %c5_153 = arith.constant 5 : index
    %c0_154 = arith.constant 0 : index
    %301 = vector.load %arg10[%c5_153, %c0_154] : memref<8x512xf32, #tpu.memory_space<vmem>>, vector<1x512xf32>
    %c0_155 = arith.constant 0 : index
    %c0_156 = arith.constant 0 : index
    %c0_157 = arith.constant 0 : index
    %302 = vector.load %arg3[%c0_155, %c0_156, %c0_157] : memref<2x32x512xf32, #tpu.memory_space<vmem>>, vector<1x32x512xf32>
    %303 = vector.shape_cast %302 : vector<1x32x512xf32> to vector<32x512xf32>
    %cst_158 = arith.constant dense<0.000000e+00> : vector<1x512xf32>
    %304 = tpu.matmul %271, %303, %cst_158 {dimension_numbers = #tpu.dot_dimension_numbers<[1], [0], [0], [1], [0, 0, 1, 1], [], []>} : vector<1x32xf32>, vector<32x512xf32>, vector<1x512xf32> -> vector<1x512xf32>
    %305 = arith.addf %301, %304 : vector<1x512xf32>
    %306 = math.tanh %305 : vector<1x512xf32>
    %307 = vector.extract_strided_slice %306 {offsets = [0, 0], sizes = [1, 32], strides = [1, 1]} : vector<1x512xf32> to vector<1x32xf32>
    %cst_159 = arith.constant 5.000000e-01 : f32
    %308 = vector.broadcast %cst_159 : f32 to vector<1x32xf32>
    %309 = arith.mulf %308, %307 : vector<1x32xf32>
    %cst_160 = arith.constant 5.000000e-01 : f32
    %310 = vector.broadcast %cst_160 : f32 to vector<1x32xf32>
    %311 = arith.addf %309, %310 : vector<1x32xf32>
    %312 = vector.extract_strided_slice %306 {offsets = [0, 128], sizes = [1, 32], strides = [1, 1]} : vector<1x512xf32> to vector<1x32xf32>
    %cst_161 = arith.constant 5.000000e-01 : f32
    %313 = vector.broadcast %cst_161 : f32 to vector<1x32xf32>
    %314 = arith.mulf %313, %312 : vector<1x32xf32>
    %cst_162 = arith.constant 5.000000e-01 : f32
    %315 = vector.broadcast %cst_162 : f32 to vector<1x32xf32>
    %316 = arith.addf %314, %315 : vector<1x32xf32>
    %317 = vector.extract_strided_slice %306 {offsets = [0, 256], sizes = [1, 32], strides = [1, 1]} : vector<1x512xf32> to vector<1x32xf32>
    %318 = vector.extract_strided_slice %306 {offsets = [0, 384], sizes = [1, 32], strides = [1, 1]} : vector<1x512xf32> to vector<1x32xf32>
    %cst_163 = arith.constant 5.000000e-01 : f32
    %319 = vector.broadcast %cst_163 : f32 to vector<1x32xf32>
    %320 = arith.mulf %319, %318 : vector<1x32xf32>
    %cst_164 = arith.constant 5.000000e-01 : f32
    %321 = vector.broadcast %cst_164 : f32 to vector<1x32xf32>
    %322 = arith.addf %320, %321 : vector<1x32xf32>
    %323 = arith.mulf %316, %269 : vector<1x32xf32>
    %324 = arith.mulf %311, %317 : vector<1x32xf32>
    %325 = arith.addf %323, %324 : vector<1x32xf32>
    %326 = math.tanh %325 : vector<1x32xf32>
    %327 = arith.mulf %322, %326 : vector<1x32xf32>
    %c2_165 = arith.constant 2 : index
    %c0_166 = arith.constant 0 : index
    %328 = vector.load %arg11[%c2_165, %c0_166] : memref<8x512xf32, #tpu.memory_space<vmem>>, vector<1x512xf32>
    %c1_167 = arith.constant 1 : index
    %c0_168 = arith.constant 0 : index
    %c0_169 = arith.constant 0 : index
    %329 = vector.load %arg3[%c1_167, %c0_168, %c0_169] : memref<2x32x512xf32, #tpu.memory_space<vmem>>, vector<1x32x512xf32>
    %330 = vector.shape_cast %329 : vector<1x32x512xf32> to vector<32x512xf32>
    %cst_170 = arith.constant dense<0.000000e+00> : vector<1x512xf32>
    %331 = tpu.matmul %298, %330, %cst_170 {dimension_numbers = #tpu.dot_dimension_numbers<[1], [0], [0], [1], [0, 0, 1, 1], [], []>} : vector<1x32xf32>, vector<32x512xf32>, vector<1x512xf32> -> vector<1x512xf32>
    %332 = arith.addf %328, %331 : vector<1x512xf32>
    %333 = math.tanh %332 : vector<1x512xf32>
    %334 = vector.extract_strided_slice %333 {offsets = [0, 0], sizes = [1, 32], strides = [1, 1]} : vector<1x512xf32> to vector<1x32xf32>
    %cst_171 = arith.constant 5.000000e-01 : f32
    %335 = vector.broadcast %cst_171 : f32 to vector<1x32xf32>
    %336 = arith.mulf %335, %334 : vector<1x32xf32>
    %cst_172 = arith.constant 5.000000e-01 : f32
    %337 = vector.broadcast %cst_172 : f32 to vector<1x32xf32>
    %338 = arith.addf %336, %337 : vector<1x32xf32>
    %339 = vector.extract_strided_slice %333 {offsets = [0, 128], sizes = [1, 32], strides = [1, 1]} : vector<1x512xf32> to vector<1x32xf32>
    %cst_173 = arith.constant 5.000000e-01 : f32
    %340 = vector.broadcast %cst_173 : f32 to vector<1x32xf32>
    %341 = arith.mulf %340, %339 : vector<1x32xf32>
    %cst_174 = arith.constant 5.000000e-01 : f32
    %342 = vector.broadcast %cst_174 : f32 to vector<1x32xf32>
    %343 = arith.addf %341, %342 : vector<1x32xf32>
    %344 = vector.extract_strided_slice %333 {offsets = [0, 256], sizes = [1, 32], strides = [1, 1]} : vector<1x512xf32> to vector<1x32xf32>
    %345 = vector.extract_strided_slice %333 {offsets = [0, 384], sizes = [1, 32], strides = [1, 1]} : vector<1x512xf32> to vector<1x32xf32>
    %cst_175 = arith.constant 5.000000e-01 : f32
    %346 = vector.broadcast %cst_175 : f32 to vector<1x32xf32>
    %347 = arith.mulf %346, %345 : vector<1x32xf32>
    %cst_176 = arith.constant 5.000000e-01 : f32
    %348 = vector.broadcast %cst_176 : f32 to vector<1x32xf32>
    %349 = arith.addf %347, %348 : vector<1x32xf32>
    %350 = arith.mulf %343, %296 : vector<1x32xf32>
    %351 = arith.mulf %338, %344 : vector<1x32xf32>
    %352 = arith.addf %350, %351 : vector<1x32xf32>
    %353 = math.tanh %352 : vector<1x32xf32>
    %354 = arith.mulf %349, %353 : vector<1x32xf32>
    %c5_177 = arith.constant 5 : index
    %c0_178 = arith.constant 0 : index
    %355 = vector.load %arg8[%c5_177, %c0_178] : memref<8x64xf32, #tpu.memory_space<vmem>>, vector<1x32xf32>
    tpu.vector_store %arg8[%c5_177, %c0_178], %327 {strides = array<i32>} : memref<8x64xf32, #tpu.memory_space<vmem>>, vector<1x32xf32>,
    %c2_179 = arith.constant 2 : index
    %c0_180 = arith.constant 0 : index
    %356 = vector.load %arg9[%c2_179, %c0_180] : memref<8x32xf32, #tpu.memory_space<vmem>>, vector<1x32xf32>
    tpu.vector_store %arg9[%c2_179, %c0_180], %354 {strides = array<i32>} : memref<8x32xf32, #tpu.memory_space<vmem>>, vector<1x32xf32>,
    %c6_181 = arith.constant 6 : index
    %c0_182 = arith.constant 0 : index
    %357 = vector.load %arg10[%c6_181, %c0_182] : memref<8x512xf32, #tpu.memory_space<vmem>>, vector<1x512xf32>
    %c0_183 = arith.constant 0 : index
    %c0_184 = arith.constant 0 : index
    %c0_185 = arith.constant 0 : index
    %358 = vector.load %arg3[%c0_183, %c0_184, %c0_185] : memref<2x32x512xf32, #tpu.memory_space<vmem>>, vector<1x32x512xf32>
    %359 = vector.shape_cast %358 : vector<1x32x512xf32> to vector<32x512xf32>
    %cst_186 = arith.constant dense<0.000000e+00> : vector<1x512xf32>
    %360 = tpu.matmul %327, %359, %cst_186 {dimension_numbers = #tpu.dot_dimension_numbers<[1], [0], [0], [1], [0, 0, 1, 1], [], []>} : vector<1x32xf32>, vector<32x512xf32>, vector<1x512xf32> -> vector<1x512xf32>
    %361 = arith.addf %357, %360 : vector<1x512xf32>
    %362 = math.tanh %361 : vector<1x512xf32>
    %363 = vector.extract_strided_slice %362 {offsets = [0, 0], sizes = [1, 32], strides = [1, 1]} : vector<1x512xf32> to vector<1x32xf32>
    %cst_187 = arith.constant 5.000000e-01 : f32
    %364 = vector.broadcast %cst_187 : f32 to vector<1x32xf32>
    %365 = arith.mulf %364, %363 : vector<1x32xf32>
    %cst_188 = arith.constant 5.000000e-01 : f32
    %366 = vector.broadcast %cst_188 : f32 to vector<1x32xf32>
    %367 = arith.addf %365, %366 : vector<1x32xf32>
    %368 = vector.extract_strided_slice %362 {offsets = [0, 128], sizes = [1, 32], strides = [1, 1]} : vector<1x512xf32> to vector<1x32xf32>
    %cst_189 = arith.constant 5.000000e-01 : f32
    %369 = vector.broadcast %cst_189 : f32 to vector<1x32xf32>
    %370 = arith.mulf %369, %368 : vector<1x32xf32>
    %cst_190 = arith.constant 5.000000e-01 : f32
    %371 = vector.broadcast %cst_190 : f32 to vector<1x32xf32>
    %372 = arith.addf %370, %371 : vector<1x32xf32>
    %373 = vector.extract_strided_slice %362 {offsets = [0, 256], sizes = [1, 32], strides = [1, 1]} : vector<1x512xf32> to vector<1x32xf32>
    %374 = vector.extract_strided_slice %362 {offsets = [0, 384], sizes = [1, 32], strides = [1, 1]} : vector<1x512xf32> to vector<1x32xf32>
    %cst_191 = arith.constant 5.000000e-01 : f32
    %375 = vector.broadcast %cst_191 : f32 to vector<1x32xf32>
    %376 = arith.mulf %375, %374 : vector<1x32xf32>
    %cst_192 = arith.constant 5.000000e-01 : f32
    %377 = vector.broadcast %cst_192 : f32 to vector<1x32xf32>
    %378 = arith.addf %376, %377 : vector<1x32xf32>
    %379 = arith.mulf %372, %325 : vector<1x32xf32>
    %380 = arith.mulf %367, %373 : vector<1x32xf32>
    %381 = arith.addf %379, %380 : vector<1x32xf32>
    %382 = math.tanh %381 : vector<1x32xf32>
    %383 = arith.mulf %378, %382 : vector<1x32xf32>
    %c1_193 = arith.constant 1 : index
    %c0_194 = arith.constant 0 : index
    %384 = vector.load %arg11[%c1_193, %c0_194] : memref<8x512xf32, #tpu.memory_space<vmem>>, vector<1x512xf32>
    %c1_195 = arith.constant 1 : index
    %c0_196 = arith.constant 0 : index
    %c0_197 = arith.constant 0 : index
    %385 = vector.load %arg3[%c1_195, %c0_196, %c0_197] : memref<2x32x512xf32, #tpu.memory_space<vmem>>, vector<1x32x512xf32>
    %386 = vector.shape_cast %385 : vector<1x32x512xf32> to vector<32x512xf32>
    %cst_198 = arith.constant dense<0.000000e+00> : vector<1x512xf32>
    %387 = tpu.matmul %354, %386, %cst_198 {dimension_numbers = #tpu.dot_dimension_numbers<[1], [0], [0], [1], [0, 0, 1, 1], [], []>} : vector<1x32xf32>, vector<32x512xf32>, vector<1x512xf32> -> vector<1x512xf32>
    %388 = arith.addf %384, %387 : vector<1x512xf32>
    %389 = math.tanh %388 : vector<1x512xf32>
    %390 = vector.extract_strided_slice %389 {offsets = [0, 0], sizes = [1, 32], strides = [1, 1]} : vector<1x512xf32> to vector<1x32xf32>
    %cst_199 = arith.constant 5.000000e-01 : f32
    %391 = vector.broadcast %cst_199 : f32 to vector<1x32xf32>
    %392 = arith.mulf %391, %390 : vector<1x32xf32>
    %cst_200 = arith.constant 5.000000e-01 : f32
    %393 = vector.broadcast %cst_200 : f32 to vector<1x32xf32>
    %394 = arith.addf %392, %393 : vector<1x32xf32>
    %395 = vector.extract_strided_slice %389 {offsets = [0, 128], sizes = [1, 32], strides = [1, 1]} : vector<1x512xf32> to vector<1x32xf32>
    %cst_201 = arith.constant 5.000000e-01 : f32
    %396 = vector.broadcast %cst_201 : f32 to vector<1x32xf32>
    %397 = arith.mulf %396, %395 : vector<1x32xf32>
    %cst_202 = arith.constant 5.000000e-01 : f32
    %398 = vector.broadcast %cst_202 : f32 to vector<1x32xf32>
    %399 = arith.addf %397, %398 : vector<1x32xf32>
    %400 = vector.extract_strided_slice %389 {offsets = [0, 256], sizes = [1, 32], strides = [1, 1]} : vector<1x512xf32> to vector<1x32xf32>
    %401 = vector.extract_strided_slice %389 {offsets = [0, 384], sizes = [1, 32], strides = [1, 1]} : vector<1x512xf32> to vector<1x32xf32>
    %cst_203 = arith.constant 5.000000e-01 : f32
    %402 = vector.broadcast %cst_203 : f32 to vector<1x32xf32>
    %403 = arith.mulf %402, %401 : vector<1x32xf32>
    %cst_204 = arith.constant 5.000000e-01 : f32
    %404 = vector.broadcast %cst_204 : f32 to vector<1x32xf32>
    %405 = arith.addf %403, %404 : vector<1x32xf32>
    %406 = arith.mulf %399, %352 : vector<1x32xf32>
    %407 = arith.mulf %394, %400 : vector<1x32xf32>
    %408 = arith.addf %406, %407 : vector<1x32xf32>
    %409 = math.tanh %408 : vector<1x32xf32>
    %410 = arith.mulf %405, %409 : vector<1x32xf32>
    %c6_205 = arith.constant 6 : index
    %c0_206 = arith.constant 0 : index
    %411 = vector.load %arg8[%c6_205, %c0_206] : memref<8x64xf32, #tpu.memory_space<vmem>>, vector<1x32xf32>
    tpu.vector_store %arg8[%c6_205, %c0_206], %383 {strides = array<i32>} : memref<8x64xf32, #tpu.memory_space<vmem>>, vector<1x32xf32>,
    %c1_207 = arith.constant 1 : index
    %c0_208 = arith.constant 0 : index
    %412 = vector.load %arg9[%c1_207, %c0_208] : memref<8x32xf32, #tpu.memory_space<vmem>>, vector<1x32xf32>
    tpu.vector_store %arg9[%c1_207, %c0_208], %410 {strides = array<i32>} : memref<8x32xf32, #tpu.memory_space<vmem>>, vector<1x32xf32>,
    %c7_209 = arith.constant 7 : index
    %c0_210 = arith.constant 0 : index
    %413 = vector.load %arg10[%c7_209, %c0_210] : memref<8x512xf32, #tpu.memory_space<vmem>>, vector<1x512xf32>
    %c0_211 = arith.constant 0 : index
    %c0_212 = arith.constant 0 : index
    %c0_213 = arith.constant 0 : index
    %414 = vector.load %arg3[%c0_211, %c0_212, %c0_213] : memref<2x32x512xf32, #tpu.memory_space<vmem>>, vector<1x32x512xf32>
    %415 = vector.shape_cast %414 : vector<1x32x512xf32> to vector<32x512xf32>
    %cst_214 = arith.constant dense<0.000000e+00> : vector<1x512xf32>
    %416 = tpu.matmul %383, %415, %cst_214 {dimension_numbers = #tpu.dot_dimension_numbers<[1], [0], [0], [1], [0, 0, 1, 1], [], []>} : vector<1x32xf32>, vector<32x512xf32>, vector<1x512xf32> -> vector<1x512xf32>
    %417 = arith.addf %413, %416 : vector<1x512xf32>
    %418 = math.tanh %417 : vector<1x512xf32>
    %419 = vector.extract_strided_slice %418 {offsets = [0, 0], sizes = [1, 32], strides = [1, 1]} : vector<1x512xf32> to vector<1x32xf32>
    %cst_215 = arith.constant 5.000000e-01 : f32
    %420 = vector.broadcast %cst_215 : f32 to vector<1x32xf32>
    %421 = arith.mulf %420, %419 : vector<1x32xf32>
    %cst_216 = arith.constant 5.000000e-01 : f32
    %422 = vector.broadcast %cst_216 : f32 to vector<1x32xf32>
    %423 = arith.addf %421, %422 : vector<1x32xf32>
    %424 = vector.extract_strided_slice %418 {offsets = [0, 128], sizes = [1, 32], strides = [1, 1]} : vector<1x512xf32> to vector<1x32xf32>
    %cst_217 = arith.constant 5.000000e-01 : f32
    %425 = vector.broadcast %cst_217 : f32 to vector<1x32xf32>
    %426 = arith.mulf %425, %424 : vector<1x32xf32>
    %cst_218 = arith.constant 5.000000e-01 : f32
    %427 = vector.broadcast %cst_218 : f32 to vector<1x32xf32>
    %428 = arith.addf %426, %427 : vector<1x32xf32>
    %429 = vector.extract_strided_slice %418 {offsets = [0, 256], sizes = [1, 32], strides = [1, 1]} : vector<1x512xf32> to vector<1x32xf32>
    %430 = vector.extract_strided_slice %418 {offsets = [0, 384], sizes = [1, 32], strides = [1, 1]} : vector<1x512xf32> to vector<1x32xf32>
    %cst_219 = arith.constant 5.000000e-01 : f32
    %431 = vector.broadcast %cst_219 : f32 to vector<1x32xf32>
    %432 = arith.mulf %431, %430 : vector<1x32xf32>
    %cst_220 = arith.constant 5.000000e-01 : f32
    %433 = vector.broadcast %cst_220 : f32 to vector<1x32xf32>
    %434 = arith.addf %432, %433 : vector<1x32xf32>
    %435 = arith.mulf %428, %381 : vector<1x32xf32>
    %436 = arith.mulf %423, %429 : vector<1x32xf32>
    %437 = arith.addf %435, %436 : vector<1x32xf32>
    %438 = math.tanh %437 : vector<1x32xf32>
    %439 = arith.mulf %434, %438 : vector<1x32xf32>
    %c0_221 = arith.constant 0 : index
    %c0_222 = arith.constant 0 : index
    %440 = vector.load %arg11[%c0_221, %c0_222] : memref<8x512xf32, #tpu.memory_space<vmem>>, vector<1x512xf32>
    %c1_223 = arith.constant 1 : index
    %c0_224 = arith.constant 0 : index
    %c0_225 = arith.constant 0 : index
    %441 = vector.load %arg3[%c1_223, %c0_224, %c0_225] : memref<2x32x512xf32, #tpu.memory_space<vmem>>, vector<1x32x512xf32>
    %442 = vector.shape_cast %441 : vector<1x32x512xf32> to vector<32x512xf32>
    %cst_226 = arith.constant dense<0.000000e+00> : vector<1x512xf32>
    %443 = tpu.matmul %410, %442, %cst_226 {dimension_numbers = #tpu.dot_dimension_numbers<[1], [0], [0], [1], [0, 0, 1, 1], [], []>} : vector<1x32xf32>, vector<32x512xf32>, vector<1x512xf32> -> vector<1x512xf32>
    %444 = arith.addf %440, %443 : vector<1x512xf32>
    %445 = math.tanh %444 : vector<1x512xf32>
    %446 = vector.extract_strided_slice %445 {offsets = [0, 0], sizes = [1, 32], strides = [1, 1]} : vector<1x512xf32> to vector<1x32xf32>
    %cst_227 = arith.constant 5.000000e-01 : f32
    %447 = vector.broadcast %cst_227 : f32 to vector<1x32xf32>
    %448 = arith.mulf %447, %446 : vector<1x32xf32>
    %cst_228 = arith.constant 5.000000e-01 : f32
    %449 = vector.broadcast %cst_228 : f32 to vector<1x32xf32>
    %450 = arith.addf %448, %449 : vector<1x32xf32>
    %451 = vector.extract_strided_slice %445 {offsets = [0, 128], sizes = [1, 32], strides = [1, 1]} : vector<1x512xf32> to vector<1x32xf32>
    %cst_229 = arith.constant 5.000000e-01 : f32
    %452 = vector.broadcast %cst_229 : f32 to vector<1x32xf32>
    %453 = arith.mulf %452, %451 : vector<1x32xf32>
    %cst_230 = arith.constant 5.000000e-01 : f32
    %454 = vector.broadcast %cst_230 : f32 to vector<1x32xf32>
    %455 = arith.addf %453, %454 : vector<1x32xf32>
    %456 = vector.extract_strided_slice %445 {offsets = [0, 256], sizes = [1, 32], strides = [1, 1]} : vector<1x512xf32> to vector<1x32xf32>
    %457 = vector.extract_strided_slice %445 {offsets = [0, 384], sizes = [1, 32], strides = [1, 1]} : vector<1x512xf32> to vector<1x32xf32>
    %cst_231 = arith.constant 5.000000e-01 : f32
    %458 = vector.broadcast %cst_231 : f32 to vector<1x32xf32>
    %459 = arith.mulf %458, %457 : vector<1x32xf32>
    %cst_232 = arith.constant 5.000000e-01 : f32
    %460 = vector.broadcast %cst_232 : f32 to vector<1x32xf32>
    %461 = arith.addf %459, %460 : vector<1x32xf32>
    %462 = arith.mulf %455, %408 : vector<1x32xf32>
    %463 = arith.mulf %450, %456 : vector<1x32xf32>
    %464 = arith.addf %462, %463 : vector<1x32xf32>
    %465 = math.tanh %464 : vector<1x32xf32>
    %466 = arith.mulf %461, %465 : vector<1x32xf32>
    %c7_233 = arith.constant 7 : index
    %c0_234 = arith.constant 0 : index
    %467 = vector.load %arg8[%c7_233, %c0_234] : memref<8x64xf32, #tpu.memory_space<vmem>>, vector<1x32xf32>
    tpu.vector_store %arg8[%c7_233, %c0_234], %439 {strides = array<i32>} : memref<8x64xf32, #tpu.memory_space<vmem>>, vector<1x32xf32>,
    %c0_235 = arith.constant 0 : index
    %c0_236 = arith.constant 0 : index
    %468 = vector.load %arg9[%c0_235, %c0_236] : memref<8x32xf32, #tpu.memory_space<vmem>>, vector<1x32xf32>
    tpu.vector_store %arg9[%c0_235, %c0_236], %466 {strides = array<i32>} : memref<8x32xf32, #tpu.memory_space<vmem>>, vector<1x32xf32>,
    %c0_237 = arith.constant 0 : index
    %c0_238 = arith.constant 0 : index
    %469 = vector.load %arg9[%c0_237, %c0_238] : memref<8x32xf32, #tpu.memory_space<vmem>>, vector<8x32xf32>
    %c0_239 = arith.constant 0 : index
    %c32 = arith.constant 32 : index
    %470 = vector.load %arg8[%c0_239, %c32] : memref<8x64xf32, #tpu.memory_space<vmem>>, vector<8x32xf32>
    tpu.vector_store %arg8[%c0_239, %c32], %469 {strides = array<i32>} : memref<8x64xf32, #tpu.memory_space<vmem>>, vector<8x32xf32>,
    %c2_i32 = arith.constant 2 : i32
    %471 = arith.cmpi eq, %arg0, %c2_i32 : i32
    %472 = arith.extui %471 : i1 to i32
    %c0_i32_240 = arith.constant 0 : i32
    %473 = arith.cmpi ne, %472, %c0_i32_240 : i32
    scf.if %473 {
      %c0_241 = arith.constant 0 : index
      %c0_242 = arith.constant 0 : index
      %474 = vector.load %arg8[%c0_241, %c0_242] : memref<8x64xf32, #tpu.memory_space<vmem>>, vector<8x64xf32>
      %c0_243 = arith.constant 0 : index
      %c0_244 = arith.constant 0 : index
      %475 = vector.load %arg5[%c0_243, %c0_244] : memref<64x128xf32, #tpu.memory_space<vmem>>, vector<64x128xf32>
      %cst_245 = arith.constant dense<0.000000e+00> : vector<8x128xf32>
      %476 = tpu.matmul %474, %475, %cst_245 {dimension_numbers = #tpu.dot_dimension_numbers<[1], [0], [0], [1], [0, 0, 1, 1], [], []>} : vector<8x64xf32>, vector<64x128xf32>, vector<8x128xf32> -> vector<8x128xf32>
      %c0_246 = arith.constant 0 : index
      %c0_247 = arith.constant 0 : index
      %477 = vector.load %arg6[%c0_246, %c0_247] : memref<1x128xf32, #tpu.memory_space<vmem>>, vector<1x128xf32>
      %478 = vector.broadcast %477 : vector<1x128xf32> to vector<8x128xf32>
      %479 = arith.addf %476, %478 : vector<8x128xf32>
      %cst_248 = arith.constant dense<0xFF800000> : vector<8xf32>
      %480 = vector.multi_reduction <maximumf>, %479, %cst_248 [1] : vector<8x128xf32> to vector<8xf32>
      %481 = vector.shape_cast %480 : vector<8xf32> to vector<8x1xf32>
      %482 = vector.broadcast %481 : vector<8x1xf32> to vector<8x128xf32>
      %483 = arith.subf %479, %482 : vector<8x128xf32>
      %484 = math.exp %483 : vector<8x128xf32>
      %cst_249 = arith.constant dense<0.000000e+00> : vector<8xf32>
      %485 = vector.multi_reduction <add>, %484, %cst_249 [1] : vector<8x128xf32> to vector<8xf32>
      %486 = vector.shape_cast %485 : vector<8xf32> to vector<8x1xf32>
      %487 = math.log %486 : vector<8x1xf32>
      %488 = vector.broadcast %487 : vector<8x1xf32> to vector<8x128xf32>
      %489 = arith.subf %483, %488 : vector<8x128xf32>
      %c0_250 = arith.constant 0 : index
      %c0_251 = arith.constant 0 : index
      %490 = vector.load %arg7[%c0_250, %c0_251] : memref<8x128xf32, #tpu.memory_space<vmem>>, vector<8x128xf32>
      tpu.vector_store %arg7[%c0_250, %c0_251], %489 {strides = array<i32>} : memref<8x128xf32, #tpu.memory_space<vmem>>, vector<8x128xf32>,
    } else {
    }
    return
  }
  func.func @transform_0(%arg0: i32) -> (i32, i32) {
    %c0_i32 = arith.constant 0 : i32
    %c0_i32_0 = arith.constant 0 : i32
    %c0_i32_1 = arith.constant 0 : i32
    return %c0_i32, %c0_i32_0 : i32, i32
  }
  func.func @transform_1(%arg0: i32) -> (i32, i32, i32) {
    %c0_i32 = arith.constant 0 : i32
    %c0_i32_0 = arith.constant 0 : i32
    %c0_i32_1 = arith.constant 0 : i32
    return %arg0, %c0_i32, %c0_i32_0 : i32, i32, i32
  }
  func.func @transform_2(%arg0: i32) -> (i32, i32, i32) {
    %c0_i32 = arith.constant 0 : i32
    %c0_i32_0 = arith.constant 0 : i32
    %c0_i32_1 = arith.constant 0 : i32
    return %arg0, %c0_i32, %c0_i32_0 : i32, i32, i32
  }
  func.func @transform_3(%arg0: i32) -> (i32, i32, i32) {
    %c0_i32 = arith.constant 0 : i32
    %c0_i32_0 = arith.constant 0 : i32
    %c0_i32_1 = arith.constant 0 : i32
    return %arg0, %c0_i32, %c0_i32_0 : i32, i32, i32
  }
  func.func @transform_4(%arg0: i32) -> (i32, i32) {
    %c0_i32 = arith.constant 0 : i32
    %c0_i32_0 = arith.constant 0 : i32
    %c0_i32_1 = arith.constant 0 : i32
    return %c0_i32, %c0_i32_0 : i32, i32
  }
  func.func @transform_5(%arg0: i32) -> (i32, i32) {
    %c0_i32 = arith.constant 0 : i32
    %c0_i32_0 = arith.constant 0 : i32
    %c0_i32_1 = arith.constant 0 : i32
    return %c0_i32, %c0_i32_0 : i32, i32
  }
  func.func @transform_6(%arg0: i32) -> (i32, i32) {
    %c0_i32 = arith.constant 0 : i32
    %c0_i32_0 = arith.constant 0 : i32
    %c0_i32_1 = arith.constant 0 : i32
    return %c0_i32, %c0_i32_0 : i32, i32
  }
}

</mosaic_0001>

<llo_original>
// kernel: tpu_custom_call.1
$region0: #{tpu_custom_call.1}
  #allocation0 [shape = 'u32[]', space=smem, size = 0x4, offset = 0x4, fixed_abs, tag = 'smem constant byte address 0x4 - core index']
  #allocation1 [shape = 'u32[144,128]{1,0:T(1,128)}', space=vmem, size = 0x12000, scoped, tag = 'internal scratch']
  #allocation2 [shape = 'f32[8,64]{1,0:T(8,128)}', space=vmem, size = 0x1000, scoped, tag = 'scratch operand']
  #allocation3 [shape = 'f32[8,32]{1,0:T(8,128)}', space=vmem, size = 0x1000, scoped, tag = 'scratch operand']
  #allocation4 [shape = 'f32[8,512]{1,0:T(8,128)}', space=vmem, size = 0x4000, scoped, tag = 'scratch operand']
  #allocation5 [shape = 'f32[8,512]{1,0:T(8,128)}', space=vmem, size = 0x4000, scoped, tag = 'scratch operand']
  %s0 = inlined_call_operand.hbm [shape: f32[8,64], index: 0, kind: input, shape index: {}]
  %s1 = inlined_call_operand.hbm [shape: f32[6,64,512], index: 1, kind: input, shape index: {}]
  %s2 = inlined_call_operand.hbm [shape: f32[6,32,512], index: 2, kind: input, shape index: {}]
  %s3 = inlined_call_operand.hbm [shape: f32[6,1,512], index: 3, kind: input, shape index: {}]
  %s4 = inlined_call_operand.hbm [shape: f32[64,128], index: 4, kind: input, shape index: {}]
  %s5 = inlined_call_operand.vmem [shape: f32[1,128], index: 5, kind: input, shape index: {}]
  %s6 = inlined_call_operand.hbm [shape: f32[8,128], index: 6, kind: output, shape index: {}]
  %s7 = sld [smem:[#allocation0]]
  $region85: #{tpu_custom_call.1} parent=0
    _
  %s9 = ssub.s32 1, %s7
  %s10 = scalar_select 0, %s9, %s7
  $region1: #{tpu_custom_call.1} parent=0
    #allocation6 [shape = 'u8[4096]{0}', space=vmem, size = 0x1000, scoped, tag = 'input window, operand 0, single buffered']
    #allocation7 [shape = 's32[2]{0}', space=sflag, size = 0x8, scoped, tag = 'scoped memory for tpu_custom_call.1']
    #allocation8 [shape = 's32[2]{0}', space=sflag, size = 0x8, scoped, tag = 'scoped memory for tpu_custom_call.1']
    #allocation9 [shape = 'u8[524288]{0}', space=vmem, size = 0x80000, scoped, tag = 'input window, operand 1']
    #allocation10 [shape = 's32[2]{0}', space=sflag, size = 0x8, scoped, tag = 'scoped memory for tpu_custom_call.1']
    #allocation11 [shape = 'u8[262144]{0}', space=vmem, size = 0x40000, scoped, tag = 'input window, operand 2']
    #allocation12 [shape = 'u8[8192]{0}', space=vmem, size = 0x2000, scoped, tag = 'input window, operand 3']
    #allocation13 [shape = 's32[2]{0}', space=sflag, size = 0x8, scoped, tag = 'scoped memory for tpu_custom_call.1']
    #allocation14 [shape = 'u8[32768]{0}', space=vmem, size = 0x8000, scoped, tag = 'input window, operand 4, single buffered']
    #allocation15 [shape = 'u8[4096]{0}', space=vmem, size = 0x1000, scoped, tag = 'output window, operand 0, single buffered']
    %11 = vsyncpa [#allocation7], 0
    %12 = vsyncpa [#allocation10], 0
    %s13 = scalar_lea.sflag [#allocation10], 1
    %14 = vsyncpa %s13, 0
    %15 = vsyncpa [#allocation13], 0
    %s16 = scalar_lea.sflag [#allocation13], 1
    %17 = vsyncpa %s16, 0
    %18 = vsyncpa [#allocation8], 0
    loop: start=0, step=1, limit=5
    $region2: #{tpu_custom_call.1} parent=1 // loop_pre_header
      _
    $region3: #{tpu_custom_call.1} parent=1 // loop_header
      %s20 = sphi 0, %s24
      %p21 = scmp.ge.s32.totalorder %s20, 5
      %s28 = sphi 0, %s28
      %s30 = sphi 0, %s28
      %s31 = sphi 0, %s30
      %s45 = sphi 0, %s31
      %s51 = sphi 0, %s53
      %s54 = sphi 0, %s51
      %s55 = sphi 0, %s54
      %s71 = sphi 0, %s55
      %s77 = sphi 0, %s79
      %s80 = sphi 0, %s77
      %s81 = sphi 0, %s80
      %s97 = sphi 0, %s81
      %s103 = sphi 0, %s105
      %s106 = sphi 0, %s103
      %s107 = sphi 0, %s106
      %s123 = sphi 0, %s107
      %s127 = sphi 0, %s127
      %s129 = sphi 0, %s127
      %s130 = sphi 0, %s129
      %s144 = sphi 0, %s130
      %s148 = sphi 0, %s148
      %s150 = sphi 0, %s148
      %s151 = sphi 0, %s150
      %s165 = sphi 0, %s151
      %s169 = sphi 0, %s169
      %s171 = sphi 0, %s169
      %s172 = sphi 0, %s171
      %s186 = sphi 0, %s172
    $region4: #{tpu_custom_call.1} parent=1 // loop_header_branch
      %23 = sbr.rel (%p21) target = $region8
    $region5: #{tpu_custom_call.1} parent=1 // loop_body
      %s25 = ssub.s32 %s20, 1
      %s26 = ssub.s32 %s20, 2
      %s27 = sadd.s32 %s20, 1
      %s29 = sadd.s32 %s28, 1
      %p32 = scmp.eq.s32.totalorder %s20, 2
      %p33 = scmp.ne.s32.totalorder %s28, %s30
      %p34 = scmp.eq.s32.totalorder %s20, 0
      %p35 = por %p33, %p34
      %p36 = scmp.ne.s32.totalorder %s28, %s30
      %p37 = scmp.eq.s32.totalorder %s25, 2
      %p38 = por %p36, %p37
      %p39 = scmp.ne.s32.totalorder %s30, %s31
      %p40 = scmp.eq.s32.totalorder %s25, 0
      %p41 = por %p39, %p40
      %p42 = scmp.ne.s32.totalorder %s30, %s31
      %p43 = scmp.eq.s32.totalorder %s26, 2
      %p44 = por %p42, %p43
      %p46 = scmp.ne.s32.totalorder %s31, %s45
      %p47 = scmp.eq.s32.totalorder %s26, 0
      %p48 = por %p46, %p47
      %s49 = ssub.s32 %s20, %s27
      %p50 = scmp.eq.s32.totalorder %s49, 0
      %s52 = sadd.s32 %s51, 1
      %s53 = scalar_select %p50, %s51, %s52
      %p56 = pneg %p50
      %p57 = scmp.eq.s32.totalorder %s20, 2
      %p58 = por %p56, %p57
      %p59 = scmp.ne.s32.totalorder %s51, %s54
      %p60 = scmp.eq.s32.totalorder %s20, 0
      %p61 = por %p59, %p60
      %p62 = scmp.ne.s32.totalorder %s51, %s54
      %p63 = scmp.eq.s32.totalorder %s25, 2
      %p64 = por %p62, %p63
      %p65 = scmp.ne.s32.totalorder %s54, %s55
      %p66 = scmp.eq.s32.totalorder %s25, 0
      %p67 = por %p65, %p66
      %p68 = scmp.ne.s32.totalorder %s54, %s55
      %p69 = scmp.eq.s32.totalorder %s26, 2
      %p70 = por %p68, %p69
      %p72 = scmp.ne.s32.totalorder %s55, %s71
      %p73 = scmp.eq.s32.totalorder %s26, 0
      %p74 = por %p72, %p73
      %s75 = ssub.s32 %s20, %s27
      %p76 = scmp.eq.s32.totalorder %s75, 0
      %s78 = sadd.s32 %s77, 1
      %s79 = scalar_select %p76, %s77, %s78
      %p82 = pneg %p76
      %p83 = scmp.eq.s32.totalorder %s20, 2
      %p84 = por %p82, %p83
      %p85 = scmp.ne.s32.totalorder %s77, %s80
      %p86 = scmp.eq.s32.totalorder %s20, 0
      %p87 = por %p85, %p86
      %p88 = scmp.ne.s32.totalorder %s77, %s80
      %p89 = scmp.eq.s32.totalorder %s25, 2
      %p90 = por %p88, %p89
      %p91 = scmp.ne.s32.totalorder %s80, %s81
      %p92 = scmp.eq.s32.totalorder %s25, 0
      %p93 = por %p91, %p92
      %p94 = scmp.ne.s32.totalorder %s80, %s81
      %p95 = scmp.eq.s32.totalorder %s26, 2
      %p96 = por %p94, %p95
      %p98 = scmp.ne.s32.totalorder %s81, %s97
      %p99 = scmp.eq.s32.totalorder %s26, 0
      %p100 = por %p98, %p99
      %s101 = ssub.s32 %s20, %s27
      %p102 = scmp.eq.s32.totalorder %s101, 0
      %s104 = sadd.s32 %s103, 1
      %s105 = scalar_select %p102, %s103, %s104
      %p108 = pneg %p102
      %p109 = scmp.eq.s32.totalorder %s20, 2
      %p110 = por %p108, %p109
      %p111 = scmp.ne.s32.totalorder %s103, %s106
      %p112 = scmp.eq.s32.totalorder %s20, 0
      %p113 = por %p111, %p112
      %p114 = scmp.ne.s32.totalorder %s103, %s106
      %p115 = scmp.eq.s32.totalorder %s25, 2
      %p116 = por %p114, %p115
      %p117 = scmp.ne.s32.totalorder %s106, %s107
      %p118 = scmp.eq.s32.totalorder %s25, 0
      %p119 = por %p117, %p118
      %p120 = scmp.ne.s32.totalorder %s106, %s107
      %p121 = scmp.eq.s32.totalorder %s26, 2
      %p122 = por %p120, %p121
      %p124 = scmp.ne.s32.totalorder %s107, %s123
      %p125 = scmp.eq.s32.totalorder %s26, 0
      %p126 = por %p124, %p125
      %s128 = sadd.s32 %s127, 1
      %p131 = scmp.eq.s32.totalorder %s20, 2
      %p132 = scmp.ne.s32.totalorder %s127, %s129
      %p133 = scmp.eq.s32.totalorder %s20, 0
      %p134 = por %p132, %p133
      %p135 = scmp.ne.s32.totalorder %s127, %s129
      %p136 = scmp.eq.s32.totalorder %s25, 2
      %p137 = por %p135, %p136
      %p138 = scmp.ne.s32.totalorder %s129, %s130
      %p139 = scmp.eq.s32.totalorder %s25, 0
      %p140 = por %p138, %p139
      %p141 = scmp.ne.s32.totalorder %s129, %s130
      %p142 = scmp.eq.s32.totalorder %s26, 2
      %p143 = por %p141, %p142
      %p145 = scmp.ne.s32.totalorder %s130, %s144
      %p146 = scmp.eq.s32.totalorder %s26, 0
      %p147 = por %p145, %p146
      %s149 = sadd.s32 %s148, 1
      %p152 = scmp.eq.s32.totalorder %s20, 2
      %p153 = scmp.ne.s32.totalorder %s148, %s150
      %p154 = scmp.eq.s32.totalorder %s20, 0
      %p155 = por %p153, %p154
      %p156 = scmp.ne.s32.totalorder %s148, %s150
      %p157 = scmp.eq.s32.totalorder %s25, 2
      %p158 = por %p156, %p157
      %p159 = scmp.ne.s32.totalorder %s150, %s151
      %p160 = scmp.eq.s32.totalorder %s25, 0
      %p161 = por %p159, %p160
      %p162 = scmp.ne.s32.totalorder %s150, %s151
      %p163 = scmp.eq.s32.totalorder %s26, 2
      %p164 = por %p162, %p163
      %p166 = scmp.ne.s32.totalorder %s151, %s165
      %p167 = scmp.eq.s32.totalorder %s26, 0
      %p168 = por %p166, %p167
      %s170 = sadd.s32 %s169, 1
      %p173 = scmp.eq.s32.totalorder %s20, 2
      %p174 = scmp.ne.s32.totalorder %s169, %s171
      %p175 = scmp.eq.s32.totalorder %s20, 0
      %p176 = por %p174, %p175
      %p177 = scmp.ne.s32.totalorder %s169, %s171
      %p178 = scmp.eq.s32.totalorder %s25, 2
      %p179 = por %p177, %p178
      %p180 = scmp.ne.s32.totalorder %s171, %s172
      %p181 = scmp.eq.s32.totalorder %s25, 0
      %p182 = por %p180, %p181
      %p183 = scmp.ne.s32.totalorder %s171, %s172
      %p184 = scmp.eq.s32.totalorder %s26, 2
      %p185 = por %p183, %p184
      %p187 = scmp.ne.s32.totalorder %s172, %s186
      %p188 = scmp.eq.s32.totalorder %s26, 0
      %p189 = por %p187, %p188
      %p190 = scmp.le.s32.totalorder 1, %s20
      %p191 = scmp.lt.s32.totalorder %s20, 4
      %p192 = pnand %p190, %p191
      %p193 = pneg %p192
      // Predicated region
      $region9: #{tpu_custom_call.1} parent=5 // pred_check
        _
      $region10: #{tpu_custom_call.1} parent=5 // pred_check_branch
        %195 = sbr.rel (%p192) target = $region12
      $region11: #{tpu_custom_call.1} parent=5 // pred_region
        %s196 = ssub.s32 %s20, 1
        // Predicated region
        $region13: #{tpu_custom_call.1} parent=11 // pred_check
          %p197 = pneg %p41
        $region14: #{tpu_custom_call.1} parent=11 // pred_check_branch
          %199 = sbr.rel (%p197) target = $region16
        $region15: #{tpu_custom_call.1} parent=11 // pred_region
          %s201 = ssub.s32 128, 128
          %202 = vsyncadd [#allocation7], %s201
          %s204 = sshll.u32 [#allocation6], 4
          %s205 = int_to_ptr.vmem [resolvable:$true] %s204
          %207 = dma.hbm_to_vmem [thread:$0]  %s0, 128, %s205, [#allocation7]
        $region16: #{tpu_custom_call.1} parent=11 // pred_fallthru
          _
        // Predicated region
        $region17: #{tpu_custom_call.1} parent=11 // pred_check
          %p208 = pneg %p140
        $region18: #{tpu_custom_call.1} parent=11 // pred_check_branch
          %210 = sbr.rel (%p208) target = $region20
        $region19: #{tpu_custom_call.1} parent=11 // pred_region
          %s212 = ssub.s32 1024, 1024
          %213 = vsyncadd [#allocation13], %s212
          %s214 = sshll.u32 [#allocation14], 4
          %s215 = int_to_ptr.vmem [resolvable:$true] %s214
          %220 = dma.hbm_to_vmem [thread:$0]  %s4, 1024, %s215, [#allocation13], 128, 128, 8
        $region20: #{tpu_custom_call.1} parent=11 // pred_fallthru
          _
        // Predicated region
        $region21: #{tpu_custom_call.1} parent=11 // pred_check
          %p221 = pneg %p161
        $region22: #{tpu_custom_call.1} parent=11 // pred_check_branch
          %223 = sbr.rel (%p221) target = $region24
        $region23: #{tpu_custom_call.1} parent=11 // pred_region
          _
        $region24: #{tpu_custom_call.1} parent=11 // pred_fallthru
          _
      $region12: #{tpu_custom_call.1} parent=5 // pred_fallthru
        _
      %p224 = scmp.lt.s32.totalorder %s20, 3
      // Predicated region
      $region25: #{tpu_custom_call.1} parent=5 // pred_check
        %p225 = pneg %p224
      $region26: #{tpu_custom_call.1} parent=5 // pred_check_branch
        %227 = sbr.rel (%p225) target = $region28
      $region27: #{tpu_custom_call.1} parent=5 // pred_region
        // Predicated region
        $region29: #{tpu_custom_call.1} parent=27 // pred_check
          %p228 = pneg %p61
        $region30: #{tpu_custom_call.1} parent=27 // pred_check_branch
          %230 = sbr.rel (%p228) target = $region32
        $region31: #{tpu_custom_call.1} parent=27 // pred_region
          %s231 = sand.u32 %s20, 1
          %s232 = scalar_lea.sflag [#allocation10], %s231
          %s233 = sand.u32 %s51, 1
          %s234 = smul.addr %s233, 512
          %s235 = scalar_lea.vmem [#allocation9], %s234
          %s236 = smul.u32 2, %s20
          %s238 = ssub.s32 8192, 8192
          %239 = vsyncadd %s232, %s238
          %s240 = smul.addr %s236, 32
          %s241 = smul.addr %s240, 128
          %s242 = scalar_lea.hbm %s1, %s241
          %s243 = sshll.u32 %s235, 4
          %s244 = int_to_ptr.vmem [resolvable:$true] %s243
          %249 = dma.hbm_to_vmem [thread:$0]  %s242, 8192, %s244, %s232, 512, 512, 32
        $region32: #{tpu_custom_call.1} parent=27 // pred_fallthru
          _
        // Predicated region
        $region33: #{tpu_custom_call.1} parent=27 // pred_check
          %p250 = pneg %p87
        $region34: #{tpu_custom_call.1} parent=27 // pred_check_branch
          %252 = sbr.rel (%p250) target = $region36
        $region35: #{tpu_custom_call.1} parent=27 // pred_region
          %s253 = sand.u32 %s20, 1
          %s254 = scalar_lea.sflag [#allocation10], %s253
          %s255 = sand.u32 %s77, 1
          %s256 = smul.addr %s255, 256
          %s257 = scalar_lea.vmem [#allocation11], %s256
          %s258 = smul.u32 2, %s20
          %s260 = ssub.s32 4096, 4096
          %261 = vsyncadd %s254, %s260
          %s262 = smul.addr %s258, 16
          %s263 = smul.addr %s262, 128
          %s264 = scalar_lea.hbm %s2, %s263
          %s265 = sshll.u32 %s257, 4
          %s266 = int_to_ptr.vmem [resolvable:$true] %s265
          %271 = dma.hbm_to_vmem [thread:$0]  %s264, 4096, %s266, %s254, 512, 512, 32
        $region36: #{tpu_custom_call.1} parent=27 // pred_fallthru
          _
        // Predicated region
        $region37: #{tpu_custom_call.1} parent=27 // pred_check
          %p272 = pneg %p113
        $region38: #{tpu_custom_call.1} parent=27 // pred_check_branch
          %274 = sbr.rel (%p272) target = $region40
        $region39: #{tpu_custom_call.1} parent=27 // pred_region
          %s275 = sand.u32 %s20, 1
          %s276 = scalar_lea.sflag [#allocation13], %s275
          %s277 = sand.u32 %s103, 1
          %s278 = smul.addr %s277, 8
          %s279 = scalar_lea.vmem [#allocation12], %s278
          %s280 = smul.u32 2, %s20
          %s282 = ssub.s32 128, 128
          %283 = vsyncadd %s276, %s282
          %s284 = smul.addr %s280, 4
          %s285 = smul.addr %s284, 16
          %s286 = scalar_lea.hbm %s3, %s285
          %s287 = sshll.u32 %s279, 4
          %s288 = int_to_ptr.vmem [resolvable:$true] %s287
          %293 = dma.hbm_to_vmem [thread:$0]  %s286, 128, %s288, %s276, 64, 64, 4
        $region40: #{tpu_custom_call.1} parent=27 // pred_fallthru
          _
      $region28: #{tpu_custom_call.1} parent=5 // pred_fallthru
        _
      %p294 = scmp.le.s32.totalorder 1, %s20
      %p295 = scmp.lt.s32.totalorder %s20, 4
      %p296 = pnand %p294, %p295
      %p297 = pneg %p296
      // Predicated region
      $region41: #{tpu_custom_call.1} parent=5 // pred_check
        _
      $region42: #{tpu_custom_call.1} parent=5 // pred_check_branch
        %299 = sbr.rel (%p296) target = $region44
      $region43: #{tpu_custom_call.1} parent=5 // pred_region
        %s300 = ssub.s32 %s20, 1
        // Predicated region
        $region45: #{tpu_custom_call.1} parent=43 // pred_check
          %p301 = pneg %p41
        $region46: #{tpu_custom_call.1} parent=43 // pred_check_branch
          %303 = sbr.rel (%p301) target = $region48
        $region47: #{tpu_custom_call.1} parent=43 // pred_region
          %304 = dma.done [#allocation7], 128
        $region48: #{tpu_custom_call.1} parent=43 // pred_fallthru
          _
        %s305 = sand.u32 %s25, 1
        %s306 = scalar_lea.sflag [#allocation10], %s305
        %s307 = sand.u32 %s54, 1
        %s308 = smul.addr %s307, 512
        %s309 = scalar_lea.vmem [#allocation9], %s308
        // Predicated region
        $region49: #{tpu_custom_call.1} parent=43 // pred_check
          %p310 = pneg %p67
        $region50: #{tpu_custom_call.1} parent=43 // pred_check_branch
          %312 = sbr.rel (%p310) target = $region52
        $region51: #{tpu_custom_call.1} parent=43 // pred_region
          %313 = dma.done %s306, 8192
        $region52: #{tpu_custom_call.1} parent=43 // pred_fallthru
          _
        %s314 = sand.u32 %s25, 1
        %s315 = scalar_lea.sflag [#allocation10], %s314
        %s316 = sand.u32 %s80, 1
        %s317 = smul.addr %s316, 256
        %s318 = scalar_lea.vmem [#allocation11], %s317
        // Predicated region
        $region53: #{tpu_custom_call.1} parent=43 // pred_check
          %p319 = pneg %p93
        $region54: #{tpu_custom_call.1} parent=43 // pred_check_branch
          %321 = sbr.rel (%p319) target = $region56
        $region55: #{tpu_custom_call.1} parent=43 // pred_region
          %322 = dma.done %s315, 4096
        $region56: #{tpu_custom_call.1} parent=43 // pred_fallthru
          _
        %s323 = sand.u32 %s25, 1
        %s324 = scalar_lea.sflag [#allocation13], %s323
        %s325 = sand.u32 %s106, 1
        %s326 = smul.addr %s325, 8
        %s327 = scalar_lea.vmem [#allocation12], %s326
        // Predicated region
        $region57: #{tpu_custom_call.1} parent=43 // pred_check
          %p328 = pneg %p119
        $region58: #{tpu_custom_call.1} parent=43 // pred_check_branch
          %330 = sbr.rel (%p328) target = $region60
        $region59: #{tpu_custom_call.1} parent=43 // pred_region
          %331 = dma.done %s324, 128
        $region60: #{tpu_custom_call.1} parent=43 // pred_fallthru
          _
        // Predicated region
        $region61: #{tpu_custom_call.1} parent=43 // pred_check
          %p332 = pneg %p140
        $region62: #{tpu_custom_call.1} parent=43 // pred_check_branch
          %334 = sbr.rel (%p332) target = $region64
        $region63: #{tpu_custom_call.1} parent=43 // pred_region
          %335 = dma.done [#allocation13], 1024
        $region64: #{tpu_custom_call.1} parent=43 // pred_fallthru
          _
        %p336 = pneg %p41
        %p337 = pneg %p38
        %s338 = sand.u32 %s25, 1
        %s339 = scalar_lea.sflag [#allocation10], %s338
        %s340 = sand.u32 %s54, 1
        %s341 = smul.addr %s340, 512
        %s342 = scalar_lea.vmem [#allocation9], %s341
        %p343 = pneg %p67
        %p344 = pneg %p64
        %s345 = sand.u32 %s25, 1
        %s346 = scalar_lea.sflag [#allocation10], %s345
        %s347 = sand.u32 %s80, 1
        %s348 = smul.addr %s347, 256
        %s349 = scalar_lea.vmem [#allocation11], %s348
        %p350 = pneg %p93
        %p351 = pneg %p90
        %s352 = sand.u32 %s25, 1
        %s353 = scalar_lea.sflag [#allocation13], %s352
        %s354 = sand.u32 %s106, 1
        %s355 = smul.addr %s354, 8
        %s356 = scalar_lea.vmem [#allocation12], %s355
        %p357 = pneg %p119
        %p358 = pneg %p116
        %p359 = pneg %p140
        %p360 = pneg %p137
        %p361 = pneg %p161
        %p362 = pneg %p158
        %p363 = pneg %p182
        %p364 = pneg %p179
        %s365 = smul.u32 2, %s25
        %s366 = smul.u32 2, %s25
        %s367 = smul.u32 2, %s25
        %p368 = scmp.eq.s32.totalorder %s25, 0
        // Predicated region
        $region65: #{tpu_custom_call.1} parent=43 // pred_check
          %p369 = pneg %p368
        $region66: #{tpu_custom_call.1} parent=43 // pred_check_branch
          %371 = sbr.rel (%p369) target = $region68
        $region67: #{tpu_custom_call.1} parent=43 // pred_region
          %v372 = vld [vmem:[#allocation6] sm:$0xff]
          %vm373 = vcmask 523264
          %374 = vst.msk [vmem:[#allocation2] sm:$0xff] %vm373, %v372
        $region68: #{tpu_custom_call.1} parent=43 // pred_fallthru
          _
        %v375 = vld [vmem:[#allocation2] sm:$0xff]
        %v376 = vld [vmem:[%s309] sm:$0xff]
        %v377 = vld [vmem:[%s309 + $0x8] sm:$0xff]
        %v378 = vld [vmem:[%s309 + $0x10] sm:$0xff]
        %v379 = vld [vmem:[%s309 + $0x18] sm:$0xff]
        %v380 = vld [vmem:[%s309 + $0x20] sm:$0xff]
        %v381 = vld [vmem:[%s309 + $0x28] sm:$0xff]
        %v382 = vld [vmem:[%s309 + $0x30] sm:$0xff]
        %v383 = vld [vmem:[%s309 + $0x38] sm:$0xff]
        %v384 = vld [vmem:[%s309 + $0x40] sm:$0xff]
        %v385 = vld [vmem:[%s309 + $0x48] sm:$0xff]
        %v386 = vld [vmem:[%s309 + $0x50] sm:$0xff]
        %v387 = vld [vmem:[%s309 + $0x58] sm:$0xff]
        %v388 = vld [vmem:[%s309 + $0x60] sm:$0xff]
        %v389 = vld [vmem:[%s309 + $0x68] sm:$0xff]
        %v390 = vld [vmem:[%s309 + $0x70] sm:$0xff]
        %v391 = vld [vmem:[%s309 + $0x78] sm:$0xff]
        %v392 = vld [vmem:[%s309 + $0x80] sm:$0xff]
        %v393 = vld [vmem:[%s309 + $0x88] sm:$0xff]
        %v394 = vld [vmem:[%s309 + $0x90] sm:$0xff]
        %v395 = vld [vmem:[%s309 + $0x98] sm:$0xff]
        %v396 = vld [vmem:[%s309 + $0xa0] sm:$0xff]
        %v397 = vld [vmem:[%s309 + $0xa8] sm:$0xff]
        %v398 = vld [vmem:[%s309 + $0xb0] sm:$0xff]
        %v399 = vld [vmem:[%s309 + $0xb8] sm:$0xff]
        %v400 = vld [vmem:[%s309 + $0xc0] sm:$0xff]
        %v401 = vld [vmem:[%s309 + $0xc8] sm:$0xff]
        %v402 = vld [vmem:[%s309 + $0xd0] sm:$0xff]
        %v403 = vld [vmem:[%s309 + $0xd8] sm:$0xff]
        %v404 = vld [vmem:[%s309 + $0xe0] sm:$0xff]
        %v405 = vld [vmem:[%s309 + $0xe8] sm:$0xff]
        %v406 = vld [vmem:[%s309 + $0xf0] sm:$0xff]
        %v407 = vld [vmem:[%s309 + $0xf8] sm:$0xff]
        %v408 = vld [vmem:[%s327] sm:$0xf]
        %v410 = vlaneseq
        %v411 = vshrl.u32 %v410, 7
        %v412 = vsub.s32 0, %v411
        %v413 = vrot.slane %v408, %v412
        %v414 = vlaneseq
        %v415 = vshrl.u32 %v414, 7
        %v416 = vsub.s32 1, %v415
        %v417 = vrot.slane %v408, %v416
        %v418 = vlaneseq
        %v419 = vshrl.u32 %v418, 7
        %v420 = vsub.s32 2, %v419
        %v421 = vrot.slane %v408, %v420
        %v422 = vlaneseq
        %v423 = vshrl.u32 %v422, 7
        %v424 = vsub.s32 3, %v423
        %v425 = vrot.slane %v408, %v424
        %vm430 = vcmask 523264
        %v432 = vsel %vm430, %v375, 0
        %434 = vmatprep.subr.mxu0 0.0
        %435 = vmatpush1.msra.mxu0 0.0
        %436 = vmatprep.subr.mxu0 0.0
        %437 = vmatpush1.msra.mxu0 0.0
        %438 = vmatprep.subr.mxu0 0.0
        %439 = vmatpush1.msra.mxu0 0.0
        %440 = vmatprep.subr.mxu0 0.0
        %441 = vmatpush1.msra.mxu0 0.0
        %442 = vmatprep.subr.mxu0 0.0
        %443 = vmatpush1.msra.mxu0 0.0
        %444 = vmatprep.subr.mxu0 0.0
        %445 = vmatpush1.msra.mxu0 0.0
        %446 = vmatprep.subr.mxu0 0.0
        %447 = vmatpush1.msra.mxu0 0.0
        %448 = vmatprep.subr.mxu0 0.0
        %449 = vmatpush1.msra.mxu0 0.0
        %450 = vmatprep.subr.mxu0 %v405
        %451 = vmatpush1.msra.mxu0 %v404
        %452 = vmatprep.subr.mxu0 %v401
        %453 = vmatpush1.msra.mxu0 %v400
        %454 = vmatprep.subr.mxu0 %v397
        %455 = vmatpush1.msra.mxu0 %v396
        %456 = vmatprep.subr.mxu0 %v393
        %457 = vmatpush1.msra.mxu0 %v392
        %458 = vmatprep.subr.mxu0 %v389
        %459 = vmatpush1.msra.mxu0 %v388
        %460 = vmatprep.subr.mxu0 %v385
        %461 = vmatpush1.msra.mxu0 %v384
        %462 = vmatprep.subr.mxu0 %v381
        %463 = vmatpush1.msra.mxu0 %v380
        %464 = vmatprep.subr.mxu0 %v377
        %465 = vmatpush1.msra.mxu0 %v376
        %466 = vmatprep.subr.mxu0 0.0
        %467 = vmatpush2.msra.mxu0 0.0
        %468 = vmatprep.subr.mxu0 0.0
        %469 = vmatpush2.msra.mxu0 0.0
        %470 = vmatprep.subr.mxu0 0.0
        %471 = vmatpush2.msra.mxu0 0.0
        %472 = vmatprep.subr.mxu0 0.0
        %473 = vmatpush2.msra.mxu0 0.0
        %474 = vmatprep.subr.mxu0 0.0
        %475 = vmatpush2.msra.mxu0 0.0
        %476 = vmatprep.subr.mxu0 0.0
        %477 = vmatpush2.msra.mxu0 0.0
        %478 = vmatprep.subr.mxu0 0.0
        %479 = vmatpush2.msra.mxu0 0.0
        %480 = vmatprep.subr.mxu0 0.0
        %481 = vmatpush2.msra.mxu0 0.0
        %482 = vmatprep.subr.mxu0 0.0
        %483 = vmatpush2.msra.mxu0 0.0
        %484 = vmatprep.subr.mxu0 0.0
        %485 = vmatpush2.msra.mxu0 0.0
        %486 = vmatprep.subr.mxu0 0.0
        %487 = vmatpush2.msra.mxu0 0.0
        %488 = vmatprep.subr.mxu0 0.0
        %489 = vmatpush2.msra.mxu0 0.0
        %490 = vmatprep.subr.mxu0 0.0
        %491 = vmatpush2.msra.mxu0 0.0
        %492 = vmatprep.subr.mxu0 0.0
        %493 = vmatpush2.msra.mxu0 0.0
        %494 = vmatprep.subr.mxu0 0.0
        %495 = vmatpush2.msra.mxu0 0.0
        %496 = vmatprep.subr.mxu0 0.0
        %497 = vmatpush2.msra.mxu0 0.0
        %498 = vmatprep.mubr.f32.mxu0 0.0
        %499 = vmatmul.mubr.f32.gmra.mxu0 %v432
        %v500 = vpop.f32.mrf.mxu0
        %v501 = vadd.f32 %v413, %v500
        %v502 = vpop.f32.mrf.mxu0
        %v503 = vadd.f32 %v417, %v502
        %504 = vdwg.mxu0
        %505 = vmatprep.subr.mxu0 0.0
        %506 = vmatpush1.msra.mxu0 0.0
        %507 = vmatprep.subr.mxu0 0.0
        %508 = vmatpush1.msra.mxu0 0.0
        %509 = vmatprep.subr.mxu0 0.0
        %510 = vmatpush1.msra.mxu0 0.0
        %511 = vmatprep.subr.mxu0 0.0
        %512 = vmatpush1.msra.mxu0 0.0
        %513 = vmatprep.subr.mxu0 0.0
        %514 = vmatpush1.msra.mxu0 0.0
        %515 = vmatprep.subr.mxu0 0.0
        %516 = vmatpush1.msra.mxu0 0.0
        %517 = vmatprep.subr.mxu0 0.0
        %518 = vmatpush1.msra.mxu0 0.0
        %519 = vmatprep.subr.mxu0 0.0
        %520 = vmatpush1.msra.mxu0 0.0
        %521 = vmatprep.subr.mxu0 %v407
        %522 = vmatpush1.msra.mxu0 %v406
        %523 = vmatprep.subr.mxu0 %v403
        %524 = vmatpush1.msra.mxu0 %v402
        %525 = vmatprep.subr.mxu0 %v399
        %526 = vmatpush1.msra.mxu0 %v398
        %527 = vmatprep.subr.mxu0 %v395
        %528 = vmatpush1.msra.mxu0 %v394
        %529 = vmatprep.subr.mxu0 %v391
        %530 = vmatpush1.msra.mxu0 %v390
        %531 = vmatprep.subr.mxu0 %v387
        %532 = vmatpush1.msra.mxu0 %v386
        %533 = vmatprep.subr.mxu0 %v383
        %534 = vmatpush1.msra.mxu0 %v382
        %535 = vmatprep.subr.mxu0 %v379
        %536 = vmatpush1.msra.mxu0 %v378
        %537 = vmatprep.subr.mxu0 0.0
        %538 = vmatpush2.msra.mxu0 0.0
        %539 = vmatprep.subr.mxu0 0.0
        %540 = vmatpush2.msra.mxu0 0.0
        %541 = vmatprep.subr.mxu0 0.0
        %542 = vmatpush2.msra.mxu0 0.0
        %543 = vmatprep.subr.mxu0 0.0
        %544 = vmatpush2.msra.mxu0 0.0
        %545 = vmatprep.subr.mxu0 0.0
        %546 = vmatpush2.msra.mxu0 0.0
        %547 = vmatprep.subr.mxu0 0.0
        %548 = vmatpush2.msra.mxu0 0.0
        %549 = vmatprep.subr.mxu0 0.0
        %550 = vmatpush2.msra.mxu0 0.0
        %551 = vmatprep.subr.mxu0 0.0
        %552 = vmatpush2.msra.mxu0 0.0
        %553 = vmatprep.subr.mxu0 0.0
        %554 = vmatpush2.msra.mxu0 0.0
        %555 = vmatprep.subr.mxu0 0.0
        %556 = vmatpush2.msra.mxu0 0.0
        %557 = vmatprep.subr.mxu0 0.0
        %558 = vmatpush2.msra.mxu0 0.0
        %559 = vmatprep.subr.mxu0 0.0
        %560 = vmatpush2.msra.mxu0 0.0
        %561 = vmatprep.subr.mxu0 0.0
        %562 = vmatpush2.msra.mxu0 0.0
        %563 = vmatprep.subr.mxu0 0.0
        %564 = vmatpush2.msra.mxu0 0.0
        %565 = vmatprep.subr.mxu0 0.0
        %566 = vmatpush2.msra.mxu0 0.0
        %567 = vmatprep.subr.mxu0 0.0
        %568 = vmatpush2.msra.mxu0 0.0
        %569 = vmatprep.mubr.f32.mxu0 0.0
        %570 = vmatmul.mubr.f32.gmra.mxu0 %v432
        %v571 = vpop.f32.mrf.mxu0
        %v572 = vadd.f32 %v421, %v571
        %v573 = vpop.f32.mrf.mxu0
        %v574 = vadd.f32 %v425, %v573
        %575 = vdwg.mxu0
        %576 = vst [vmem:[#allocation4] sm:$0xff] %v501
        %577 = vst [vmem:[#allocation4 + $0x8] sm:$0xff] %v503
        %578 = vst [vmem:[#allocation4 + $0x10] sm:$0xff] %v572
        %579 = vst [vmem:[#allocation4 + $0x18] sm:$0xff] %v574
        %s580 = scalar_lea.vmem %s309, 256 [#allocation9]
        %v581 = vld [vmem:[%s580] sm:$0xff]
        %v582 = vld [vmem:[%s580 + $0x8] sm:$0xff]
        %v583 = vld [vmem:[%s580 + $0x10] sm:$0xff]
        %v584 = vld [vmem:[%s580 + $0x18] sm:$0xff]
        %v585 = vld [vmem:[%s580 + $0x20] sm:$0xff]
        %v586 = vld [vmem:[%s580 + $0x28] sm:$0xff]
        %v587 = vld [vmem:[%s580 + $0x30] sm:$0xff]
        %v588 = vld [vmem:[%s580 + $0x38] sm:$0xff]
        %v589 = vld [vmem:[%s580 + $0x40] sm:$0xff]
        %v590 = vld [vmem:[%s580 + $0x48] sm:$0xff]
        %v591 = vld [vmem:[%s580 + $0x50] sm:$0xff]
        %v592 = vld [vmem:[%s580 + $0x58] sm:$0xff]
        %v593 = vld [vmem:[%s580 + $0x60] sm:$0xff]
        %v594 = vld [vmem:[%s580 + $0x68] sm:$0xff]
        %v595 = vld [vmem:[%s580 + $0x70] sm:$0xff]
        %v596 = vld [vmem:[%s580 + $0x78] sm:$0xff]
        %v597 = vld [vmem:[%s580 + $0x80] sm:$0xff]
        %v598 = vld [vmem:[%s580 + $0x88] sm:$0xff]
        %v599 = vld [vmem:[%s580 + $0x90] sm:$0xff]
        %v600 = vld [vmem:[%s580 + $0x98] sm:$0xff]
        %v601 = vld [vmem:[%s580 + $0xa0] sm:$0xff]
        %v602 = vld [vmem:[%s580 + $0xa8] sm:$0xff]
        %v603 = vld [vmem:[%s580 + $0xb0] sm:$0xff]
        %v604 = vld [vmem:[%s580 + $0xb8] sm:$0xff]
        %v605 = vld [vmem:[%s580 + $0xc0] sm:$0xff]
        %v606 = vld [vmem:[%s580 + $0xc8] sm:$0xff]
        %v607 = vld [vmem:[%s580 + $0xd0] sm:$0xff]
        %v608 = vld [vmem:[%s580 + $0xd8] sm:$0xff]
        %v609 = vld [vmem:[%s580 + $0xe0] sm:$0xff]
        %v610 = vld [vmem:[%s580 + $0xe8] sm:$0xff]
        %v611 = vld [vmem:[%s580 + $0xf0] sm:$0xff]
        %v612 = vld [vmem:[%s580 + $0xf8] sm:$0xff]
        %s613 = scalar_lea.vmem %s327, 4 [#allocation12]
        %v614 = vld [vmem:[%s613] sm:$0xf]
        %v616 = vlaneseq
        %v617 = vshrl.u32 %v616, 7
        %v618 = vsub.s32 0, %v617
        %v619 = vrot.slane %v614, %v618
        %v620 = vlaneseq
        %v621 = vshrl.u32 %v620, 7
        %v622 = vsub.s32 1, %v621
        %v623 = vrot.slane %v614, %v622
        %v624 = vlaneseq
        %v625 = vshrl.u32 %v624, 7
        %v626 = vsub.s32 2, %v625
        %v627 = vrot.slane %v614, %v626
        %v628 = vlaneseq
        %v629 = vshrl.u32 %v628, 7
        %v630 = vsub.s32 3, %v629
        %v631 = vrot.slane %v614, %v630
        %636 = vmatprep.subr.mxu0 0.0
        %637 = vmatpush1.msra.mxu0 0.0
        %638 = vmatprep.subr.mxu0 0.0
        %639 = vmatpush1.msra.mxu0 0.0
        %640 = vmatprep.subr.mxu0 0.0
        %641 = vmatpush1.msra.mxu0 0.0
        %642 = vmatprep.subr.mxu0 0.0
        %643 = vmatpush1.msra.mxu0 0.0
        %644 = vmatprep.subr.mxu0 0.0
        %645 = vmatpush1.msra.mxu0 0.0
        %646 = vmatprep.subr.mxu0 0.0
        %647 = vmatpush1.msra.mxu0 0.0
        %648 = vmatprep.subr.mxu0 0.0
        %649 = vmatpush1.msra.mxu0 0.0
        %650 = vmatprep.subr.mxu0 0.0
        %651 = vmatpush1.msra.mxu0 0.0
        %652 = vmatprep.subr.mxu0 %v610
        %653 = vmatpush1.msra.mxu0 %v609
        %654 = vmatprep.subr.mxu0 %v606
        %655 = vmatpush1.msra.mxu0 %v605
        %656 = vmatprep.subr.mxu0 %v602
        %657 = vmatpush1.msra.mxu0 %v601
        %658 = vmatprep.subr.mxu0 %v598
        %659 = vmatpush1.msra.mxu0 %v597
        %660 = vmatprep.subr.mxu0 %v594
        %661 = vmatpush1.msra.mxu0 %v593
        %662 = vmatprep.subr.mxu0 %v590
        %663 = vmatpush1.msra.mxu0 %v589
        %664 = vmatprep.subr.mxu0 %v586
        %665 = vmatpush1.msra.mxu0 %v585
        %666 = vmatprep.subr.mxu0 %v582
        %667 = vmatpush1.msra.mxu0 %v581
        %668 = vmatprep.subr.mxu0 0.0
        %669 = vmatpush2.msra.mxu0 0.0
        %670 = vmatprep.subr.mxu0 0.0
        %671 = vmatpush2.msra.mxu0 0.0
        %672 = vmatprep.subr.mxu0 0.0
        %673 = vmatpush2.msra.mxu0 0.0
        %674 = vmatprep.subr.mxu0 0.0
        %675 = vmatpush2.msra.mxu0 0.0
        %676 = vmatprep.subr.mxu0 0.0
        %677 = vmatpush2.msra.mxu0 0.0
        %678 = vmatprep.subr.mxu0 0.0
        %679 = vmatpush2.msra.mxu0 0.0
        %680 = vmatprep.subr.mxu0 0.0
        %681 = vmatpush2.msra.mxu0 0.0
        %682 = vmatprep.subr.mxu0 0.0
        %683 = vmatpush2.msra.mxu0 0.0
        %684 = vmatprep.subr.mxu0 0.0
        %685 = vmatpush2.msra.mxu0 0.0
        %686 = vmatprep.subr.mxu0 0.0
        %687 = vmatpush2.msra.mxu0 0.0
        %688 = vmatprep.subr.mxu0 0.0
        %689 = vmatpush2.msra.mxu0 0.0
        %690 = vmatprep.subr.mxu0 0.0
        %691 = vmatpush2.msra.mxu0 0.0
        %692 = vmatprep.subr.mxu0 0.0
        %693 = vmatpush2.msra.mxu0 0.0
        %694 = vmatprep.subr.mxu0 0.0
        %695 = vmatpush2.msra.mxu0 0.0
        %696 = vmatprep.subr.mxu0 0.0
        %697 = vmatpush2.msra.mxu0 0.0
        %698 = vmatprep.subr.mxu0 0.0
        %699 = vmatpush2.msra.mxu0 0.0
        %700 = vmatprep.mubr.f32.mxu0 0.0
        %701 = vmatmul.mubr.f32.gmra.mxu0 %v432
        %v702 = vpop.f32.mrf.mxu0
        %v703 = vadd.f32 %v619, %v702
        %v704 = vpop.f32.mrf.mxu0
        %v705 = vadd.f32 %v623, %v704
        %706 = vdwg.mxu0
        %707 = vmatprep.subr.mxu0 0.0
        %708 = vmatpush1.msra.mxu0 0.0
        %709 = vmatprep.subr.mxu0 0.0
        %710 = vmatpush1.msra.mxu0 0.0
        %711 = vmatprep.subr.mxu0 0.0
        %712 = vmatpush1.msra.mxu0 0.0
        %713 = vmatprep.subr.mxu0 0.0
        %714 = vmatpush1.msra.mxu0 0.0
        %715 = vmatprep.subr.mxu0 0.0
        %716 = vmatpush1.msra.mxu0 0.0
        %717 = vmatprep.subr.mxu0 0.0
        %718 = vmatpush1.msra.mxu0 0.0
        %719 = vmatprep.subr.mxu0 0.0
        %720 = vmatpush1.msra.mxu0 0.0
        %721 = vmatprep.subr.mxu0 0.0
        %722 = vmatpush1.msra.mxu0 0.0
        %723 = vmatprep.subr.mxu0 %v612
        %724 = vmatpush1.msra.mxu0 %v611
        %725 = vmatprep.subr.mxu0 %v608
        %726 = vmatpush1.msra.mxu0 %v607
        %727 = vmatprep.subr.mxu0 %v604
        %728 = vmatpush1.msra.mxu0 %v603
        %729 = vmatprep.subr.mxu0 %v600
        %730 = vmatpush1.msra.mxu0 %v599
        %731 = vmatprep.subr.mxu0 %v596
        %732 = vmatpush1.msra.mxu0 %v595
        %733 = vmatprep.subr.mxu0 %v592
        %734 = vmatpush1.msra.mxu0 %v591
        %735 = vmatprep.subr.mxu0 %v588
        %736 = vmatpush1.msra.mxu0 %v587
        %737 = vmatprep.subr.mxu0 %v584
        %738 = vmatpush1.msra.mxu0 %v583
        %739 = vmatprep.subr.mxu0 0.0
        %740 = vmatpush2.msra.mxu0 0.0
        %741 = vmatprep.subr.mxu0 0.0
        %742 = vmatpush2.msra.mxu0 0.0
        %743 = vmatprep.subr.mxu0 0.0
        %744 = vmatpush2.msra.mxu0 0.0
        %745 = vmatprep.subr.mxu0 0.0
        %746 = vmatpush2.msra.mxu0 0.0
        %747 = vmatprep.subr.mxu0 0.0
        %748 = vmatpush2.msra.mxu0 0.0
        %749 = vmatprep.subr.mxu0 0.0
        %750 = vmatpush2.msra.mxu0 0.0
        %751 = vmatprep.subr.mxu0 0.0
        %752 = vmatpush2.msra.mxu0 0.0
        %753 = vmatprep.subr.mxu0 0.0
        %754 = vmatpush2.msra.mxu0 0.0
        %755 = vmatprep.subr.mxu0 0.0
        %756 = vmatpush2.msra.mxu0 0.0
        %757 = vmatprep.subr.mxu0 0.0
        %758 = vmatpush2.msra.mxu0 0.0
        %759 = vmatprep.subr.mxu0 0.0
        %760 = vmatpush2.msra.mxu0 0.0
        %761 = vmatprep.subr.mxu0 0.0
        %762 = vmatpush2.msra.mxu0 0.0
        %763 = vmatprep.subr.mxu0 0.0
        %764 = vmatpush2.msra.mxu0 0.0
        %765 = vmatprep.subr.mxu0 0.0
        %766 = vmatpush2.msra.mxu0 0.0
        %767 = vmatprep.subr.mxu0 0.0
        %768 = vmatpush2.msra.mxu0 0.0
        %769 = vmatprep.subr.mxu0 0.0
        %770 = vmatpush2.msra.mxu0 0.0
        %771 = vmatprep.mubr.f32.mxu0 0.0
        %772 = vmatmul.mubr.f32.gmra.mxu0 %v432
        %v773 = vpop.f32.mrf.mxu0
        %v774 = vadd.f32 %v627, %v773
        %v775 = vpop.f32.mrf.mxu0
        %v776 = vadd.f32 %v631, %v775
        %777 = vdwg.mxu0
        %778 = vst [vmem:[#allocation5] sm:$0xff] %v703
        %779 = vst [vmem:[#allocation5 + $0x8] sm:$0xff] %v705
        %780 = vst [vmem:[#allocation5 + $0x10] sm:$0xff] %v774
        %781 = vst [vmem:[#allocation5 + $0x18] sm:$0xff] %v776
        %v782 = vld [vmem:[#allocation4] ss:$8 sm:$0xf]
        %v783 = vld [vmem:[%s318] sm:$0xff]
        %v784 = vld [vmem:[%s318 + $0x8] sm:$0xff]
        %v785 = vld [vmem:[%s318 + $0x10] sm:$0xff]
        %v786 = vld [vmem:[%s318 + $0x18] sm:$0xff]
        %v787 = vld [vmem:[%s318 + $0x20] sm:$0xff]
        %v788 = vld [vmem:[%s318 + $0x28] sm:$0xff]
        %v789 = vld [vmem:[%s318 + $0x30] sm:$0xff]
        %v790 = vld [vmem:[%s318 + $0x38] sm:$0xff]
        %v791 = vld [vmem:[%s318 + $0x40] sm:$0xff]
        %v792 = vld [vmem:[%s318 + $0x48] sm:$0xff]
        %v793 = vld [vmem:[%s318 + $0x50] sm:$0xff]
        %v794 = vld [vmem:[%s318 + $0x58] sm:$0xff]
        %v795 = vld [vmem:[%s318 + $0x60] sm:$0xff]
        %v796 = vld [vmem:[%s318 + $0x68] sm:$0xff]
        %v797 = vld [vmem:[%s318 + $0x70] sm:$0xff]
        %v798 = vld [vmem:[%s318 + $0x78] sm:$0xff]
        %vm799 = vcmask 261120
        %v801 = vsel %vm799, 0.0, 0
        %803 = vmatprep.subr.mxu0 0.0
        %804 = vmatpush1.msra.mxu0 0.0
        %805 = vmatprep.subr.mxu0 0.0
        %806 = vmatpush1.msra.mxu0 0.0
        %807 = vmatprep.subr.mxu0 0.0
        %808 = vmatpush1.msra.mxu0 0.0
        %809 = vmatprep.subr.mxu0 0.0
        %810 = vmatpush1.msra.mxu0 0.0
        %811 = vmatprep.subr.mxu0 0.0
        %812 = vmatpush1.msra.mxu0 0.0
        %813 = vmatprep.subr.mxu0 0.0
        %814 = vmatpush1.msra.mxu0 0.0
        %815 = vmatprep.subr.mxu0 0.0
        %816 = vmatpush1.msra.mxu0 0.0
        %817 = vmatprep.subr.mxu0 0.0
        %818 = vmatpush1.msra.mxu0 0.0
        %819 = vmatprep.subr.mxu0 0.0
        %820 = vmatpush1.msra.mxu0 0.0
        %821 = vmatprep.subr.mxu0 0.0
        %822 = vmatpush1.msra.mxu0 0.0
        %823 = vmatprep.subr.mxu0 0.0
        %824 = vmatpush1.msra.mxu0 0.0
        %825 = vmatprep.subr.mxu0 0.0
        %826 = vmatpush1.msra.mxu0 0.0
        %827 = vmatprep.subr.mxu0 %v796
        %828 = vmatpush1.msra.mxu0 %v795
        %829 = vmatprep.subr.mxu0 %v792
        %830 = vmatpush1.msra.mxu0 %v791
        %831 = vmatprep.subr.mxu0 %v788
        %832 = vmatpush1.msra.mxu0 %v787
        %833 = vmatprep.subr.mxu0 %v784
        %834 = vmatpush1.msra.mxu0 %v783
        %835 = vmatprep.subr.mxu0 0.0
        %836 = vmatpush2.msra.mxu0 0.0
        %837 = vmatprep.subr.mxu0 0.0
        %838 = vmatpush2.msra.mxu0 0.0
        %839 = vmatprep.subr.mxu0 0.0
        %840 = vmatpush2.msra.mxu0 0.0
        %841 = vmatprep.subr.mxu0 0.0
        %842 = vmatpush2.msra.mxu0 0.0
        %843 = vmatprep.subr.mxu0 0.0
        %844 = vmatpush2.msra.mxu0 0.0
        %845 = vmatprep.subr.mxu0 0.0
        %846 = vmatpush2.msra.mxu0 0.0
        %847 = vmatprep.subr.mxu0 0.0
        %848 = vmatpush2.msra.mxu0 0.0
        %849 = vmatprep.subr.mxu0 0.0
        %850 = vmatpush2.msra.mxu0 0.0
        %851 = vmatprep.subr.mxu0 0.0
        %852 = vmatpush2.msra.mxu0 0.0
        %853 = vmatprep.subr.mxu0 0.0
        %854 = vmatpush2.msra.mxu0 0.0
        %855 = vmatprep.subr.mxu0 0.0
        %856 = vmatpush2.msra.mxu0 0.0
        %857 = vmatprep.subr.mxu0 0.0
        %858 = vmatpush2.msra.mxu0 0.0
        %859 = vmatprep.subr.mxu0 0.0
        %860 = vmatpush2.msra.mxu0 0.0
        %861 = vmatprep.subr.mxu0 0.0
        %862 = vmatpush2.msra.mxu0 0.0
        %863 = vmatprep.subr.mxu0 0.0
        %864 = vmatpush2.msra.mxu0 0.0
        %865 = vmatprep.subr.mxu0 0.0
        %866 = vmatpush2.msra.mxu0 0.0
        %867 = vmatprep.mubr.f32.mxu0 0.0
        %868 = vmatmul.mubr.f32.gmra.mxu0 %v801
        %v869 = vpop.f32.mrf.mxu0
        %v870 = vadd.f32 0.0, %v869
        %v871 = vpop.f32.mrf.mxu0
        %v872 = vadd.f32 0.0, %v871
        %873 = vdwg.mxu0
        %874 = vmatprep.subr.mxu0 0.0
        %875 = vmatpush1.msra.mxu0 0.0
        %876 = vmatprep.subr.mxu0 0.0
        %877 = vmatpush1.msra.mxu0 0.0
        %878 = vmatprep.subr.mxu0 0.0
        %879 = vmatpush1.msra.mxu0 0.0
        %880 = vmatprep.subr.mxu0 0.0
        %881 = vmatpush1.msra.mxu0 0.0
        %882 = vmatprep.subr.mxu0 0.0
        %883 = vmatpush1.msra.mxu0 0.0
        %884 = vmatprep.subr.mxu0 0.0
        %885 = vmatpush1.msra.mxu0 0.0
        %886 = vmatprep.subr.mxu0 0.0
        %887 = vmatpush1.msra.mxu0 0.0
        %888 = vmatprep.subr.mxu0 0.0
        %889 = vmatpush1.msra.mxu0 0.0
        %890 = vmatprep.subr.mxu0 0.0
        %891 = vmatpush1.msra.mxu0 0.0
        %892 = vmatprep.subr.mxu0 0.0
        %893 = vmatpush1.msra.mxu0 0.0
        %894 = vmatprep.subr.mxu0 0.0
        %895 = vmatpush1.msra.mxu0 0.0
        %896 = vmatprep.subr.mxu0 0.0
        %897 = vmatpush1.msra.mxu0 0.0
        %898 = vmatprep.subr.mxu0 %v798
        %899 = vmatpush1.msra.mxu0 %v797
        %900 = vmatprep.subr.mxu0 %v794
        %901 = vmatpush1.msra.mxu0 %v793
        %902 = vmatprep.subr.mxu0 %v790
        %903 = vmatpush1.msra.mxu0 %v789
        %904 = vmatprep.subr.mxu0 %v786
        %905 = vmatpush1.msra.mxu0 %v785
        %906 = vmatprep.subr.mxu0 0.0
        %907 = vmatpush2.msra.mxu0 0.0
        %908 = vmatprep.subr.mxu0 0.0
        %909 = vmatpush2.msra.mxu0 0.0
        %910 = vmatprep.subr.mxu0 0.0
        %911 = vmatpush2.msra.mxu0 0.0
        %912 = vmatprep.subr.mxu0 0.0
        %913 = vmatpush2.msra.mxu0 0.0
        %914 = vmatprep.subr.mxu0 0.0
        %915 = vmatpush2.msra.mxu0 0.0
        %916 = vmatprep.subr.mxu0 0.0
        %917 = vmatpush2.msra.mxu0 0.0
        %918 = vmatprep.subr.mxu0 0.0
        %919 = vmatpush2.msra.mxu0 0.0
        %920 = vmatprep.subr.mxu0 0.0
        %921 = vmatpush2.msra.mxu0 0.0
        %922 = vmatprep.subr.mxu0 0.0
        %923 = vmatpush2.msra.mxu0 0.0
        %924 = vmatprep.subr.mxu0 0.0
        %925 = vmatpush2.msra.mxu0 0.0
        %926 = vmatprep.subr.mxu0 0.0
        %927 = vmatpush2.msra.mxu0 0.0
        %928 = vmatprep.subr.mxu0 0.0
        %929 = vmatpush2.msra.mxu0 0.0
        %930 = vmatprep.subr.mxu0 0.0
        %931 = vmatpush2.msra.mxu0 0.0
        %932 = vmatprep.subr.mxu0 0.0
        %933 = vmatpush2.msra.mxu0 0.0
        %934 = vmatprep.subr.mxu0 0.0
        %935 = vmatpush2.msra.mxu0 0.0
        %936 = vmatprep.subr.mxu0 0.0
        %937 = vmatpush2.msra.mxu0 0.0
        %938 = vmatprep.mubr.f32.mxu0 0.0
        %939 = vmatmul.mubr.f32.gmra.mxu0 %v801
        %v940 = vpop.f32.mrf.mxu0
        %v941 = vadd.f32 0.0, %v940
        %v942 = vpop.f32.mrf.mxu0
        %v943 = vadd.f32 0.0, %v942
        %944 = vdwg.mxu0
        %v949 = vcombine.low %v870, %v872
        %v950 = vcombine.low %v941, %v943
        %v952 = vunpack.c.l.s4 1966171168
        %v953 = vunpack.c.0.s8 %v952
        %v954 = vlaneseq
        %v955 = vshrl.u32 %v954, 7
        %v956 = vsub.s32 %v953, %v955
        %v957 = vrot.slane %v949, %v956
        %v959 = vunpack.c.l.s4 1966171168
        %v960 = vunpack.c.0.s8 %v959
        %v961 = vlaneseq
        %v962 = vshrl.u32 %v961, 7
        %v963 = vsub.s32 %v960, %v962
        %v964 = vrot.slane %v950, %v963
        %v965 = vcombine.low %v957, %v964
        %v967 = vunpack.c.l.s4 1966171168
        %v968 = vunpack.c.0.s8 %v967
        %v969 = vlaneseq
        %v970 = vshrl.u32 %v969, 7
        %v971 = vsub.s32 %v968, %v970
        %v972 = vrot.slane %v965, %v971
        %v974 = vadd.f32 %v782, %v972
        %v975 = vtanh.pop %v974
        %v976 = vmul.f32 %v975, 0.5
        %v977 = vadd.f32 %v976, 0.5
        %v979 = vrot.slane %v975, 1
        %v981 = vmul.f32 %v979, 0.5
        %v982 = vadd.f32 %v981, 0.5
        %v983 = vrot.slane %v975, 3
        %v985 = vmul.f32 %v983, 0.5
        %v986 = vadd.f32 %v985, 0.5
        %v987 = vmul.f32 %v982, 0.0
        %v988 = vrot.slane %v975, 2
        %v990 = vmul.f32 %v977, %v988
        %v991 = vadd.f32 %v987, %v990
        %v992 = vtanh.pop %v991
        %v993 = vmul.f32 %v986, %v992
        %s994 = scalar_lea.vmem [#allocation5], 7
        %v995 = vld [vmem:[%s994] ss:$8 sm:$0xf]
        %s996 = scalar_lea.vmem %s318, 128 [#allocation11]
        %v997 = vld [vmem:[%s996] sm:$0xff]
        %v998 = vld [vmem:[%s996 + $0x8] sm:$0xff]
        %v999 = vld [vmem:[%s996 + $0x10] sm:$0xff]
        %v1000 = vld [vmem:[%s996 + $0x18] sm:$0xff]
        %v1001 = vld [vmem:[%s996 + $0x20] sm:$0xff]
        %v1002 = vld [vmem:[%s996 + $0x28] sm:$0xff]
        %v1003 = vld [vmem:[%s996 + $0x30] sm:$0xff]
        %v1004 = vld [vmem:[%s996 + $0x38] sm:$0xff]
        %v1005 = vld [vmem:[%s996 + $0x40] sm:$0xff]
        %v1006 = vld [vmem:[%s996 + $0x48] sm:$0xff]
        %v1007 = vld [vmem:[%s996 + $0x50] sm:$0xff]
        %v1008 = vld [vmem:[%s996 + $0x58] sm:$0xff]
        %v1009 = vld [vmem:[%s996 + $0x60] sm:$0xff]
        %v1010 = vld [vmem:[%s996 + $0x68] sm:$0xff]
        %v1011 = vld [vmem:[%s996 + $0x70] sm:$0xff]
        %v1012 = vld [vmem:[%s996 + $0x78] sm:$0xff]
        %1013 = vmatprep.subr.mxu0 0.0
        %1014 = vmatpush1.msra.mxu0 0.0
        %1015 = vmatprep.subr.mxu0 0.0
        %1016 = vmatpush1.msra.mxu0 0.0
        %1017 = vmatprep.subr.mxu0 0.0
        %1018 = vmatpush1.msra.mxu0 0.0
        %1019 = vmatprep.subr.mxu0 0.0
        %1020 = vmatpush1.msra.mxu0 0.0
        %1021 = vmatprep.subr.mxu0 0.0
        %1022 = vmatpush1.msra.mxu0 0.0
        %1023 = vmatprep.subr.mxu0 0.0
        %1024 = vmatpush1.msra.mxu0 0.0
        %1025 = vmatprep.subr.mxu0 0.0
        %1026 = vmatpush1.msra.mxu0 0.0
        %1027 = vmatprep.subr.mxu0 0.0
        %1028 = vmatpush1.msra.mxu0 0.0
        %1029 = vmatprep.subr.mxu0 0.0
        %1030 = vmatpush1.msra.mxu0 0.0
        %1031 = vmatprep.subr.mxu0 0.0
        %1032 = vmatpush1.msra.mxu0 0.0
        %1033 = vmatprep.subr.mxu0 0.0
        %1034 = vmatpush1.msra.mxu0 0.0
        %1035 = vmatprep.subr.mxu0 0.0
        %1036 = vmatpush1.msra.mxu0 0.0
        %1037 = vmatprep.subr.mxu0 %v1010
        %1038 = vmatpush1.msra.mxu0 %v1009
        %1039 = vmatprep.subr.mxu0 %v1006
        %1040 = vmatpush1.msra.mxu0 %v1005
        %1041 = vmatprep.subr.mxu0 %v1002
        %1042 = vmatpush1.msra.mxu0 %v1001
        %1043 = vmatprep.subr.mxu0 %v998
        %1044 = vmatpush1.msra.mxu0 %v997
        %1045 = vmatprep.subr.mxu0 0.0
        %1046 = vmatpush2.msra.mxu0 0.0
        %1047 = vmatprep.subr.mxu0 0.0
        %1048 = vmatpush2.msra.mxu0 0.0
        %1049 = vmatprep.subr.mxu0 0.0
        %1050 = vmatpush2.msra.mxu0 0.0
        %1051 = vmatprep.subr.mxu0 0.0
        %1052 = vmatpush2.msra.mxu0 0.0
        %1053 = vmatprep.subr.mxu0 0.0
        %1054 = vmatpush2.msra.mxu0 0.0
        %1055 = vmatprep.subr.mxu0 0.0
        %1056 = vmatpush2.msra.mxu0 0.0
        %1057 = vmatprep.subr.mxu0 0.0
        %1058 = vmatpush2.msra.mxu0 0.0
        %1059 = vmatprep.subr.mxu0 0.0
        %1060 = vmatpush2.msra.mxu0 0.0
        %1061 = vmatprep.subr.mxu0 0.0
        %1062 = vmatpush2.msra.mxu0 0.0
        %1063 = vmatprep.subr.mxu0 0.0
        %1064 = vmatpush2.msra.mxu0 0.0
        %1065 = vmatprep.subr.mxu0 0.0
        %1066 = vmatpush2.msra.mxu0 0.0
        %1067 = vmatprep.subr.mxu0 0.0
        %1068 = vmatpush2.msra.mxu0 0.0
        %1069 = vmatprep.subr.mxu0 0.0
        %1070 = vmatpush2.msra.mxu0 0.0
        %1071 = vmatprep.subr.mxu0 0.0
        %1072 = vmatpush2.msra.mxu0 0.0
        %1073 = vmatprep.subr.mxu0 0.0
        %1074 = vmatpush2.msra.mxu0 0.0
        %1075 = vmatprep.subr.mxu0 0.0
        %1076 = vmatpush2.msra.mxu0 0.0
        %1077 = vmatprep.mubr.f32.mxu0 0.0
        %1078 = vmatmul.mubr.f32.gmra.mxu0 %v801
        %v1079 = vpop.f32.mrf.mxu0
        %v1080 = vadd.f32 0.0, %v1079
        %v1081 = vpop.f32.mrf.mxu0
        %v1082 = vadd.f32 0.0, %v1081
        %1083 = vdwg.mxu0
        %1084 = vmatprep.subr.mxu0 0.0
        %1085 = vmatpush1.msra.mxu0 0.0
        %1086 = vmatprep.subr.mxu0 0.0
        %1087 = vmatpush1.msra.mxu0 0.0
        %1088 = vmatprep.subr.mxu0 0.0
        %1089 = vmatpush1.msra.mxu0 0.0
        %1090 = vmatprep.subr.mxu0 0.0
        %1091 = vmatpush1.msra.mxu0 0.0
        %1092 = vmatprep.subr.mxu0 0.0
        %1093 = vmatpush1.msra.mxu0 0.0
        %1094 = vmatprep.subr.mxu0 0.0
        %1095 = vmatpush1.msra.mxu0 0.0
        %1096 = vmatprep.subr.mxu0 0.0
        %1097 = vmatpush1.msra.mxu0 0.0
        %1098 = vmatprep.subr.mxu0 0.0
        %1099 = vmatpush1.msra.mxu0 0.0
        %1100 = vmatprep.subr.mxu0 0.0
        %1101 = vmatpush1.msra.mxu0 0.0
        %1102 = vmatprep.subr.mxu0 0.0
        %1103 = vmatpush1.msra.mxu0 0.0
        %1104 = vmatprep.subr.mxu0 0.0
        %1105 = vmatpush1.msra.mxu0 0.0
        %1106 = vmatprep.subr.mxu0 0.0
        %1107 = vmatpush1.msra.mxu0 0.0
        %1108 = vmatprep.subr.mxu0 %v1012
        %1109 = vmatpush1.msra.mxu0 %v1011
        %1110 = vmatprep.subr.mxu0 %v1008
        %1111 = vmatpush1.msra.mxu0 %v1007
        %1112 = vmatprep.subr.mxu0 %v1004
        %1113 = vmatpush1.msra.mxu0 %v1003
        %1114 = vmatprep.subr.mxu0 %v1000
        %1115 = vmatpush1.msra.mxu0 %v999
        %1116 = vmatprep.subr.mxu0 0.0
        %1117 = vmatpush2.msra.mxu0 0.0
        %1118 = vmatprep.subr.mxu0 0.0
        %1119 = vmatpush2.msra.mxu0 0.0
        %1120 = vmatprep.subr.mxu0 0.0
        %1121 = vmatpush2.msra.mxu0 0.0
        %1122 = vmatprep.subr.mxu0 0.0
        %1123 = vmatpush2.msra.mxu0 0.0
        %1124 = vmatprep.subr.mxu0 0.0
        %1125 = vmatpush2.msra.mxu0 0.0
        %1126 = vmatprep.subr.mxu0 0.0
        %1127 = vmatpush2.msra.mxu0 0.0
        %1128 = vmatprep.subr.mxu0 0.0
        %1129 = vmatpush2.msra.mxu0 0.0
        %1130 = vmatprep.subr.mxu0 0.0
        %1131 = vmatpush2.msra.mxu0 0.0
        %1132 = vmatprep.subr.mxu0 0.0
        %1133 = vmatpush2.msra.mxu0 0.0
        %1134 = vmatprep.subr.mxu0 0.0
        %1135 = vmatpush2.msra.mxu0 0.0
        %1136 = vmatprep.subr.mxu0 0.0
        %1137 = vmatpush2.msra.mxu0 0.0
        %1138 = vmatprep.subr.mxu0 0.0
        %1139 = vmatpush2.msra.mxu0 0.0
        %1140 = vmatprep.subr.mxu0 0.0
        %1141 = vmatpush2.msra.mxu0 0.0
        %1142 = vmatprep.subr.mxu0 0.0
        %1143 = vmatpush2.msra.mxu0 0.0
        %1144 = vmatprep.subr.mxu0 0.0
        %1145 = vmatpush2.msra.mxu0 0.0
        %1146 = vmatprep.subr.mxu0 0.0
        %1147 = vmatpush2.msra.mxu0 0.0
        %1148 = vmatprep.mubr.f32.mxu0 0.0
        %1149 = vmatmul.mubr.f32.gmra.mxu0 %v801
        %v1150 = vpop.f32.mrf.mxu0
        %v1151 = vadd.f32 0.0, %v1150
        %v1152 = vpop.f32.mrf.mxu0
        %v1153 = vadd.f32 0.0, %v1152
        %1154 = vdwg.mxu0
        %v1159 = vcombine.low %v1080, %v1082
        %v1160 = vcombine.low %v1151, %v1153
        %v1162 = vunpack.c.l.s4 1966171168
        %v1163 = vunpack.c.0.s8 %v1162
        %v1164 = vlaneseq
        %v1165 = vshrl.u32 %v1164, 7
        %v1166 = vsub.s32 %v1163, %v1165
        %v1167 = vrot.slane %v1159, %v1166
        %v1169 = vunpack.c.l.s4 1966171168
        %v1170 = vunpack.c.0.s8 %v1169
        %v1171 = vlaneseq
        %v1172 = vshrl.u32 %v1171, 7
        %v1173 = vsub.s32 %v1170, %v1172
        %v1174 = vrot.slane %v1160, %v1173
        %v1175 = vcombine.low %v1167, %v1174
        %v1177 = vunpack.c.l.s4 1966171168
        %v1178 = vunpack.c.0.s8 %v1177
        %v1179 = vlaneseq
        %v1180 = vshrl.u32 %v1179, 7
        %v1181 = vsub.s32 %v1178, %v1180
        %v1182 = vrot.slane %v1175, %v1181
        %v1184 = vadd.f32 %v995, %v1182
        %v1185 = vtanh.pop %v1184
        %v1186 = vmul.f32 %v1185, 0.5
        %v1187 = vadd.f32 %v1186, 0.5
        %v1189 = vrot.slane %v1185, 1
        %v1191 = vmul.f32 %v1189, 0.5
        %v1192 = vadd.f32 %v1191, 0.5
        %v1193 = vrot.slane %v1185, 3
        %v1195 = vmul.f32 %v1193, 0.5
        %v1196 = vadd.f32 %v1195, 0.5
        %v1197 = vmul.f32 %v1192, 0.0
        %v1198 = vrot.slane %v1185, 2
        %v1200 = vmul.f32 %v1187, %v1198
        %v1201 = vadd.f32 %v1197, %v1200
        %v1202 = vtanh.pop %v1201
        %v1203 = vmul.f32 %v1196, %v1202
        %vm1204 = vcmask 253952
        %1205 = vst.msk [vmem:[#allocation2] sm:$0x1] %vm1204, %v993
        %1206 = vst.msk [vmem:[#allocation3 + $0x7] sm:$0x1] %vm1204, %v1203
        %s1207 = scalar_lea.vmem [#allocation4], 1
        %v1208 = vld [vmem:[%s1207] ss:$8 sm:$0xf]
        %v1209 = vld [vmem:[%s318] sm:$0xff]
        %v1210 = vld [vmem:[%s318 + $0x8] sm:$0xff]
        %v1211 = vld [vmem:[%s318 + $0x10] sm:$0xff]
        %v1212 = vld [vmem:[%s318 + $0x18] sm:$0xff]
        %v1213 = vld [vmem:[%s318 + $0x20] sm:$0xff]
        %v1214 = vld [vmem:[%s318 + $0x28] sm:$0xff]
        %v1215 = vld [vmem:[%s318 + $0x30] sm:$0xff]
        %v1216 = vld [vmem:[%s318 + $0x38] sm:$0xff]
        %v1217 = vld [vmem:[%s318 + $0x40] sm:$0xff]
        %v1218 = vld [vmem:[%s318 + $0x48] sm:$0xff]
        %v1219 = vld [vmem:[%s318 + $0x50] sm:$0xff]
        %v1220 = vld [vmem:[%s318 + $0x58] sm:$0xff]
        %v1221 = vld [vmem:[%s318 + $0x60] sm:$0xff]
        %v1222 = vld [vmem:[%s318 + $0x68] sm:$0xff]
        %v1223 = vld [vmem:[%s318 + $0x70] sm:$0xff]
        %v1224 = vld [vmem:[%s318 + $0x78] sm:$0xff]
        %v1226 = vsel %vm799, %v993, 0
        %1228 = vmatprep.subr.mxu0 0.0
        %1229 = vmatpush1.msra.mxu0 0.0
        %1230 = vmatprep.subr.mxu0 0.0
        %1231 = vmatpush1.msra.mxu0 0.0
        %1232 = vmatprep.subr.mxu0 0.0
        %1233 = vmatpush1.msra.mxu0 0.0
        %1234 = vmatprep.subr.mxu0 0.0
        %1235 = vmatpush1.msra.mxu0 0.0
        %1236 = vmatprep.subr.mxu0 0.0
        %1237 = vmatpush1.msra.mxu0 0.0
        %1238 = vmatprep.subr.mxu0 0.0
        %1239 = vmatpush1.msra.mxu0 0.0
        %1240 = vmatprep.subr.mxu0 0.0
        %1241 = vmatpush1.msra.mxu0 0.0
        %1242 = vmatprep.subr.mxu0 0.0
        %1243 = vmatpush1.msra.mxu0 0.0
        %1244 = vmatprep.subr.mxu0 0.0
        %1245 = vmatpush1.msra.mxu0 0.0
        %1246 = vmatprep.subr.mxu0 0.0
        %1247 = vmatpush1.msra.mxu0 0.0
        %1248 = vmatprep.subr.mxu0 0.0
        %1249 = vmatpush1.msra.mxu0 0.0
        %1250 = vmatprep.subr.mxu0 0.0
        %1251 = vmatpush1.msra.mxu0 0.0
        %1252 = vmatprep.subr.mxu0 %v1222
        %1253 = vmatpush1.msra.mxu0 %v1221
        %1254 = vmatprep.subr.mxu0 %v1218
        %1255 = vmatpush1.msra.mxu0 %v1217
        %1256 = vmatprep.subr.mxu0 %v1214
        %1257 = vmatpush1.msra.mxu0 %v1213
        %1258 = vmatprep.subr.mxu0 %v1210
        %1259 = vmatpush1.msra.mxu0 %v1209
        %1260 = vmatprep.subr.mxu0 0.0
        %1261 = vmatpush2.msra.mxu0 0.0
        %1262 = vmatprep.subr.mxu0 0.0
        %1263 = vmatpush2.msra.mxu0 0.0
        %1264 = vmatprep.subr.mxu0 0.0
        %1265 = vmatpush2.msra.mxu0 0.0
        %1266 = vmatprep.subr.mxu0 0.0
        %1267 = vmatpush2.msra.mxu0 0.0
        %1268 = vmatprep.subr.mxu0 0.0
        %1269 = vmatpush2.msra.mxu0 0.0
        %1270 = vmatprep.subr.mxu0 0.0
        %1271 = vmatpush2.msra.mxu0 0.0
        %1272 = vmatprep.subr.mxu0 0.0
        %1273 = vmatpush2.msra.mxu0 0.0
        %1274 = vmatprep.subr.mxu0 0.0
        %1275 = vmatpush2.msra.mxu0 0.0
        %1276 = vmatprep.subr.mxu0 0.0
        %1277 = vmatpush2.msra.mxu0 0.0
        %1278 = vmatprep.subr.mxu0 0.0
        %1279 = vmatpush2.msra.mxu0 0.0
        %1280 = vmatprep.subr.mxu0 0.0
        %1281 = vmatpush2.msra.mxu0 0.0
        %1282 = vmatprep.subr.mxu0 0.0
        %1283 = vmatpush2.msra.mxu0 0.0
        %1284 = vmatprep.subr.mxu0 0.0
        %1285 = vmatpush2.msra.mxu0 0.0
        %1286 = vmatprep.subr.mxu0 0.0
        %1287 = vmatpush2.msra.mxu0 0.0
        %1288 = vmatprep.subr.mxu0 0.0
        %1289 = vmatpush2.msra.mxu0 0.0
        %1290 = vmatprep.subr.mxu0 0.0
        %1291 = vmatpush2.msra.mxu0 0.0
        %1292 = vmatprep.mubr.f32.mxu0 0.0
        %1293 = vmatmul.mubr.f32.gmra.mxu0 %v1226
        %v1294 = vpop.f32.mrf.mxu0
        %v1295 = vadd.f32 0.0, %v1294
        %v1296 = vpop.f32.mrf.mxu0
        %v1297 = vadd.f32 0.0, %v1296
        %1298 = vdwg.mxu0
        %1299 = vmatprep.subr.mxu0 0.0
        %1300 = vmatpush1.msra.mxu0 0.0
        %1301 = vmatprep.subr.mxu0 0.0
        %1302 = vmatpush1.msra.mxu0 0.0
        %1303 = vmatprep.subr.mxu0 0.0
        %1304 = vmatpush1.msra.mxu0 0.0
        %1305 = vmatprep.subr.mxu0 0.0
        %1306 = vmatpush1.msra.mxu0 0.0
        %1307 = vmatprep.subr.mxu0 0.0
        %1308 = vmatpush1.msra.mxu0 0.0
        %1309 = vmatprep.subr.mxu0 0.0
        %1310 = vmatpush1.msra.mxu0 0.0
        %1311 = vmatprep.subr.mxu0 0.0
        %1312 = vmatpush1.msra.mxu0 0.0
        %1313 = vmatprep.subr.mxu0 0.0
        %1314 = vmatpush1.msra.mxu0 0.0
        %1315 = vmatprep.subr.mxu0 0.0
        %1316 = vmatpush1.msra.mxu0 0.0
        %1317 = vmatprep.subr.mxu0 0.0
        %1318 = vmatpush1.msra.mxu0 0.0
        %1319 = vmatprep.subr.mxu0 0.0
        %1320 = vmatpush1.msra.mxu0 0.0
        %1321 = vmatprep.subr.mxu0 0.0
        %1322 = vmatpush1.msra.mxu0 0.0
        %1323 = vmatprep.subr.mxu0 %v1224
        %1324 = vmatpush1.msra.mxu0 %v1223
        %1325 = vmatprep.subr.mxu0 %v1220
        %1326 = vmatpush1.msra.mxu0 %v1219
        %1327 = vmatprep.subr.mxu0 %v1216
        %1328 = vmatpush1.msra.mxu0 %v1215
        %1329 = vmatprep.subr.mxu0 %v1212
        %1330 = vmatpush1.msra.mxu0 %v1211
        %1331 = vmatprep.subr.mxu0 0.0
        %1332 = vmatpush2.msra.mxu0 0.0
        %1333 = vmatprep.subr.mxu0 0.0
        %1334 = vmatpush2.msra.mxu0 0.0
        %1335 = vmatprep.subr.mxu0 0.0
        %1336 = vmatpush2.msra.mxu0 0.0
        %1337 = vmatprep.subr.mxu0 0.0
        %1338 = vmatpush2.msra.mxu0 0.0
        %1339 = vmatprep.subr.mxu0 0.0
        %1340 = vmatpush2.msra.mxu0 0.0
        %1341 = vmatprep.subr.mxu0 0.0
        %1342 = vmatpush2.msra.mxu0 0.0
        %1343 = vmatprep.subr.mxu0 0.0
        %1344 = vmatpush2.msra.mxu0 0.0
        %1345 = vmatprep.subr.mxu0 0.0
        %1346 = vmatpush2.msra.mxu0 0.0
        %1347 = vmatprep.subr.mxu0 0.0
        %1348 = vmatpush2.msra.mxu0 0.0
        %1349 = vmatprep.subr.mxu0 0.0
        %1350 = vmatpush2.msra.mxu0 0.0
        %1351 = vmatprep.subr.mxu0 0.0
        %1352 = vmatpush2.msra.mxu0 0.0
        %1353 = vmatprep.subr.mxu0 0.0
        %1354 = vmatpush2.msra.mxu0 0.0
        %1355 = vmatprep.subr.mxu0 0.0
        %1356 = vmatpush2.msra.mxu0 0.0
        %1357 = vmatprep.subr.mxu0 0.0
        %1358 = vmatpush2.msra.mxu0 0.0
        %1359 = vmatprep.subr.mxu0 0.0
        %1360 = vmatpush2.msra.mxu0 0.0
        %1361 = vmatprep.subr.mxu0 0.0
        %1362 = vmatpush2.msra.mxu0 0.0
        %1363 = vmatprep.mubr.f32.mxu0 0.0
        %1364 = vmatmul.mubr.f32.gmra.mxu0 %v1226
        %v1365 = vpop.f32.mrf.mxu0
        %v1366 = vadd.f32 0.0, %v1365
        %v1367 = vpop.f32.mrf.mxu0
        %v1368 = vadd.f32 0.0, %v1367
        %1369 = vdwg.mxu0
        %v1374 = vcombine.low %v1295, %v1297
        %v1375 = vcombine.low %v1366, %v1368
        %v1377 = vunpack.c.l.s4 1966171168
        %v1378 = vunpack.c.0.s8 %v1377
        %v1379 = vlaneseq
        %v1380 = vshrl.u32 %v1379, 7
        %v1381 = vsub.s32 %v1378, %v1380
        %v1382 = vrot.slane %v1374, %v1381
        %v1384 = vunpack.c.l.s4 1966171168
        %v1385 = vunpack.c.0.s8 %v1384
        %v1386 = vlaneseq
        %v1387 = vshrl.u32 %v1386, 7
        %v1388 = vsub.s32 %v1385, %v1387
        %v1389 = vrot.slane %v1375, %v1388
        %v1390 = vcombine.low %v1382, %v1389
        %v1392 = vunpack.c.l.s4 1966171168
        %v1393 = vunpack.c.0.s8 %v1392
        %v1394 = vlaneseq
        %v1395 = vshrl.u32 %v1394, 7
        %v1396 = vsub.s32 %v1393, %v1395
        %v1397 = vrot.slane %v1390, %v1396
        %v1399 = vadd.f32 %v1208, %v1397
        %v1400 = vtanh.pop %v1399
        %v1401 = vmul.f32 %v1400, 0.5
        %v1402 = vadd.f32 %v1401, 0.5
        %v1404 = vrot.slane %v1400, 1
        %v1406 = vmul.f32 %v1404, 0.5
        %v1407 = vadd.f32 %v1406, 0.5
        %v1408 = vrot.slane %v1400, 3
        %v1410 = vmul.f32 %v1408, 0.5
        %v1411 = vadd.f32 %v1410, 0.5
        %v1412 = vmul.f32 %v1407, %v991
        %v1413 = vrot.slane %v1400, 2
        %v1415 = vmul.f32 %v1402, %v1413
        %v1416 = vadd.f32 %v1412, %v1415
        %v1417 = vtanh.pop %v1416
        %v1418 = vmul.f32 %v1411, %v1417
        %s1419 = scalar_lea.vmem [#allocation5], 6
        %v1420 = vld [vmem:[%s1419] ss:$8 sm:$0xf]
        %v1421 = vld [vmem:[%s996] sm:$0xff]
        %v1422 = vld [vmem:[%s996 + $0x8] sm:$0xff]
        %v1423 = vld [vmem:[%s996 + $0x10] sm:$0xff]
        %v1424 = vld [vmem:[%s996 + $0x18] sm:$0xff]
        %v1425 = vld [vmem:[%s996 + $0x20] sm:$0xff]
        %v1426 = vld [vmem:[%s996 + $0x28] sm:$0xff]
        %v1427 = vld [vmem:[%s996 + $0x30] sm:$0xff]
        %v1428 = vld [vmem:[%s996 + $0x38] sm:$0xff]
        %v1429 = vld [vmem:[%s996 + $0x40] sm:$0xff]
        %v1430 = vld [vmem:[%s996 + $0x48] sm:$0xff]
        %v1431 = vld [vmem:[%s996 + $0x50] sm:$0xff]
        %v1432 = vld [vmem:[%s996 + $0x58] sm:$0xff]
        %v1433 = vld [vmem:[%s996 + $0x60] sm:$0xff]
        %v1434 = vld [vmem:[%s996 + $0x68] sm:$0xff]
        %v1435 = vld [vmem:[%s996 + $0x70] sm:$0xff]
        %v1436 = vld [vmem:[%s996 + $0x78] sm:$0xff]
        %v1438 = vsel %vm799, %v1203, 0
        %1440 = vmatprep.subr.mxu0 0.0
        %1441 = vmatpush1.msra.mxu0 0.0
        %1442 = vmatprep.subr.mxu0 0.0
        %1443 = vmatpush1.msra.mxu0 0.0
        %1444 = vmatprep.subr.mxu0 0.0
        %1445 = vmatpush1.msra.mxu0 0.0
        %1446 = vmatprep.subr.mxu0 0.0
        %1447 = vmatpush1.msra.mxu0 0.0
        %1448 = vmatprep.subr.mxu0 0.0
        %1449 = vmatpush1.msra.mxu0 0.0
        %1450 = vmatprep.subr.mxu0 0.0
        %1451 = vmatpush1.msra.mxu0 0.0
        %1452 = vmatprep.subr.mxu0 0.0
        %1453 = vmatpush1.msra.mxu0 0.0
        %1454 = vmatprep.subr.mxu0 0.0
        %1455 = vmatpush1.msra.mxu0 0.0
        %1456 = vmatprep.subr.mxu0 0.0
        %1457 = vmatpush1.msra.mxu0 0.0
        %1458 = vmatprep.subr.mxu0 0.0
        %1459 = vmatpush1.msra.mxu0 0.0
        %1460 = vmatprep.subr.mxu0 0.0
        %1461 = vmatpush1.msra.mxu0 0.0
        %1462 = vmatprep.subr.mxu0 0.0
        %1463 = vmatpush1.msra.mxu0 0.0
        %1464 = vmatprep.subr.mxu0 %v1434
        %1465 = vmatpush1.msra.mxu0 %v1433
        %1466 = vmatprep.subr.mxu0 %v1430
        %1467 = vmatpush1.msra.mxu0 %v1429
        %1468 = vmatprep.subr.mxu0 %v1426
        %1469 = vmatpush1.msra.mxu0 %v1425
        %1470 = vmatprep.subr.mxu0 %v1422
        %1471 = vmatpush1.msra.mxu0 %v1421
        %1472 = vmatprep.subr.mxu0 0.0
        %1473 = vmatpush2.msra.mxu0 0.0
        %1474 = vmatprep.subr.mxu0 0.0
        %1475 = vmatpush2.msra.mxu0 0.0
        %1476 = vmatprep.subr.mxu0 0.0
        %1477 = vmatpush2.msra.mxu0 0.0
        %1478 = vmatprep.subr.mxu0 0.0
        %1479 = vmatpush2.msra.mxu0 0.0
        %1480 = vmatprep.subr.mxu0 0.0
        %1481 = vmatpush2.msra.mxu0 0.0
        %1482 = vmatprep.subr.mxu0 0.0
        %1483 = vmatpush2.msra.mxu0 0.0
        %1484 = vmatprep.subr.mxu0 0.0
        %1485 = vmatpush2.msra.mxu0 0.0
        %1486 = vmatprep.subr.mxu0 0.0
        %1487 = vmatpush2.msra.mxu0 0.0
        %1488 = vmatprep.subr.mxu0 0.0
        %1489 = vmatpush2.msra.mxu0 0.0
        %1490 = vmatprep.subr.mxu0 0.0
        %1491 = vmatpush2.msra.mxu0 0.0
        %1492 = vmatprep.subr.mxu0 0.0
        %1493 = vmatpush2.msra.mxu0 0.0
        %1494 = vmatprep.subr.mxu0 0.0
        %1495 = vmatpush2.msra.mxu0 0.0
        %1496 = vmatprep.subr.mxu0 0.0
        %1497 = vmatpush2.msra.mxu0 0.0
        %1498 = vmatprep.subr.mxu0 0.0
        %1499 = vmatpush2.msra.mxu0 0.0
        %1500 = vmatprep.subr.mxu0 0.0
        %1501 = vmatpush2.msra.mxu0 0.0
        %1502 = vmatprep.subr.mxu0 0.0
        %1503 = vmatpush2.msra.mxu0 0.0
        %1504 = vmatprep.mubr.f32.mxu0 0.0
        %1505 = vmatmul.mubr.f32.gmra.mxu0 %v1438
        %v1506 = vpop.f32.mrf.mxu0
        %v1507 = vadd.f32 0.0, %v1506
        %v1508 = vpop.f32.mrf.mxu0
        %v1509 = vadd.f32 0.0, %v1508
        %1510 = vdwg.mxu0
        %1511 = vmatprep.subr.mxu0 0.0
        %1512 = vmatpush1.msra.mxu0 0.0
        %1513 = vmatprep.subr.mxu0 0.0
        %1514 = vmatpush1.msra.mxu0 0.0
        %1515 = vmatprep.subr.mxu0 0.0
        %1516 = vmatpush1.msra.mxu0 0.0
        %1517 = vmatprep.subr.mxu0 0.0
        %1518 = vmatpush1.msra.mxu0 0.0
        %1519 = vmatprep.subr.mxu0 0.0
        %1520 = vmatpush1.msra.mxu0 0.0
        %1521 = vmatprep.subr.mxu0 0.0
        %1522 = vmatpush1.msra.mxu0 0.0
        %1523 = vmatprep.subr.mxu0 0.0
        %1524 = vmatpush1.msra.mxu0 0.0
        %1525 = vmatprep.subr.mxu0 0.0
        %1526 = vmatpush1.msra.mxu0 0.0
        %1527 = vmatprep.subr.mxu0 0.0
        %1528 = vmatpush1.msra.mxu0 0.0
        %1529 = vmatprep.subr.mxu0 0.0
        %1530 = vmatpush1.msra.mxu0 0.0
        %1531 = vmatprep.subr.mxu0 0.0
        %1532 = vmatpush1.msra.mxu0 0.0
        %1533 = vmatprep.subr.mxu0 0.0
        %1534 = vmatpush1.msra.mxu0 0.0
        %1535 = vmatprep.subr.mxu0 %v1436
        %1536 = vmatpush1.msra.mxu0 %v1435
        %1537 = vmatprep.subr.mxu0 %v1432
        %1538 = vmatpush1.msra.mxu0 %v1431
        %1539 = vmatprep.subr.mxu0 %v1428
        %1540 = vmatpush1.msra.mxu0 %v1427
        %1541 = vmatprep.subr.mxu0 %v1424
        %1542 = vmatpush1.msra.mxu0 %v1423
        %1543 = vmatprep.subr.mxu0 0.0
        %1544 = vmatpush2.msra.mxu0 0.0
        %1545 = vmatprep.subr.mxu0 0.0
        %1546 = vmatpush2.msra.mxu0 0.0
        %1547 = vmatprep.subr.mxu0 0.0
        %1548 = vmatpush2.msra.mxu0 0.0
        %1549 = vmatprep.subr.mxu0 0.0
        %1550 = vmatpush2.msra.mxu0 0.0
        %1551 = vmatprep.subr.mxu0 0.0
        %1552 = vmatpush2.msra.mxu0 0.0
        %1553 = vmatprep.subr.mxu0 0.0
        %1554 = vmatpush2.msra.mxu0 0.0
        %1555 = vmatprep.subr.mxu0 0.0
        %1556 = vmatpush2.msra.mxu0 0.0
        %1557 = vmatprep.subr.mxu0 0.0
        %1558 = vmatpush2.msra.mxu0 0.0
        %1559 = vmatprep.subr.mxu0 0.0
        %1560 = vmatpush2.msra.mxu0 0.0
        %1561 = vmatprep.subr.mxu0 0.0
        %1562 = vmatpush2.msra.mxu0 0.0
        %1563 = vmatprep.subr.mxu0 0.0
        %1564 = vmatpush2.msra.mxu0 0.0
        %1565 = vmatprep.subr.mxu0 0.0
        %1566 = vmatpush2.msra.mxu0 0.0
        %1567 = vmatprep.subr.mxu0 0.0
        %1568 = vmatpush2.msra.mxu0 0.0
        %1569 = vmatprep.subr.mxu0 0.0
        %1570 = vmatpush2.msra.mxu0 0.0
        %1571 = vmatprep.subr.mxu0 0.0
        %1572 = vmatpush2.msra.mxu0 0.0
        %1573 = vmatprep.subr.mxu0 0.0
        %1574 = vmatpush2.msra.mxu0 0.0
        %1575 = vmatprep.mubr.f32.mxu0 0.0
        %1576 = vmatmul.mubr.f32.gmra.mxu0 %v1438
        %v1577 = vpop.f32.mrf.mxu0
        %v1578 = vadd.f32 0.0, %v1577
        %v1579 = vpop.f32.mrf.mxu0
        %v1580 = vadd.f32 0.0, %v1579
        %1581 = vdwg.mxu0
        %v1586 = vcombine.low %v1507, %v1509
        %v1587 = vcombine.low %v1578, %v1580
        %v1589 = vunpack.c.l.s4 1966171168
        %v1590 = vunpack.c.0.s8 %v1589
        %v1591 = vlaneseq
        %v1592 = vshrl.u32 %v1591, 7
        %v1593 = vsub.s32 %v1590, %v1592
        %v1594 = vrot.slane %v1586, %v1593
        %v1596 = vunpack.c.l.s4 1966171168
        %v1597 = vunpack.c.0.s8 %v1596
        %v1598 = vlaneseq
        %v1599 = vshrl.u32 %v1598, 7
        %v1600 = vsub.s32 %v1597, %v1599
        %v1601 = vrot.slane %v1587, %v1600
        %v1602 = vcombine.low %v1594, %v1601
        %v1604 = vunpack.c.l.s4 1966171168
        %v1605 = vunpack.c.0.s8 %v1604
        %v1606 = vlaneseq
        %v1607 = vshrl.u32 %v1606, 7
        %v1608 = vsub.s32 %v1605, %v1607
        %v1609 = vrot.slane %v1602, %v1608
        %v1611 = vadd.f32 %v1420, %v1609
        %v1612 = vtanh.pop %v1611
        %v1613 = vmul.f32 %v1612, 0.5
        %v1614 = vadd.f32 %v1613, 0.5
        %v1616 = vrot.slane %v1612, 1
        %v1618 = vmul.f32 %v1616, 0.5
        %v1619 = vadd.f32 %v1618, 0.5
        %v1620 = vrot.slane %v1612, 3
        %v1622 = vmul.f32 %v1620, 0.5
        %v1623 = vadd.f32 %v1622, 0.5
        %v1624 = vmul.f32 %v1619, %v1201
        %v1625 = vrot.slane %v1612, 2
        %v1627 = vmul.f32 %v1614, %v1625
        %v1628 = vadd.f32 %v1624, %v1627
        %v1629 = vtanh.pop %v1628
        %v1630 = vmul.f32 %v1623, %v1629
        %1631 = vst.msk [vmem:[#allocation2 + $0x1] sm:$0x1] %vm1204, %v1418
        %1632 = vst.msk [vmem:[#allocation3 + $0x6] sm:$0x1] %vm1204, %v1630
        %s1633 = scalar_lea.vmem [#allocation4], 2
        %v1634 = vld [vmem:[%s1633] ss:$8 sm:$0xf]
        %v1635 = vld [vmem:[%s318] sm:$0xff]
        %v1636 = vld [vmem:[%s318 + $0x8] sm:$0xff]
        %v1637 = vld [vmem:[%s318 + $0x10] sm:$0xff]
        %v1638 = vld [vmem:[%s318 + $0x18] sm:$0xff]
        %v1639 = vld [vmem:[%s318 + $0x20] sm:$0xff]
        %v1640 = vld [vmem:[%s318 + $0x28] sm:$0xff]
        %v1641 = vld [vmem:[%s318 + $0x30] sm:$0xff]
        %v1642 = vld [vmem:[%s318 + $0x38] sm:$0xff]
        %v1643 = vld [vmem:[%s318 + $0x40] sm:$0xff]
        %v1644 = vld [vmem:[%s318 + $0x48] sm:$0xff]
        %v1645 = vld [vmem:[%s318 + $0x50] sm:$0xff]
        %v1646 = vld [vmem:[%s318 + $0x58] sm:$0xff]
        %v1647 = vld [vmem:[%s318 + $0x60] sm:$0xff]
        %v1648 = vld [vmem:[%s318 + $0x68] sm:$0xff]
        %v1649 = vld [vmem:[%s318 + $0x70] sm:$0xff]
        %v1650 = vld [vmem:[%s318 + $0x78] sm:$0xff]
        %v1652 = vsel %vm799, %v1418, 0
        %1654 = vmatprep.subr.mxu0 0.0
        %1655 = vmatpush1.msra.mxu0 0.0
        %1656 = vmatprep.subr.mxu0 0.0
        %1657 = vmatpush1.msra.mxu0 0.0
        %1658 = vmatprep.subr.mxu0 0.0
        %1659 = vmatpush1.msra.mxu0 0.0
        %1660 = vmatprep.subr.mxu0 0.0
        %1661 = vmatpush1.msra.mxu0 0.0
        %1662 = vmatprep.subr.mxu0 0.0
        %1663 = vmatpush1.msra.mxu0 0.0
        %1664 = vmatprep.subr.mxu0 0.0
        %1665 = vmatpush1.msra.mxu0 0.0
        %1666 = vmatprep.subr.mxu0 0.0
        %1667 = vmatpush1.msra.mxu0 0.0
        %1668 = vmatprep.subr.mxu0 0.0
        %1669 = vmatpush1.msra.mxu0 0.0
        %1670 = vmatprep.subr.mxu0 0.0
        %1671 = vmatpush1.msra.mxu0 0.0
        %1672 = vmatprep.subr.mxu0 0.0
        %1673 = vmatpush1.msra.mxu0 0.0
        %1674 = vmatprep.subr.mxu0 0.0
        %1675 = vmatpush1.msra.mxu0 0.0
        %1676 = vmatprep.subr.mxu0 0.0
        %1677 = vmatpush1.msra.mxu0 0.0
        %1678 = vmatprep.subr.mxu0 %v1648
        %1679 = vmatpush1.msra.mxu0 %v1647
        %1680 = vmatprep.subr.mxu0 %v1644
        %1681 = vmatpush1.msra.mxu0 %v1643
        %1682 = vmatprep.subr.mxu0 %v1640
        %1683 = vmatpush1.msra.mxu0 %v1639
        %1684 = vmatprep.subr.mxu0 %v1636
        %1685 = vmatpush1.msra.mxu0 %v1635
        %1686 = vmatprep.subr.mxu0 0.0
        %1687 = vmatpush2.msra.mxu0 0.0
        %1688 = vmatprep.subr.mxu0 0.0
        %1689 = vmatpush2.msra.mxu0 0.0
        %1690 = vmatprep.subr.mxu0 0.0
        %1691 = vmatpush2.msra.mxu0 0.0
        %1692 = vmatprep.subr.mxu0 0.0
        %1693 = vmatpush2.msra.mxu0 0.0
        %1694 = vmatprep.subr.mxu0 0.0
        %1695 = vmatpush2.msra.mxu0 0.0
        %1696 = vmatprep.subr.mxu0 0.0
        %1697 = vmatpush2.msra.mxu0 0.0
        %1698 = vmatprep.subr.mxu0 0.0
        %1699 = vmatpush2.msra.mxu0 0.0
        %1700 = vmatprep.subr.mxu0 0.0
        %1701 = vmatpush2.msra.mxu0 0.0
        %1702 = vmatprep.subr.mxu0 0.0
        %1703 = vmatpush2.msra.mxu0 0.0
        %1704 = vmatprep.subr.mxu0 0.0
        %1705 = vmatpush2.msra.mxu0 0.0
        %1706 = vmatprep.subr.mxu0 0.0
        %1707 = vmatpush2.msra.mxu0 0.0
        %1708 = vmatprep.subr.mxu0 0.0
        %1709 = vmatpush2.msra.mxu0 0.0
        %1710 = vmatprep.subr.mxu0 0.0
        %1711 = vmatpush2.msra.mxu0 0.0
        %1712 = vmatprep.subr.mxu0 0.0
        %1713 = vmatpush2.msra.mxu0 0.0
        %1714 = vmatprep.subr.mxu0 0.0
        %1715 = vmatpush2.msra.mxu0 0.0
        %1716 = vmatprep.subr.mxu0 0.0
        %1717 = vmatpush2.msra.mxu0 0.0
        %1718 = vmatprep.mubr.f32.mxu0 0.0
        %1719 = vmatmul.mubr.f32.gmra.mxu0 %v1652
        %v1720 = vpop.f32.mrf.mxu0
        %v1721 = vadd.f32 0.0, %v1720
        %v1722 = vpop.f32.mrf.mxu0
        %v1723 = vadd.f32 0.0, %v1722
        %1724 = vdwg.mxu0
        %1725 = vmatprep.subr.mxu0 0.0
        %1726 = vmatpush1.msra.mxu0 0.0
        %1727 = vmatprep.subr.mxu0 0.0
        %1728 = vmatpush1.msra.mxu0 0.0
        %1729 = vmatprep.subr.mxu0 0.0
        %1730 = vmatpush1.msra.mxu0 0.0
        %1731 = vmatprep.subr.mxu0 0.0
        %1732 = vmatpush1.msra.mxu0 0.0
        %1733 = vmatprep.subr.mxu0 0.0
        %1734 = vmatpush1.msra.mxu0 0.0
        %1735 = vmatprep.subr.mxu0 0.0
        %1736 = vmatpush1.msra.mxu0 0.0
        %1737 = vmatprep.subr.mxu0 0.0
        %1738 = vmatpush1.msra.mxu0 0.0
        %1739 = vmatprep.subr.mxu0 0.0
        %1740 = vmatpush1.msra.mxu0 0.0
        %1741 = vmatprep.subr.mxu0 0.0
        %1742 = vmatpush1.msra.mxu0 0.0
        %1743 = vmatprep.subr.mxu0 0.0
        %1744 = vmatpush1.msra.mxu0 0.0
        %1745 = vmatprep.subr.mxu0 0.0
        %1746 = vmatpush1.msra.mxu0 0.0
        %1747 = vmatprep.subr.mxu0 0.0
        %1748 = vmatpush1.msra.mxu0 0.0
        %1749 = vmatprep.subr.mxu0 %v1650
        %1750 = vmatpush1.msra.mxu0 %v1649
        %1751 = vmatprep.subr.mxu0 %v1646
        %1752 = vmatpush1.msra.mxu0 %v1645
        %1753 = vmatprep.subr.mxu0 %v1642
        %1754 = vmatpush1.msra.mxu0 %v1641
        %1755 = vmatprep.subr.mxu0 %v1638
        %1756 = vmatpush1.msra.mxu0 %v1637
        %1757 = vmatprep.subr.mxu0 0.0
        %1758 = vmatpush2.msra.mxu0 0.0
        %1759 = vmatprep.subr.mxu0 0.0
        %1760 = vmatpush2.msra.mxu0 0.0
        %1761 = vmatprep.subr.mxu0 0.0
        %1762 = vmatpush2.msra.mxu0 0.0
        %1763 = vmatprep.subr.mxu0 0.0
        %1764 = vmatpush2.msra.mxu0 0.0
        %1765 = vmatprep.subr.mxu0 0.0
        %1766 = vmatpush2.msra.mxu0 0.0
        %1767 = vmatprep.subr.mxu0 0.0
        %1768 = vmatpush2.msra.mxu0 0.0
        %1769 = vmatprep.subr.mxu0 0.0
        %1770 = vmatpush2.msra.mxu0 0.0
        %1771 = vmatprep.subr.mxu0 0.0
        %1772 = vmatpush2.msra.mxu0 0.0
        %1773 = vmatprep.subr.mxu0 0.0
        %1774 = vmatpush2.msra.mxu0 0.0
        %1775 = vmatprep.subr.mxu0 0.0
        %1776 = vmatpush2.msra.mxu0 0.0
        %1777 = vmatprep.subr.mxu0 0.0
        %1778 = vmatpush2.msra.mxu0 0.0
        %1779 = vmatprep.subr.mxu0 0.0
        %1780 = vmatpush2.msra.mxu0 0.0
        %1781 = vmatprep.subr.mxu0 0.0
        %1782 = vmatpush2.msra.mxu0 0.0
        %1783 = vmatprep.subr.mxu0 0.0
        %1784 = vmatpush2.msra.mxu0 0.0
        %1785 = vmatprep.subr.mxu0 0.0
        %1786 = vmatpush2.msra.mxu0 0.0
        %1787 = vmatprep.subr.mxu0 0.0
        %1788 = vmatpush2.msra.mxu0 0.0
        %1789 = vmatprep.mubr.f32.mxu0 0.0
        %1790 = vmatmul.mubr.f32.gmra.mxu0 %v1652
        %v1791 = vpop.f32.mrf.mxu0
        %v1792 = vadd.f32 0.0, %v1791
        %v1793 = vpop.f32.mrf.mxu0
        %v1794 = vadd.f32 0.0, %v1793
        %1795 = vdwg.mxu0
        %v1800 = vcombine.low %v1721, %v1723
        %v1801 = vcombine.low %v1792, %v1794
        %v1803 = vunpack.c.l.s4 1966171168
        %v1804 = vunpack.c.0.s8 %v1803
        %v1805 = vlaneseq
        %v1806 = vshrl.u32 %v1805, 7
        %v1807 = vsub.s32 %v1804, %v1806
        %v1808 = vrot.slane %v1800, %v1807
        %v1810 = vunpack.c.l.s4 1966171168
        %v1811 = vunpack.c.0.s8 %v1810
        %v1812 = vlaneseq
        %v1813 = vshrl.u32 %v1812, 7
        %v1814 = vsub.s32 %v1811, %v1813
        %v1815 = vrot.slane %v1801, %v1814
        %v1816 = vcombine.low %v1808, %v1815
        %v1818 = vunpack.c.l.s4 1966171168
        %v1819 = vunpack.c.0.s8 %v1818
        %v1820 = vlaneseq
        %v1821 = vshrl.u32 %v1820, 7
        %v1822 = vsub.s32 %v1819, %v1821
        %v1823 = vrot.slane %v1816, %v1822
        %v1825 = vadd.f32 %v1634, %v1823
        %v1826 = vtanh.pop %v1825
        %v1827 = vmul.f32 %v1826, 0.5
        %v1828 = vadd.f32 %v1827, 0.5
        %v1830 = vrot.slane %v1826, 1
        %v1832 = vmul.f32 %v1830, 0.5
        %v1833 = vadd.f32 %v1832, 0.5
        %v1834 = vrot.slane %v1826, 3
        %v1836 = vmul.f32 %v1834, 0.5
        %v1837 = vadd.f32 %v1836, 0.5
        %v1838 = vmul.f32 %v1833, %v1416
        %v1839 = vrot.slane %v1826, 2
        %v1841 = vmul.f32 %v1828, %v1839
        %v1842 = vadd.f32 %v1838, %v1841
        %v1843 = vtanh.pop %v1842
        %v1844 = vmul.f32 %v1837, %v1843
        %s1845 = scalar_lea.vmem [#allocation5], 5
        %v1846 = vld [vmem:[%s1845] ss:$8 sm:$0xf]
        %v1847 = vld [vmem:[%s996] sm:$0xff]
        %v1848 = vld [vmem:[%s996 + $0x8] sm:$0xff]
        %v1849 = vld [vmem:[%s996 + $0x10] sm:$0xff]
        %v1850 = vld [vmem:[%s996 + $0x18] sm:$0xff]
        %v1851 = vld [vmem:[%s996 + $0x20] sm:$0xff]
        %v1852 = vld [vmem:[%s996 + $0x28] sm:$0xff]
        %v1853 = vld [vmem:[%s996 + $0x30] sm:$0xff]
        %v1854 = vld [vmem:[%s996 + $0x38] sm:$0xff]
        %v1855 = vld [vmem:[%s996 + $0x40] sm:$0xff]
        %v1856 = vld [vmem:[%s996 + $0x48] sm:$0xff]
        %v1857 = vld [vmem:[%s996 + $0x50] sm:$0xff]
        %v1858 = vld [vmem:[%s996 + $0x58] sm:$0xff]
        %v1859 = vld [vmem:[%s996 + $0x60] sm:$0xff]
        %v1860 = vld [vmem:[%s996 + $0x68] sm:$0xff]
        %v1861 = vld [vmem:[%s996 + $0x70] sm:$0xff]
        %v1862 = vld [vmem:[%s996 + $0x78] sm:$0xff]
        %v1864 = vsel %vm799, %v1630, 0
        %1866 = vmatprep.subr.mxu0 0.0
        %1867 = vmatpush1.msra.mxu0 0.0
        %1868 = vmatprep.subr.mxu0 0.0
        %1869 = vmatpush1.msra.mxu0 0.0
        %1870 = vmatprep.subr.mxu0 0.0
        %1871 = vmatpush1.msra.mxu0 0.0
        %1872 = vmatprep.subr.mxu0 0.0
        %1873 = vmatpush1.msra.mxu0 0.0
        %1874 = vmatprep.subr.mxu0 0.0
        %1875 = vmatpush1.msra.mxu0 0.0
        %1876 = vmatprep.subr.mxu0 0.0
        %1877 = vmatpush1.msra.mxu0 0.0
        %1878 = vmatprep.subr.mxu0 0.0
        %1879 = vmatpush1.msra.mxu0 0.0
        %1880 = vmatprep.subr.mxu0 0.0
        %1881 = vmatpush1.msra.mxu0 0.0
        %1882 = vmatprep.subr.mxu0 0.0
        %1883 = vmatpush1.msra.mxu0 0.0
        %1884 = vmatprep.subr.mxu0 0.0
        %1885 = vmatpush1.msra.mxu0 0.0
        %1886 = vmatprep.subr.mxu0 0.0
        %1887 = vmatpush1.msra.mxu0 0.0
        %1888 = vmatprep.subr.mxu0 0.0
        %1889 = vmatpush1.msra.mxu0 0.0
        %1890 = vmatprep.subr.mxu0 %v1860
        %1891 = vmatpush1.msra.mxu0 %v1859
        %1892 = vmatprep.subr.mxu0 %v1856
        %1893 = vmatpush1.msra.mxu0 %v1855
        %1894 = vmatprep.subr.mxu0 %v1852
        %1895 = vmatpush1.msra.mxu0 %v1851
        %1896 = vmatprep.subr.mxu0 %v1848
        %1897 = vmatpush1.msra.mxu0 %v1847
        %1898 = vmatprep.subr.mxu0 0.0
        %1899 = vmatpush2.msra.mxu0 0.0
        %1900 = vmatprep.subr.mxu0 0.0
        %1901 = vmatpush2.msra.mxu0 0.0
        %1902 = vmatprep.subr.mxu0 0.0
        %1903 = vmatpush2.msra.mxu0 0.0
        %1904 = vmatprep.subr.mxu0 0.0
        %1905 = vmatpush2.msra.mxu0 0.0
        %1906 = vmatprep.subr.mxu0 0.0
        %1907 = vmatpush2.msra.mxu0 0.0
        %1908 = vmatprep.subr.mxu0 0.0
        %1909 = vmatpush2.msra.mxu0 0.0
        %1910 = vmatprep.subr.mxu0 0.0
        %1911 = vmatpush2.msra.mxu0 0.0
        %1912 = vmatprep.subr.mxu0 0.0
        %1913 = vmatpush2.msra.mxu0 0.0
        %1914 = vmatprep.subr.mxu0 0.0
        %1915 = vmatpush2.msra.mxu0 0.0
        %1916 = vmatprep.subr.mxu0 0.0
        %1917 = vmatpush2.msra.mxu0 0.0
        %1918 = vmatprep.subr.mxu0 0.0
        %1919 = vmatpush2.msra.mxu0 0.0
        %1920 = vmatprep.subr.mxu0 0.0
        %1921 = vmatpush2.msra.mxu0 0.0
        %1922 = vmatprep.subr.mxu0 0.0
        %1923 = vmatpush2.msra.mxu0 0.0
        %1924 = vmatprep.subr.mxu0 0.0
        %1925 = vmatpush2.msra.mxu0 0.0
        %1926 = vmatprep.subr.mxu0 0.0
        %1927 = vmatpush2.msra.mxu0 0.0
        %1928 = vmatprep.subr.mxu0 0.0
        %1929 = vmatpush2.msra.mxu0 0.0
        %1930 = vmatprep.mubr.f32.mxu0 0.0
        %1931 = vmatmul.mubr.f32.gmra.mxu0 %v1864
        %v1932 = vpop.f32.mrf.mxu0
        %v1933 = vadd.f32 0.0, %v1932
        %v1934 = vpop.f32.mrf.mxu0
        %v1935 = vadd.f32 0.0, %v1934
        %1936 = vdwg.mxu0
        %1937 = vmatprep.subr.mxu0 0.0
        %1938 = vmatpush1.msra.mxu0 0.0
        %1939 = vmatprep.subr.mxu0 0.0
        %1940 = vmatpush1.msra.mxu0 0.0
        %1941 = vmatprep.subr.mxu0 0.0
        %1942 = vmatpush1.msra.mxu0 0.0
        %1943 = vmatprep.subr.mxu0 0.0
        %1944 = vmatpush1.msra.mxu0 0.0
        %1945 = vmatprep.subr.mxu0 0.0
        %1946 = vmatpush1.msra.mxu0 0.0
        %1947 = vmatprep.subr.mxu0 0.0
        %1948 = vmatpush1.msra.mxu0 0.0
        %1949 = vmatprep.subr.mxu0 0.0
        %1950 = vmatpush1.msra.mxu0 0.0
        %1951 = vmatprep.subr.mxu0 0.0
        %1952 = vmatpush1.msra.mxu0 0.0
        %1953 = vmatprep.subr.mxu0 0.0
        %1954 = vmatpush1.msra.mxu0 0.0
        %1955 = vmatprep.subr.mxu0 0.0
        %1956 = vmatpush1.msra.mxu0 0.0
        %1957 = vmatprep.subr.mxu0 0.0
        %1958 = vmatpush1.msra.mxu0 0.0
        %1959 = vmatprep.subr.mxu0 0.0
        %1960 = vmatpush1.msra.mxu0 0.0
        %1961 = vmatprep.subr.mxu0 %v1862
        %1962 = vmatpush1.msra.mxu0 %v1861
        %1963 = vmatprep.subr.mxu0 %v1858
        %1964 = vmatpush1.msra.mxu0 %v1857
        %1965 = vmatprep.subr.mxu0 %v1854
        %1966 = vmatpush1.msra.mxu0 %v1853
        %1967 = vmatprep.subr.mxu0 %v1850
        %1968 = vmatpush1.msra.mxu0 %v1849
        %1969 = vmatprep.subr.mxu0 0.0
        %1970 = vmatpush2.msra.mxu0 0.0
        %1971 = vmatprep.subr.mxu0 0.0
        %1972 = vmatpush2.msra.mxu0 0.0
        %1973 = vmatprep.subr.mxu0 0.0
        %1974 = vmatpush2.msra.mxu0 0.0
        %1975 = vmatprep.subr.mxu0 0.0
        %1976 = vmatpush2.msra.mxu0 0.0
        %1977 = vmatprep.subr.mxu0 0.0
        %1978 = vmatpush2.msra.mxu0 0.0
        %1979 = vmatprep.subr.mxu0 0.0
        %1980 = vmatpush2.msra.mxu0 0.0
        %1981 = vmatprep.subr.mxu0 0.0
        %1982 = vmatpush2.msra.mxu0 0.0
        %1983 = vmatprep.subr.mxu0 0.0
        %1984 = vmatpush2.msra.mxu0 0.0
        %1985 = vmatprep.subr.mxu0 0.0
        %1986 = vmatpush2.msra.mxu0 0.0
        %1987 = vmatprep.subr.mxu0 0.0
        %1988 = vmatpush2.msra.mxu0 0.0
        %1989 = vmatprep.subr.mxu0 0.0
        %1990 = vmatpush2.msra.mxu0 0.0
        %1991 = vmatprep.subr.mxu0 0.0
        %1992 = vmatpush2.msra.mxu0 0.0
        %1993 = vmatprep.subr.mxu0 0.0
        %1994 = vmatpush2.msra.mxu0 0.0
        %1995 = vmatprep.subr.mxu0 0.0
        %1996 = vmatpush2.msra.mxu0 0.0
        %1997 = vmatprep.subr.mxu0 0.0
        %1998 = vmatpush2.msra.mxu0 0.0
        %1999 = vmatprep.subr.mxu0 0.0
        %2000 = vmatpush2.msra.mxu0 0.0
        %2001 = vmatprep.mubr.f32.mxu0 0.0
        %2002 = vmatmul.mubr.f32.gmra.mxu0 %v1864
        %v2003 = vpop.f32.mrf.mxu0
        %v2004 = vadd.f32 0.0, %v2003
        %v2005 = vpop.f32.mrf.mxu0
        %v2006 = vadd.f32 0.0, %v2005
        %2007 = vdwg.mxu0
        %v2012 = vcombine.low %v1933, %v1935
        %v2013 = vcombine.low %v2004, %v2006
        %v2015 = vunpack.c.l.s4 1966171168
        %v2016 = vunpack.c.0.s8 %v2015
        %v2017 = vlaneseq
        %v2018 = vshrl.u32 %v2017, 7
        %v2019 = vsub.s32 %v2016, %v2018
        %v2020 = vrot.slane %v2012, %v2019
        %v2022 = vunpack.c.l.s4 1966171168
        %v2023 = vunpack.c.0.s8 %v2022
        %v2024 = vlaneseq
        %v2025 = vshrl.u32 %v2024, 7
        %v2026 = vsub.s32 %v2023, %v2025
        %v2027 = vrot.slane %v2013, %v2026
        %v2028 = vcombine.low %v2020, %v2027
        %v2030 = vunpack.c.l.s4 1966171168
        %v2031 = vunpack.c.0.s8 %v2030
        %v2032 = vlaneseq
        %v2033 = vshrl.u32 %v2032, 7
        %v2034 = vsub.s32 %v2031, %v2033
        %v2035 = vrot.slane %v2028, %v2034
        %v2037 = vadd.f32 %v1846, %v2035
        %v2038 = vtanh.pop %v2037
        %v2039 = vmul.f32 %v2038, 0.5
        %v2040 = vadd.f32 %v2039, 0.5
        %v2042 = vrot.slane %v2038, 1
        %v2044 = vmul.f32 %v2042, 0.5
        %v2045 = vadd.f32 %v2044, 0.5
        %v2046 = vrot.slane %v2038, 3
        %v2048 = vmul.f32 %v2046, 0.5
        %v2049 = vadd.f32 %v2048, 0.5
        %v2050 = vmul.f32 %v2045, %v1628
        %v2051 = vrot.slane %v2038, 2
        %v2053 = vmul.f32 %v2040, %v2051
        %v2054 = vadd.f32 %v2050, %v2053
        %v2055 = vtanh.pop %v2054
        %v2056 = vmul.f32 %v2049, %v2055
        %2057 = vst.msk [vmem:[#allocation2 + $0x2] sm:$0x1] %vm1204, %v1844
        %2058 = vst.msk [vmem:[#allocation3 + $0x5] sm:$0x1] %vm1204, %v2056
        %s2059 = scalar_lea.vmem [#allocation4], 3
        %v2060 = vld [vmem:[%s2059] ss:$8 sm:$0xf]
        %v2061 = vld [vmem:[%s318] sm:$0xff]
        %v2062 = vld [vmem:[%s318 + $0x8] sm:$0xff]
        %v2063 = vld [vmem:[%s318 + $0x10] sm:$0xff]
        %v2064 = vld [vmem:[%s318 + $0x18] sm:$0xff]
        %v2065 = vld [vmem:[%s318 + $0x20] sm:$0xff]
        %v2066 = vld [vmem:[%s318 + $0x28] sm:$0xff]
        %v2067 = vld [vmem:[%s318 + $0x30] sm:$0xff]
        %v2068 = vld [vmem:[%s318 + $0x38] sm:$0xff]
        %v2069 = vld [vmem:[%s318 + $0x40] sm:$0xff]
        %v2070 = vld [vmem:[%s318 + $0x48] sm:$0xff]
        %v2071 = vld [vmem:[%s318 + $0x50] sm:$0xff]
        %v2072 = vld [vmem:[%s318 + $0x58] sm:$0xff]
        %v2073 = vld [vmem:[%s318 + $0x60] sm:$0xff]
        %v2074 = vld [vmem:[%s318 + $0x68] sm:$0xff]
        %v2075 = vld [vmem:[%s318 + $0x70] sm:$0xff]
        %v2076 = vld [vmem:[%s318 + $0x78] sm:$0xff]
        %v2078 = vsel %vm799, %v1844, 0
        %2080 = vmatprep.subr.mxu0 0.0
        %2081 = vmatpush1.msra.mxu0 0.0
        %2082 = vmatprep.subr.mxu0 0.0
        %2083 = vmatpush1.msra.mxu0 0.0
        %2084 = vmatprep.subr.mxu0 0.0
        %2085 = vmatpush1.msra.mxu0 0.0
        %2086 = vmatprep.subr.mxu0 0.0
        %2087 = vmatpush1.msra.mxu0 0.0
        %2088 = vmatprep.subr.mxu0 0.0
        %2089 = vmatpush1.msra.mxu0 0.0
        %2090 = vmatprep.subr.mxu0 0.0
        %2091 = vmatpush1.msra.mxu0 0.0
        %2092 = vmatprep.subr.mxu0 0.0
        %2093 = vmatpush1.msra.mxu0 0.0
        %2094 = vmatprep.subr.mxu0 0.0
        %2095 = vmatpush1.msra.mxu0 0.0
        %2096 = vmatprep.subr.mxu0 0.0
        %2097 = vmatpush1.msra.mxu0 0.0
        %2098 = vmatprep.subr.mxu0 0.0
        %2099 = vmatpush1.msra.mxu0 0.0
        %2100 = vmatprep.subr.mxu0 0.0
        %2101 = vmatpush1.msra.mxu0 0.0
        %2102 = vmatprep.subr.mxu0 0.0
        %2103 = vmatpush1.msra.mxu0 0.0
        %2104 = vmatprep.subr.mxu0 %v2074
        %2105 = vmatpush1.msra.mxu0 %v2073
        %2106 = vmatprep.subr.mxu0 %v2070
        %2107 = vmatpush1.msra.mxu0 %v2069
        %2108 = vmatprep.subr.mxu0 %v2066
        %2109 = vmatpush1.msra.mxu0 %v2065
        %2110 = vmatprep.subr.mxu0 %v2062
        %2111 = vmatpush1.msra.mxu0 %v2061
        %2112 = vmatprep.subr.mxu0 0.0
        %2113 = vmatpush2.msra.mxu0 0.0
        %2114 = vmatprep.subr.mxu0 0.0
        %2115 = vmatpush2.msra.mxu0 0.0
        %2116 = vmatprep.subr.mxu0 0.0
        %2117 = vmatpush2.msra.mxu0 0.0
        %2118 = vmatprep.subr.mxu0 0.0
        %2119 = vmatpush2.msra.mxu0 0.0
        %2120 = vmatprep.subr.mxu0 0.0
        %2121 = vmatpush2.msra.mxu0 0.0
        %2122 = vmatprep.subr.mxu0 0.0
        %2123 = vmatpush2.msra.mxu0 0.0
        %2124 = vmatprep.subr.mxu0 0.0
        %2125 = vmatpush2.msra.mxu0 0.0
        %2126 = vmatprep.subr.mxu0 0.0
        %2127 = vmatpush2.msra.mxu0 0.0
        %2128 = vmatprep.subr.mxu0 0.0
        %2129 = vmatpush2.msra.mxu0 0.0
        %2130 = vmatprep.subr.mxu0 0.0
        %2131 = vmatpush2.msra.mxu0 0.0
        %2132 = vmatprep.subr.mxu0 0.0
        %2133 = vmatpush2.msra.mxu0 0.0
        %2134 = vmatprep.subr.mxu0 0.0
        %2135 = vmatpush2.msra.mxu0 0.0
        %2136 = vmatprep.subr.mxu0 0.0
        %2137 = vmatpush2.msra.mxu0 0.0
        %2138 = vmatprep.subr.mxu0 0.0
        %2139 = vmatpush2.msra.mxu0 0.0
        %2140 = vmatprep.subr.mxu0 0.0
        %2141 = vmatpush2.msra.mxu0 0.0
        %2142 = vmatprep.subr.mxu0 0.0
        %2143 = vmatpush2.msra.mxu0 0.0
        %2144 = vmatprep.mubr.f32.mxu0 0.0
        %2145 = vmatmul.mubr.f32.gmra.mxu0 %v2078
        %v2146 = vpop.f32.mrf.mxu0
        %v2147 = vadd.f32 0.0, %v2146
        %v2148 = vpop.f32.mrf.mxu0
        %v2149 = vadd.f32 0.0, %v2148
        %2150 = vdwg.mxu0
        %2151 = vmatprep.subr.mxu0 0.0
        %2152 = vmatpush1.msra.mxu0 0.0
        %2153 = vmatprep.subr.mxu0 0.0
        %2154 = vmatpush1.msra.mxu0 0.0
        %2155 = vmatprep.subr.mxu0 0.0
        %2156 = vmatpush1.msra.mxu0 0.0
        %2157 = vmatprep.subr.mxu0 0.0
        %2158 = vmatpush1.msra.mxu0 0.0
        %2159 = vmatprep.subr.mxu0 0.0
        %2160 = vmatpush1.msra.mxu0 0.0
        %2161 = vmatprep.subr.mxu0 0.0
        %2162 = vmatpush1.msra.mxu0 0.0
        %2163 = vmatprep.subr.mxu0 0.0
        %2164 = vmatpush1.msra.mxu0 0.0
        %2165 = vmatprep.subr.mxu0 0.0
        %2166 = vmatpush1.msra.mxu0 0.0
        %2167 = vmatprep.subr.mxu0 0.0
        %2168 = vmatpush1.msra.mxu0 0.0
        %2169 = vmatprep.subr.mxu0 0.0
        %2170 = vmatpush1.msra.mxu0 0.0
        %2171 = vmatprep.subr.mxu0 0.0
        %2172 = vmatpush1.msra.mxu0 0.0
        %2173 = vmatprep.subr.mxu0 0.0
        %2174 = vmatpush1.msra.mxu0 0.0
        %2175 = vmatprep.subr.mxu0 %v2076
        %2176 = vmatpush1.msra.mxu0 %v2075
        %2177 = vmatprep.subr.mxu0 %v2072
        %2178 = vmatpush1.msra.mxu0 %v2071
        %2179 = vmatprep.subr.mxu0 %v2068
        %2180 = vmatpush1.msra.mxu0 %v2067
        %2181 = vmatprep.subr.mxu0 %v2064
        %2182 = vmatpush1.msra.mxu0 %v2063
        %2183 = vmatprep.subr.mxu0 0.0
        %2184 = vmatpush2.msra.mxu0 0.0
        %2185 = vmatprep.subr.mxu0 0.0
        %2186 = vmatpush2.msra.mxu0 0.0
        %2187 = vmatprep.subr.mxu0 0.0
        %2188 = vmatpush2.msra.mxu0 0.0
        %2189 = vmatprep.subr.mxu0 0.0
        %2190 = vmatpush2.msra.mxu0 0.0
        %2191 = vmatprep.subr.mxu0 0.0
        %2192 = vmatpush2.msra.mxu0 0.0
        %2193 = vmatprep.subr.mxu0 0.0
        %2194 = vmatpush2.msra.mxu0 0.0
        %2195 = vmatprep.subr.mxu0 0.0
        %2196 = vmatpush2.msra.mxu0 0.0
        %2197 = vmatprep.subr.mxu0 0.0
        %2198 = vmatpush2.msra.mxu0 0.0
        %2199 = vmatprep.subr.mxu0 0.0
        %2200 = vmatpush2.msra.mxu0 0.0
        %2201 = vmatprep.subr.mxu0 0.0
        %2202 = vmatpush2.msra.mxu0 0.0
        %2203 = vmatprep.subr.mxu0 0.0
        %2204 = vmatpush2.msra.mxu0 0.0
        %2205 = vmatprep.subr.mxu0 0.0
        %2206 = vmatpush2.msra.mxu0 0.0
        %2207 = vmatprep.subr.mxu0 0.0
        %2208 = vmatpush2.msra.mxu0 0.0
        %2209 = vmatprep.subr.mxu0 0.0
        %2210 = vmatpush2.msra.mxu0 0.0
        %2211 = vmatprep.subr.mxu0 0.0
        %2212 = vmatpush2.msra.mxu0 0.0
        %2213 = vmatprep.subr.mxu0 0.0
        %2214 = vmatpush2.msra.mxu0 0.0
        %2215 = vmatprep.mubr.f32.mxu0 0.0
        %2216 = vmatmul.mubr.f32.gmra.mxu0 %v2078
        %v2217 = vpop.f32.mrf.mxu0
        %v2218 = vadd.f32 0.0, %v2217
        %v2219 = vpop.f32.mrf.mxu0
        %v2220 = vadd.f32 0.0, %v2219
        %2221 = vdwg.mxu0
        %v2226 = vcombine.low %v2147, %v2149
        %v2227 = vcombine.low %v2218, %v2220
        %v2229 = vunpack.c.l.s4 1966171168
        %v2230 = vunpack.c.0.s8 %v2229
        %v2231 = vlaneseq
        %v2232 = vshrl.u32 %v2231, 7
        %v2233 = vsub.s32 %v2230, %v2232
        %v2234 = vrot.slane %v2226, %v2233
        %v2236 = vunpack.c.l.s4 1966171168
        %v2237 = vunpack.c.0.s8 %v2236
        %v2238 = vlaneseq
        %v2239 = vshrl.u32 %v2238, 7
        %v2240 = vsub.s32 %v2237, %v2239
        %v2241 = vrot.slane %v2227, %v2240
        %v2242 = vcombine.low %v2234, %v2241
        %v2244 = vunpack.c.l.s4 1966171168
        %v2245 = vunpack.c.0.s8 %v2244
        %v2246 = vlaneseq
        %v2247 = vshrl.u32 %v2246, 7
        %v2248 = vsub.s32 %v2245, %v2247
        %v2249 = vrot.slane %v2242, %v2248
        %v2251 = vadd.f32 %v2060, %v2249
        %v2252 = vtanh.pop %v2251
        %v2253 = vmul.f32 %v2252, 0.5
        %v2254 = vadd.f32 %v2253, 0.5
        %v2256 = vrot.slane %v2252, 1
        %v2258 = vmul.f32 %v2256, 0.5
        %v2259 = vadd.f32 %v2258, 0.5
        %v2260 = vrot.slane %v2252, 3
        %v2262 = vmul.f32 %v2260, 0.5
        %v2263 = vadd.f32 %v2262, 0.5
        %v2264 = vmul.f32 %v2259, %v1842
        %v2265 = vrot.slane %v2252, 2
        %v2267 = vmul.f32 %v2254, %v2265
        %v2268 = vadd.f32 %v2264, %v2267
        %v2269 = vtanh.pop %v2268
        %v2270 = vmul.f32 %v2263, %v2269
        %s2271 = scalar_lea.vmem [#allocation5], 4
        %v2272 = vld [vmem:[%s2271] ss:$8 sm:$0xf]
        %v2273 = vld [vmem:[%s996] sm:$0xff]
        %v2274 = vld [vmem:[%s996 + $0x8] sm:$0xff]
        %v2275 = vld [vmem:[%s996 + $0x10] sm:$0xff]
        %v2276 = vld [vmem:[%s996 + $0x18] sm:$0xff]
        %v2277 = vld [vmem:[%s996 + $0x20] sm:$0xff]
        %v2278 = vld [vmem:[%s996 + $0x28] sm:$0xff]
        %v2279 = vld [vmem:[%s996 + $0x30] sm:$0xff]
        %v2280 = vld [vmem:[%s996 + $0x38] sm:$0xff]
        %v2281 = vld [vmem:[%s996 + $0x40] sm:$0xff]
        %v2282 = vld [vmem:[%s996 + $0x48] sm:$0xff]
        %v2283 = vld [vmem:[%s996 + $0x50] sm:$0xff]
        %v2284 = vld [vmem:[%s996 + $0x58] sm:$0xff]
        %v2285 = vld [vmem:[%s996 + $0x60] sm:$0xff]
        %v2286 = vld [vmem:[%s996 + $0x68] sm:$0xff]
        %v2287 = vld [vmem:[%s996 + $0x70] sm:$0xff]
        %v2288 = vld [vmem:[%s996 + $0x78] sm:$0xff]
        %v2290 = vsel %vm799, %v2056, 0
        %2292 = vmatprep.subr.mxu0 0.0
        %2293 = vmatpush1.msra.mxu0 0.0
        %2294 = vmatprep.subr.mxu0 0.0
        %2295 = vmatpush1.msra.mxu0 0.0
        %2296 = vmatprep.subr.mxu0 0.0
        %2297 = vmatpush1.msra.mxu0 0.0
        %2298 = vmatprep.subr.mxu0 0.0
        %2299 = vmatpush1.msra.mxu0 0.0
        %2300 = vmatprep.subr.mxu0 0.0
        %2301 = vmatpush1.msra.mxu0 0.0
        %2302 = vmatprep.subr.mxu0 0.0
        %2303 = vmatpush1.msra.mxu0 0.0
        %2304 = vmatprep.subr.mxu0 0.0
        %2305 = vmatpush1.msra.mxu0 0.0
        %2306 = vmatprep.subr.mxu0 0.0
        %2307 = vmatpush1.msra.mxu0 0.0
        %2308 = vmatprep.subr.mxu0 0.0
        %2309 = vmatpush1.msra.mxu0 0.0
        %2310 = vmatprep.subr.mxu0 0.0
        %2311 = vmatpush1.msra.mxu0 0.0
        %2312 = vmatprep.subr.mxu0 0.0
        %2313 = vmatpush1.msra.mxu0 0.0
        %2314 = vmatprep.subr.mxu0 0.0
        %2315 = vmatpush1.msra.mxu0 0.0
        %2316 = vmatprep.subr.mxu0 %v2286
        %2317 = vmatpush1.msra.mxu0 %v2285
        %2318 = vmatprep.subr.mxu0 %v2282
        %2319 = vmatpush1.msra.mxu0 %v2281
        %2320 = vmatprep.subr.mxu0 %v2278
        %2321 = vmatpush1.msra.mxu0 %v2277
        %2322 = vmatprep.subr.mxu0 %v2274
        %2323 = vmatpush1.msra.mxu0 %v2273
        %2324 = vmatprep.subr.mxu0 0.0
        %2325 = vmatpush2.msra.mxu0 0.0
        %2326 = vmatprep.subr.mxu0 0.0
        %2327 = vmatpush2.msra.mxu0 0.0
        %2328 = vmatprep.subr.mxu0 0.0
        %2329 = vmatpush2.msra.mxu0 0.0
        %2330 = vmatprep.subr.mxu0 0.0
        %2331 = vmatpush2.msra.mxu0 0.0
        %2332 = vmatprep.subr.mxu0 0.0
        %2333 = vmatpush2.msra.mxu0 0.0
        %2334 = vmatprep.subr.mxu0 0.0
        %2335 = vmatpush2.msra.mxu0 0.0
        %2336 = vmatprep.subr.mxu0 0.0
        %2337 = vmatpush2.msra.mxu0 0.0
        %2338 = vmatprep.subr.mxu0 0.0
        %2339 = vmatpush2.msra.mxu0 0.0
        %2340 = vmatprep.subr.mxu0 0.0
        %2341 = vmatpush2.msra.mxu0 0.0
        %2342 = vmatprep.subr.mxu0 0.0
        %2343 = vmatpush2.msra.mxu0 0.0
        %2344 = vmatprep.subr.mxu0 0.0
        %2345 = vmatpush2.msra.mxu0 0.0
        %2346 = vmatprep.subr.mxu0 0.0
        %2347 = vmatpush2.msra.mxu0 0.0
        %2348 = vmatprep.subr.mxu0 0.0
        %2349 = vmatpush2.msra.mxu0 0.0
        %2350 = vmatprep.subr.mxu0 0.0
        %2351 = vmatpush2.msra.mxu0 0.0
        %2352 = vmatprep.subr.mxu0 0.0
        %2353 = vmatpush2.msra.mxu0 0.0
        %2354 = vmatprep.subr.mxu0 0.0
        %2355 = vmatpush2.msra.mxu0 0.0
        %2356 = vmatprep.mubr.f32.mxu0 0.0
        %2357 = vmatmul.mubr.f32.gmra.mxu0 %v2290
        %v2358 = vpop.f32.mrf.mxu0
        %v2359 = vadd.f32 0.0, %v2358
        %v2360 = vpop.f32.mrf.mxu0
        %v2361 = vadd.f32 0.0, %v2360
        %2362 = vdwg.mxu0
        %2363 = vmatprep.subr.mxu0 0.0
        %2364 = vmatpush1.msra.mxu0 0.0
        %2365 = vmatprep.subr.mxu0 0.0
        %2366 = vmatpush1.msra.mxu0 0.0
        %2367 = vmatprep.subr.mxu0 0.0
        %2368 = vmatpush1.msra.mxu0 0.0
        %2369 = vmatprep.subr.mxu0 0.0
        %2370 = vmatpush1.msra.mxu0 0.0
        %2371 = vmatprep.subr.mxu0 0.0
        %2372 = vmatpush1.msra.mxu0 0.0
        %2373 = vmatprep.subr.mxu0 0.0
        %2374 = vmatpush1.msra.mxu0 0.0
        %2375 = vmatprep.subr.mxu0 0.0
        %2376 = vmatpush1.msra.mxu0 0.0
        %2377 = vmatprep.subr.mxu0 0.0
        %2378 = vmatpush1.msra.mxu0 0.0
        %2379 = vmatprep.subr.mxu0 0.0
        %2380 = vmatpush1.msra.mxu0 0.0
        %2381 = vmatprep.subr.mxu0 0.0
        %2382 = vmatpush1.msra.mxu0 0.0
        %2383 = vmatprep.subr.mxu0 0.0
        %2384 = vmatpush1.msra.mxu0 0.0
        %2385 = vmatprep.subr.mxu0 0.0
        %2386 = vmatpush1.msra.mxu0 0.0
        %2387 = vmatprep.subr.mxu0 %v2288
        %2388 = vmatpush1.msra.mxu0 %v2287
        %2389 = vmatprep.subr.mxu0 %v2284
        %2390 = vmatpush1.msra.mxu0 %v2283
        %2391 = vmatprep.subr.mxu0 %v2280
        %2392 = vmatpush1.msra.mxu0 %v2279
        %2393 = vmatprep.subr.mxu0 %v2276
        %2394 = vmatpush1.msra.mxu0 %v2275
        %2395 = vmatprep.subr.mxu0 0.0
        %2396 = vmatpush2.msra.mxu0 0.0
        %2397 = vmatprep.subr.mxu0 0.0
        %2398 = vmatpush2.msra.mxu0 0.0
        %2399 = vmatprep.subr.mxu0 0.0
        %2400 = vmatpush2.msra.mxu0 0.0
        %2401 = vmatprep.subr.mxu0 0.0
        %2402 = vmatpush2.msra.mxu0 0.0
        %2403 = vmatprep.subr.mxu0 0.0
        %2404 = vmatpush2.msra.mxu0 0.0
        %2405 = vmatprep.subr.mxu0 0.0
        %2406 = vmatpush2.msra.mxu0 0.0
        %2407 = vmatprep.subr.mxu0 0.0
        %2408 = vmatpush2.msra.mxu0 0.0
        %2409 = vmatprep.subr.mxu0 0.0
        %2410 = vmatpush2.msra.mxu0 0.0
        %2411 = vmatprep.subr.mxu0 0.0
        %2412 = vmatpush2.msra.mxu0 0.0
        %2413 = vmatprep.subr.mxu0 0.0
        %2414 = vmatpush2.msra.mxu0 0.0
        %2415 = vmatprep.subr.mxu0 0.0
        %2416 = vmatpush2.msra.mxu0 0.0
        %2417 = vmatprep.subr.mxu0 0.0
        %2418 = vmatpush2.msra.mxu0 0.0
        %2419 = vmatprep.subr.mxu0 0.0
        %2420 = vmatpush2.msra.mxu0 0.0
        %2421 = vmatprep.subr.mxu0 0.0
        %2422 = vmatpush2.msra.mxu0 0.0
        %2423 = vmatprep.subr.mxu0 0.0
        %2424 = vmatpush2.msra.mxu0 0.0
        %2425 = vmatprep.subr.mxu0 0.0
        %2426 = vmatpush2.msra.mxu0 0.0
        %2427 = vmatprep.mubr.f32.mxu0 0.0
        %2428 = vmatmul.mubr.f32.gmra.mxu0 %v2290
        %v2429 = vpop.f32.mrf.mxu0
        %v2430 = vadd.f32 0.0, %v2429
        %v2431 = vpop.f32.mrf.mxu0
        %v2432 = vadd.f32 0.0, %v2431
        %2433 = vdwg.mxu0
        %v2438 = vcombine.low %v2359, %v2361
        %v2439 = vcombine.low %v2430, %v2432
        %v2441 = vunpack.c.l.s4 1966171168
        %v2442 = vunpack.c.0.s8 %v2441
        %v2443 = vlaneseq
        %v2444 = vshrl.u32 %v2443, 7
        %v2445 = vsub.s32 %v2442, %v2444
        %v2446 = vrot.slane %v2438, %v2445
        %v2448 = vunpack.c.l.s4 1966171168
        %v2449 = vunpack.c.0.s8 %v2448
        %v2450 = vlaneseq
        %v2451 = vshrl.u32 %v2450, 7
        %v2452 = vsub.s32 %v2449, %v2451
        %v2453 = vrot.slane %v2439, %v2452
        %v2454 = vcombine.low %v2446, %v2453
        %v2456 = vunpack.c.l.s4 1966171168
        %v2457 = vunpack.c.0.s8 %v2456
        %v2458 = vlaneseq
        %v2459 = vshrl.u32 %v2458, 7
        %v2460 = vsub.s32 %v2457, %v2459
        %v2461 = vrot.slane %v2454, %v2460
        %v2463 = vadd.f32 %v2272, %v2461
        %v2464 = vtanh.pop %v2463
        %v2465 = vmul.f32 %v2464, 0.5
        %v2466 = vadd.f32 %v2465, 0.5
        %v2468 = vrot.slane %v2464, 1
        %v2470 = vmul.f32 %v2468, 0.5
        %v2471 = vadd.f32 %v2470, 0.5
        %v2472 = vrot.slane %v2464, 3
        %v2474 = vmul.f32 %v2472, 0.5
        %v2475 = vadd.f32 %v2474, 0.5
        %v2476 = vmul.f32 %v2471, %v2054
        %v2477 = vrot.slane %v2464, 2
        %v2479 = vmul.f32 %v2466, %v2477
        %v2480 = vadd.f32 %v2476, %v2479
        %v2481 = vtanh.pop %v2480
        %v2482 = vmul.f32 %v2475, %v2481
        %2483 = vst.msk [vmem:[#allocation2 + $0x3] sm:$0x1] %vm1204, %v2270
        %2484 = vst.msk [vmem:[#allocation3 + $0x4] sm:$0x1] %vm1204, %v2482
        %s2485 = scalar_lea.vmem [#allocation4], 4
        %v2486 = vld [vmem:[%s2485] ss:$8 sm:$0xf]
        %v2487 = vld [vmem:[%s318] sm:$0xff]
        %v2488 = vld [vmem:[%s318 + $0x8] sm:$0xff]
        %v2489 = vld [vmem:[%s318 + $0x10] sm:$0xff]
        %v2490 = vld [vmem:[%s318 + $0x18] sm:$0xff]
        %v2491 = vld [vmem:[%s318 + $0x20] sm:$0xff]
        %v2492 = vld [vmem:[%s318 + $0x28] sm:$0xff]
        %v2493 = vld [vmem:[%s318 + $0x30] sm:$0xff]
        %v2494 = vld [vmem:[%s318 + $0x38] sm:$0xff]
        %v2495 = vld [vmem:[%s318 + $0x40] sm:$0xff]
        %v2496 = vld [vmem:[%s318 + $0x48] sm:$0xff]
        %v2497 = vld [vmem:[%s318 + $0x50] sm:$0xff]
        %v2498 = vld [vmem:[%s318 + $0x58] sm:$0xff]
        %v2499 = vld [vmem:[%s318 + $0x60] sm:$0xff]
        %v2500 = vld [vmem:[%s318 + $0x68] sm:$0xff]
        %v2501 = vld [vmem:[%s318 + $0x70] sm:$0xff]
        %v2502 = vld [vmem:[%s318 + $0x78] sm:$0xff]
        %v2504 = vsel %vm799, %v2270, 0
        %2506 = vmatprep.subr.mxu0 0.0
        %2507 = vmatpush1.msra.mxu0 0.0
        %2508 = vmatprep.subr.mxu0 0.0
        %2509 = vmatpush1.msra.mxu0 0.0
        %2510 = vmatprep.subr.mxu0 0.0
        %2511 = vmatpush1.msra.mxu0 0.0
        %2512 = vmatprep.subr.mxu0 0.0
        %2513 = vmatpush1.msra.mxu0 0.0
        %2514 = vmatprep.subr.mxu0 0.0
        %2515 = vmatpush1.msra.mxu0 0.0
        %2516 = vmatprep.subr.mxu0 0.0
        %2517 = vmatpush1.msra.mxu0 0.0
        %2518 = vmatprep.subr.mxu0 0.0
        %2519 = vmatpush1.msra.mxu0 0.0
        %2520 = vmatprep.subr.mxu0 0.0
        %2521 = vmatpush1.msra.mxu0 0.0
        %2522 = vmatprep.subr.mxu0 0.0
        %2523 = vmatpush1.msra.mxu0 0.0
        %2524 = vmatprep.subr.mxu0 0.0
        %2525 = vmatpush1.msra.mxu0 0.0
        %2526 = vmatprep.subr.mxu0 0.0
        %2527 = vmatpush1.msra.mxu0 0.0
        %2528 = vmatprep.subr.mxu0 0.0
        %2529 = vmatpush1.msra.mxu0 0.0
        %2530 = vmatprep.subr.mxu0 %v2500
        %2531 = vmatpush1.msra.mxu0 %v2499
        %2532 = vmatprep.subr.mxu0 %v2496
        %2533 = vmatpush1.msra.mxu0 %v2495
        %2534 = vmatprep.subr.mxu0 %v2492
        %2535 = vmatpush1.msra.mxu0 %v2491
        %2536 = vmatprep.subr.mxu0 %v2488
        %2537 = vmatpush1.msra.mxu0 %v2487
        %2538 = vmatprep.subr.mxu0 0.0
        %2539 = vmatpush2.msra.mxu0 0.0
        %2540 = vmatprep.subr.mxu0 0.0
        %2541 = vmatpush2.msra.mxu0 0.0
        %2542 = vmatprep.subr.mxu0 0.0
        %2543 = vmatpush2.msra.mxu0 0.0
        %2544 = vmatprep.subr.mxu0 0.0
        %2545 = vmatpush2.msra.mxu0 0.0
        %2546 = vmatprep.subr.mxu0 0.0
        %2547 = vmatpush2.msra.mxu0 0.0
        %2548 = vmatprep.subr.mxu0 0.0
        %2549 = vmatpush2.msra.mxu0 0.0
        %2550 = vmatprep.subr.mxu0 0.0
        %2551 = vmatpush2.msra.mxu0 0.0
        %2552 = vmatprep.subr.mxu0 0.0
        %2553 = vmatpush2.msra.mxu0 0.0
        %2554 = vmatprep.subr.mxu0 0.0
        %2555 = vmatpush2.msra.mxu0 0.0
        %2556 = vmatprep.subr.mxu0 0.0
        %2557 = vmatpush2.msra.mxu0 0.0
        %2558 = vmatprep.subr.mxu0 0.0
        %2559 = vmatpush2.msra.mxu0 0.0
        %2560 = vmatprep.subr.mxu0 0.0
        %2561 = vmatpush2.msra.mxu0 0.0
        %2562 = vmatprep.subr.mxu0 0.0
        %2563 = vmatpush2.msra.mxu0 0.0
        %2564 = vmatprep.subr.mxu0 0.0
        %2565 = vmatpush2.msra.mxu0 0.0
        %2566 = vmatprep.subr.mxu0 0.0
        %2567 = vmatpush2.msra.mxu0 0.0
        %2568 = vmatprep.subr.mxu0 0.0
        %2569 = vmatpush2.msra.mxu0 0.0
        %2570 = vmatprep.mubr.f32.mxu0 0.0
        %2571 = vmatmul.mubr.f32.gmra.mxu0 %v2504
        %v2572 = vpop.f32.mrf.mxu0
        %v2573 = vadd.f32 0.0, %v2572
        %v2574 = vpop.f32.mrf.mxu0
        %v2575 = vadd.f32 0.0, %v2574
        %2576 = vdwg.mxu0
        %2577 = vmatprep.subr.mxu0 0.0
        %2578 = vmatpush1.msra.mxu0 0.0
        %2579 = vmatprep.subr.mxu0 0.0
        %2580 = vmatpush1.msra.mxu0 0.0
        %2581 = vmatprep.subr.mxu0 0.0
        %2582 = vmatpush1.msra.mxu0 0.0
        %2583 = vmatprep.subr.mxu0 0.0
        %2584 = vmatpush1.msra.mxu0 0.0
        %2585 = vmatprep.subr.mxu0 0.0
        %2586 = vmatpush1.msra.mxu0 0.0
        %2587 = vmatprep.subr.mxu0 0.0
        %2588 = vmatpush1.msra.mxu0 0.0
        %2589 = vmatprep.subr.mxu0 0.0
        %2590 = vmatpush1.msra.mxu0 0.0
        %2591 = vmatprep.subr.mxu0 0.0
        %2592 = vmatpush1.msra.mxu0 0.0
        %2593 = vmatprep.subr.mxu0 0.0
        %2594 = vmatpush1.msra.mxu0 0.0
        %2595 = vmatprep.subr.mxu0 0.0
        %2596 = vmatpush1.msra.mxu0 0.0
        %2597 = vmatprep.subr.mxu0 0.0
        %2598 = vmatpush1.msra.mxu0 0.0
        %2599 = vmatprep.subr.mxu0 0.0
        %2600 = vmatpush1.msra.mxu0 0.0
        %2601 = vmatprep.subr.mxu0 %v2502
        %2602 = vmatpush1.msra.mxu0 %v2501
        %2603 = vmatprep.subr.mxu0 %v2498
        %2604 = vmatpush1.msra.mxu0 %v2497
        %2605 = vmatprep.subr.mxu0 %v2494
        %2606 = vmatpush1.msra.mxu0 %v2493
        %2607 = vmatprep.subr.mxu0 %v2490
        %2608 = vmatpush1.msra.mxu0 %v2489
        %2609 = vmatprep.subr.mxu0 0.0
        %2610 = vmatpush2.msra.mxu0 0.0
        %2611 = vmatprep.subr.mxu0 0.0
        %2612 = vmatpush2.msra.mxu0 0.0
        %2613 = vmatprep.subr.mxu0 0.0
        %2614 = vmatpush2.msra.mxu0 0.0
        %2615 = vmatprep.subr.mxu0 0.0
        %2616 = vmatpush2.msra.mxu0 0.0
        %2617 = vmatprep.subr.mxu0 0.0
        %2618 = vmatpush2.msra.mxu0 0.0
        %2619 = vmatprep.subr.mxu0 0.0
        %2620 = vmatpush2.msra.mxu0 0.0
        %2621 = vmatprep.subr.mxu0 0.0
        %2622 = vmatpush2.msra.mxu0 0.0
        %2623 = vmatprep.subr.mxu0 0.0
        %2624 = vmatpush2.msra.mxu0 0.0
        %2625 = vmatprep.subr.mxu0 0.0
        %2626 = vmatpush2.msra.mxu0 0.0
        %2627 = vmatprep.subr.mxu0 0.0
        %2628 = vmatpush2.msra.mxu0 0.0
        %2629 = vmatprep.subr.mxu0 0.0
        %2630 = vmatpush2.msra.mxu0 0.0
        %2631 = vmatprep.subr.mxu0 0.0
        %2632 = vmatpush2.msra.mxu0 0.0
        %2633 = vmatprep.subr.mxu0 0.0
        %2634 = vmatpush2.msra.mxu0 0.0
        %2635 = vmatprep.subr.mxu0 0.0
        %2636 = vmatpush2.msra.mxu0 0.0
        %2637 = vmatprep.subr.mxu0 0.0
        %2638 = vmatpush2.msra.mxu0 0.0
        %2639 = vmatprep.subr.mxu0 0.0
        %2640 = vmatpush2.msra.mxu0 0.0
        %2641 = vmatprep.mubr.f32.mxu0 0.0
        %2642 = vmatmul.mubr.f32.gmra.mxu0 %v2504
        %v2643 = vpop.f32.mrf.mxu0
        %v2644 = vadd.f32 0.0, %v2643
        %v2645 = vpop.f32.mrf.mxu0
        %v2646 = vadd.f32 0.0, %v2645
        %2647 = vdwg.mxu0
        %v2652 = vcombine.low %v2573, %v2575
        %v2653 = vcombine.low %v2644, %v2646
        %v2655 = vunpack.c.l.s4 1966171168
        %v2656 = vunpack.c.0.s8 %v2655
        %v2657 = vlaneseq
        %v2658 = vshrl.u32 %v2657, 7
        %v2659 = vsub.s32 %v2656, %v2658
        %v2660 = vrot.slane %v2652, %v2659
        %v2662 = vunpack.c.l.s4 1966171168
        %v2663 = vunpack.c.0.s8 %v2662
        %v2664 = vlaneseq
        %v2665 = vshrl.u32 %v2664, 7
        %v2666 = vsub.s32 %v2663, %v2665
        %v2667 = vrot.slane %v2653, %v2666
        %v2668 = vcombine.low %v2660, %v2667
        %v2670 = vunpack.c.l.s4 1966171168
        %v2671 = vunpack.c.0.s8 %v2670
        %v2672 = vlaneseq
        %v2673 = vshrl.u32 %v2672, 7
        %v2674 = vsub.s32 %v2671, %v2673
        %v2675 = vrot.slane %v2668, %v2674
        %v2677 = vadd.f32 %v2486, %v2675
        %v2678 = vtanh.pop %v2677
        %v2679 = vmul.f32 %v2678, 0.5
        %v2680 = vadd.f32 %v2679, 0.5
        %v2682 = vrot.slane %v2678, 1
        %v2684 = vmul.f32 %v2682, 0.5
        %v2685 = vadd.f32 %v2684, 0.5
        %v2686 = vrot.slane %v2678, 3
        %v2688 = vmul.f32 %v2686, 0.5
        %v2689 = vadd.f32 %v2688, 0.5
        %v2690 = vmul.f32 %v2685, %v2268
        %v2691 = vrot.slane %v2678, 2
        %v2693 = vmul.f32 %v2680, %v2691
        %v2694 = vadd.f32 %v2690, %v2693
        %v2695 = vtanh.pop %v2694
        %v2696 = vmul.f32 %v2689, %v2695
        %s2697 = scalar_lea.vmem [#allocation5], 3
        %v2698 = vld [vmem:[%s2697] ss:$8 sm:$0xf]
        %v2699 = vld [vmem:[%s996] sm:$0xff]
        %v2700 = vld [vmem:[%s996 + $0x8] sm:$0xff]
        %v2701 = vld [vmem:[%s996 + $0x10] sm:$0xff]
        %v2702 = vld [vmem:[%s996 + $0x18] sm:$0xff]
        %v2703 = vld [vmem:[%s996 + $0x20] sm:$0xff]
        %v2704 = vld [vmem:[%s996 + $0x28] sm:$0xff]
        %v2705 = vld [vmem:[%s996 + $0x30] sm:$0xff]
        %v2706 = vld [vmem:[%s996 + $0x38] sm:$0xff]
        %v2707 = vld [vmem:[%s996 + $0x40] sm:$0xff]
        %v2708 = vld [vmem:[%s996 + $0x48] sm:$0xff]
        %v2709 = vld [vmem:[%s996 + $0x50] sm:$0xff]
        %v2710 = vld [vmem:[%s996 + $0x58] sm:$0xff]
        %v2711 = vld [vmem:[%s996 + $0x60] sm:$0xff]
        %v2712 = vld [vmem:[%s996 + $0x68] sm:$0xff]
        %v2713 = vld [vmem:[%s996 + $0x70] sm:$0xff]
        %v2714 = vld [vmem:[%s996 + $0x78] sm:$0xff]
        %v2716 = vsel %vm799, %v2482, 0
        %2718 = vmatprep.subr.mxu0 0.0
        %2719 = vmatpush1.msra.mxu0 0.0
        %2720 = vmatprep.subr.mxu0 0.0
        %2721 = vmatpush1.msra.mxu0 0.0
        %2722 = vmatprep.subr.mxu0 0.0
        %2723 = vmatpush1.msra.mxu0 0.0
        %2724 = vmatprep.subr.mxu0 0.0
        %2725 = vmatpush1.msra.mxu0 0.0
        %2726 = vmatprep.subr.mxu0 0.0
        %2727 = vmatpush1.msra.mxu0 0.0
        %2728 = vmatprep.subr.mxu0 0.0
        %2729 = vmatpush1.msra.mxu0 0.0
        %2730 = vmatprep.subr.mxu0 0.0
        %2731 = vmatpush1.msra.mxu0 0.0
        %2732 = vmatprep.subr.mxu0 0.0
        %2733 = vmatpush1.msra.mxu0 0.0
        %2734 = vmatprep.subr.mxu0 0.0
        %2735 = vmatpush1.msra.mxu0 0.0
        %2736 = vmatprep.subr.mxu0 0.0
        %2737 = vmatpush1.msra.mxu0 0.0
        %2738 = vmatprep.subr.mxu0 0.0
        %2739 = vmatpush1.msra.mxu0 0.0
        %2740 = vmatprep.subr.mxu0 0.0
        %2741 = vmatpush1.msra.mxu0 0.0
        %2742 = vmatprep.subr.mxu0 %v2712
        %2743 = vmatpush1.msra.mxu0 %v2711
        %2744 = vmatprep.subr.mxu0 %v2708
        %2745 = vmatpush1.msra.mxu0 %v2707
        %2746 = vmatprep.subr.mxu0 %v2704
        %2747 = vmatpush1.msra.mxu0 %v2703
        %2748 = vmatprep.subr.mxu0 %v2700
        %2749 = vmatpush1.msra.mxu0 %v2699
        %2750 = vmatprep.subr.mxu0 0.0
        %2751 = vmatpush2.msra.mxu0 0.0
        %2752 = vmatprep.subr.mxu0 0.0
        %2753 = vmatpush2.msra.mxu0 0.0
        %2754 = vmatprep.subr.mxu0 0.0
        %2755 = vmatpush2.msra.mxu0 0.0
        %2756 = vmatprep.subr.mxu0 0.0
        %2757 = vmatpush2.msra.mxu0 0.0
        %2758 = vmatprep.subr.mxu0 0.0
        %2759 = vmatpush2.msra.mxu0 0.0
        %2760 = vmatprep.subr.mxu0 0.0
        %2761 = vmatpush2.msra.mxu0 0.0
        %2762 = vmatprep.subr.mxu0 0.0
        %2763 = vmatpush2.msra.mxu0 0.0
        %2764 = vmatprep.subr.mxu0 0.0
        %2765 = vmatpush2.msra.mxu0 0.0
        %2766 = vmatprep.subr.mxu0 0.0
        %2767 = vmatpush2.msra.mxu0 0.0
        %2768 = vmatprep.subr.mxu0 0.0
        %2769 = vmatpush2.msra.mxu0 0.0
        %2770 = vmatprep.subr.mxu0 0.0
        %2771 = vmatpush2.msra.mxu0 0.0
        %2772 = vmatprep.subr.mxu0 0.0
        %2773 = vmatpush2.msra.mxu0 0.0
        %2774 = vmatprep.subr.mxu0 0.0
        %2775 = vmatpush2.msra.mxu0 0.0
        %2776 = vmatprep.subr.mxu0 0.0
        %2777 = vmatpush2.msra.mxu0 0.0
        %2778 = vmatprep.subr.mxu0 0.0
        %2779 = vmatpush2.msra.mxu0 0.0
        %2780 = vmatprep.subr.mxu0 0.0
        %2781 = vmatpush2.msra.mxu0 0.0
        %2782 = vmatprep.mubr.f32.mxu0 0.0
        %2783 = vmatmul.mubr.f32.gmra.mxu0 %v2716
        %v2784 = vpop.f32.mrf.mxu0
        %v2785 = vadd.f32 0.0, %v2784
        %v2786 = vpop.f32.mrf.mxu0
        %v2787 = vadd.f32 0.0, %v2786
        %2788 = vdwg.mxu0
        %2789 = vmatprep.subr.mxu0 0.0
        %2790 = vmatpush1.msra.mxu0 0.0
        %2791 = vmatprep.subr.mxu0 0.0
        %2792 = vmatpush1.msra.mxu0 0.0
        %2793 = vmatprep.subr.mxu0 0.0
        %2794 = vmatpush1.msra.mxu0 0.0
        %2795 = vmatprep.subr.mxu0 0.0
        %2796 = vmatpush1.msra.mxu0 0.0
        %2797 = vmatprep.subr.mxu0 0.0
        %2798 = vmatpush1.msra.mxu0 0.0
        %2799 = vmatprep.subr.mxu0 0.0
        %2800 = vmatpush1.msra.mxu0 0.0
        %2801 = vmatprep.subr.mxu0 0.0
        %2802 = vmatpush1.msra.mxu0 0.0
        %2803 = vmatprep.subr.mxu0 0.0
        %2804 = vmatpush1.msra.mxu0 0.0
        %2805 = vmatprep.subr.mxu0 0.0
        %2806 = vmatpush1.msra.mxu0 0.0
        %2807 = vmatprep.subr.mxu0 0.0
        %2808 = vmatpush1.msra.mxu0 0.0
        %2809 = vmatprep.subr.mxu0 0.0
        %2810 = vmatpush1.msra.mxu0 0.0
        %2811 = vmatprep.subr.mxu0 0.0
        %2812 = vmatpush1.msra.mxu0 0.0
        %2813 = vmatprep.subr.mxu0 %v2714
        %2814 = vmatpush1.msra.mxu0 %v2713
        %2815 = vmatprep.subr.mxu0 %v2710
        %2816 = vmatpush1.msra.mxu0 %v2709
        %2817 = vmatprep.subr.mxu0 %v2706
        %2818 = vmatpush1.msra.mxu0 %v2705
        %2819 = vmatprep.subr.mxu0 %v2702
        %2820 = vmatpush1.msra.mxu0 %v2701
        %2821 = vmatprep.subr.mxu0 0.0
        %2822 = vmatpush2.msra.mxu0 0.0
        %2823 = vmatprep.subr.mxu0 0.0
        %2824 = vmatpush2.msra.mxu0 0.0
        %2825 = vmatprep.subr.mxu0 0.0
        %2826 = vmatpush2.msra.mxu0 0.0
        %2827 = vmatprep.subr.mxu0 0.0
        %2828 = vmatpush2.msra.mxu0 0.0
        %2829 = vmatprep.subr.mxu0 0.0
        %2830 = vmatpush2.msra.mxu0 0.0
        %2831 = vmatprep.subr.mxu0 0.0
        %2832 = vmatpush2.msra.mxu0 0.0
        %2833 = vmatprep.subr.mxu0 0.0
        %2834 = vmatpush2.msra.mxu0 0.0
        %2835 = vmatprep.subr.mxu0 0.0
        %2836 = vmatpush2.msra.mxu0 0.0
        %2837 = vmatprep.subr.mxu0 0.0
        %2838 = vmatpush2.msra.mxu0 0.0
        %2839 = vmatprep.subr.mxu0 0.0
        %2840 = vmatpush2.msra.mxu0 0.0
        %2841 = vmatprep.subr.mxu0 0.0
        %2842 = vmatpush2.msra.mxu0 0.0
        %2843 = vmatprep.subr.mxu0 0.0
        %2844 = vmatpush2.msra.mxu0 0.0
        %2845 = vmatprep.subr.mxu0 0.0
        %2846 = vmatpush2.msra.mxu0 0.0
        %2847 = vmatprep.subr.mxu0 0.0
        %2848 = vmatpush2.msra.mxu0 0.0
        %2849 = vmatprep.subr.mxu0 0.0
        %2850 = vmatpush2.msra.mxu0 0.0
        %2851 = vmatprep.subr.mxu0 0.0
        %2852 = vmatpush2.msra.mxu0 0.0
        %2853 = vmatprep.mubr.f32.mxu0 0.0
        %2854 = vmatmul.mubr.f32.gmra.mxu0 %v2716
        %v2855 = vpop.f32.mrf.mxu0
        %v2856 = vadd.f32 0.0, %v2855
        %v2857 = vpop.f32.mrf.mxu0
        %v2858 = vadd.f32 0.0, %v2857
        %2859 = vdwg.mxu0
        %v2864 = vcombine.low %v2785, %v2787
        %v2865 = vcombine.low %v2856, %v2858
        %v2867 = vunpack.c.l.s4 1966171168
        %v2868 = vunpack.c.0.s8 %v2867
        %v2869 = vlaneseq
        %v2870 = vshrl.u32 %v2869, 7
        %v2871 = vsub.s32 %v2868, %v2870
        %v2872 = vrot.slane %v2864, %v2871
        %v2874 = vunpack.c.l.s4 1966171168
        %v2875 = vunpack.c.0.s8 %v2874
        %v2876 = vlaneseq
        %v2877 = vshrl.u32 %v2876, 7
        %v2878 = vsub.s32 %v2875, %v2877
        %v2879 = vrot.slane %v2865, %v2878
        %v2880 = vcombine.low %v2872, %v2879
        %v2882 = vunpack.c.l.s4 1966171168
        %v2883 = vunpack.c.0.s8 %v2882
        %v2884 = vlaneseq
        %v2885 = vshrl.u32 %v2884, 7
        %v2886 = vsub.s32 %v2883, %v2885
        %v2887 = vrot.slane %v2880, %v2886
        %v2889 = vadd.f32 %v2698, %v2887
        %v2890 = vtanh.pop %v2889
        %v2891 = vmul.f32 %v2890, 0.5
        %v2892 = vadd.f32 %v2891, 0.5
        %v2894 = vrot.slane %v2890, 1
        %v2896 = vmul.f32 %v2894, 0.5
        %v2897 = vadd.f32 %v2896, 0.5
        %v2898 = vrot.slane %v2890, 3
        %v2900 = vmul.f32 %v2898, 0.5
        %v2901 = vadd.f32 %v2900, 0.5
        %v2902 = vmul.f32 %v2897, %v2480
        %v2903 = vrot.slane %v2890, 2
        %v2905 = vmul.f32 %v2892, %v2903
        %v2906 = vadd.f32 %v2902, %v2905
        %v2907 = vtanh.pop %v2906
        %v2908 = vmul.f32 %v2901, %v2907
        %2909 = vst.msk [vmem:[#allocation2 + $0x4] sm:$0x1] %vm1204, %v2696
        %2910 = vst.msk [vmem:[#allocation3 + $0x3] sm:$0x1] %vm1204, %v2908
        %s2911 = scalar_lea.vmem [#allocation4], 5
        %v2912 = vld [vmem:[%s2911] ss:$8 sm:$0xf]
        %v2913 = vld [vmem:[%s318] sm:$0xff]
        %v2914 = vld [vmem:[%s318 + $0x8] sm:$0xff]
        %v2915 = vld [vmem:[%s318 + $0x10] sm:$0xff]
        %v2916 = vld [vmem:[%s318 + $0x18] sm:$0xff]
        %v2917 = vld [vmem:[%s318 + $0x20] sm:$0xff]
        %v2918 = vld [vmem:[%s318 + $0x28] sm:$0xff]
        %v2919 = vld [vmem:[%s318 + $0x30] sm:$0xff]
        %v2920 = vld [vmem:[%s318 + $0x38] sm:$0xff]
        %v2921 = vld [vmem:[%s318 + $0x40] sm:$0xff]
        %v2922 = vld [vmem:[%s318 + $0x48] sm:$0xff]
        %v2923 = vld [vmem:[%s318 + $0x50] sm:$0xff]
        %v2924 = vld [vmem:[%s318 + $0x58] sm:$0xff]
        %v2925 = vld [vmem:[%s318 + $0x60] sm:$0xff]
        %v2926 = vld [vmem:[%s318 + $0x68] sm:$0xff]
        %v2927 = vld [vmem:[%s318 + $0x70] sm:$0xff]
        %v2928 = vld [vmem:[%s318 + $0x78] sm:$0xff]
        %v2930 = vsel %vm799, %v2696, 0
        %2932 = vmatprep.subr.mxu0 0.0
        %2933 = vmatpush1.msra.mxu0 0.0
        %2934 = vmatprep.subr.mxu0 0.0
        %2935 = vmatpush1.msra.mxu0 0.0
        %2936 = vmatprep.subr.mxu0 0.0
        %2937 = vmatpush1.msra.mxu0 0.0
        %2938 = vmatprep.subr.mxu0 0.0
        %2939 = vmatpush1.msra.mxu0 0.0
        %2940 = vmatprep.subr.mxu0 0.0
        %2941 = vmatpush1.msra.mxu0 0.0
        %2942 = vmatprep.subr.mxu0 0.0
        %2943 = vmatpush1.msra.mxu0 0.0
        %2944 = vmatprep.subr.mxu0 0.0
        %2945 = vmatpush1.msra.mxu0 0.0
        %2946 = vmatprep.subr.mxu0 0.0
        %2947 = vmatpush1.msra.mxu0 0.0
        %2948 = vmatprep.subr.mxu0 0.0
        %2949 = vmatpush1.msra.mxu0 0.0
        %2950 = vmatprep.subr.mxu0 0.0
        %2951 = vmatpush1.msra.mxu0 0.0
        %2952 = vmatprep.subr.mxu0 0.0
        %2953 = vmatpush1.msra.mxu0 0.0
        %2954 = vmatprep.subr.mxu0 0.0
        %2955 = vmatpush1.msra.mxu0 0.0
        %2956 = vmatprep.subr.mxu0 %v2926
        %2957 = vmatpush1.msra.mxu0 %v2925
        %2958 = vmatprep.subr.mxu0 %v2922
        %2959 = vmatpush1.msra.mxu0 %v2921
        %2960 = vmatprep.subr.mxu0 %v2918
        %2961 = vmatpush1.msra.mxu0 %v2917
        %2962 = vmatprep.subr.mxu0 %v2914
        %2963 = vmatpush1.msra.mxu0 %v2913
        %2964 = vmatprep.subr.mxu0 0.0
        %2965 = vmatpush2.msra.mxu0 0.0
        %2966 = vmatprep.subr.mxu0 0.0
        %2967 = vmatpush2.msra.mxu0 0.0
        %2968 = vmatprep.subr.mxu0 0.0
        %2969 = vmatpush2.msra.mxu0 0.0
        %2970 = vmatprep.subr.mxu0 0.0
        %2971 = vmatpush2.msra.mxu0 0.0
        %2972 = vmatprep.subr.mxu0 0.0
        %2973 = vmatpush2.msra.mxu0 0.0
        %2974 = vmatprep.subr.mxu0 0.0
        %2975 = vmatpush2.msra.mxu0 0.0
        %2976 = vmatprep.subr.mxu0 0.0
        %2977 = vmatpush2.msra.mxu0 0.0
        %2978 = vmatprep.subr.mxu0 0.0
        %2979 = vmatpush2.msra.mxu0 0.0
        %2980 = vmatprep.subr.mxu0 0.0
        %2981 = vmatpush2.msra.mxu0 0.0
        %2982 = vmatprep.subr.mxu0 0.0
        %2983 = vmatpush2.msra.mxu0 0.0
        %2984 = vmatprep.subr.mxu0 0.0
        %2985 = vmatpush2.msra.mxu0 0.0
        %2986 = vmatprep.subr.mxu0 0.0
        %2987 = vmatpush2.msra.mxu0 0.0
        %2988 = vmatprep.subr.mxu0 0.0
        %2989 = vmatpush2.msra.mxu0 0.0
        %2990 = vmatprep.subr.mxu0 0.0
        %2991 = vmatpush2.msra.mxu0 0.0
        %2992 = vmatprep.subr.mxu0 0.0
        %2993 = vmatpush2.msra.mxu0 0.0
        %2994 = vmatprep.subr.mxu0 0.0
        %2995 = vmatpush2.msra.mxu0 0.0
        %2996 = vmatprep.mubr.f32.mxu0 0.0
        %2997 = vmatmul.mubr.f32.gmra.mxu0 %v2930
        %v2998 = vpop.f32.mrf.mxu0
        %v2999 = vadd.f32 0.0, %v2998
        %v3000 = vpop.f32.mrf.mxu0
        %v3001 = vadd.f32 0.0, %v3000
        %3002 = vdwg.mxu0
        %3003 = vmatprep.subr.mxu0 0.0
        %3004 = vmatpush1.msra.mxu0 0.0
        %3005 = vmatprep.subr.mxu0 0.0
        %3006 = vmatpush1.msra.mxu0 0.0
        %3007 = vmatprep.subr.mxu0 0.0
        %3008 = vmatpush1.msra.mxu0 0.0
        %3009 = vmatprep.subr.mxu0 0.0
        %3010 = vmatpush1.msra.mxu0 0.0
        %3011 = vmatprep.subr.mxu0 0.0
        %3012 = vmatpush1.msra.mxu0 0.0
        %3013 = vmatprep.subr.mxu0 0.0
        %3014 = vmatpush1.msra.mxu0 0.0
        %3015 = vmatprep.subr.mxu0 0.0
        %3016 = vmatpush1.msra.mxu0 0.0
        %3017 = vmatprep.subr.mxu0 0.0
        %3018 = vmatpush1.msra.mxu0 0.0
        %3019 = vmatprep.subr.mxu0 0.0
        %3020 = vmatpush1.msra.mxu0 0.0
        %3021 = vmatprep.subr.mxu0 0.0
        %3022 = vmatpush1.msra.mxu0 0.0
        %3023 = vmatprep.subr.mxu0 0.0
        %3024 = vmatpush1.msra.mxu0 0.0
        %3025 = vmatprep.subr.mxu0 0.0
        %3026 = vmatpush1.msra.mxu0 0.0
        %3027 = vmatprep.subr.mxu0 %v2928
        %3028 = vmatpush1.msra.mxu0 %v2927
        %3029 = vmatprep.subr.mxu0 %v2924
        %3030 = vmatpush1.msra.mxu0 %v2923
        %3031 = vmatprep.subr.mxu0 %v2920
        %3032 = vmatpush1.msra.mxu0 %v2919
        %3033 = vmatprep.subr.mxu0 %v2916
        %3034 = vmatpush1.msra.mxu0 %v2915
        %3035 = vmatprep.subr.mxu0 0.0
        %3036 = vmatpush2.msra.mxu0 0.0
        %3037 = vmatprep.subr.mxu0 0.0
        %3038 = vmatpush2.msra.mxu0 0.0
        %3039 = vmatprep.subr.mxu0 0.0
        %3040 = vmatpush2.msra.mxu0 0.0
        %3041 = vmatprep.subr.mxu0 0.0
        %3042 = vmatpush2.msra.mxu0 0.0
        %3043 = vmatprep.subr.mxu0 0.0
        %3044 = vmatpush2.msra.mxu0 0.0
        %3045 = vmatprep.subr.mxu0 0.0
        %3046 = vmatpush2.msra.mxu0 0.0
        %3047 = vmatprep.subr.mxu0 0.0
        %3048 = vmatpush2.msra.mxu0 0.0
        %3049 = vmatprep.subr.mxu0 0.0
        %3050 = vmatpush2.msra.mxu0 0.0
        %3051 = vmatprep.subr.mxu0 0.0
        %3052 = vmatpush2.msra.mxu0 0.0
        %3053 = vmatprep.subr.mxu0 0.0
        %3054 = vmatpush2.msra.mxu0 0.0
        %3055 = vmatprep.subr.mxu0 0.0
        %3056 = vmatpush2.msra.mxu0 0.0
        %3057 = vmatprep.subr.mxu0 0.0
        %3058 = vmatpush2.msra.mxu0 0.0
        %3059 = vmatprep.subr.mxu0 0.0
        %3060 = vmatpush2.msra.mxu0 0.0
        %3061 = vmatprep.subr.mxu0 0.0
        %3062 = vmatpush2.msra.mxu0 0.0
        %3063 = vmatprep.subr.mxu0 0.0
        %3064 = vmatpush2.msra.mxu0 0.0
        %3065 = vmatprep.subr.mxu0 0.0
        %3066 = vmatpush2.msra.mxu0 0.0
        %3067 = vmatprep.mubr.f32.mxu0 0.0
        %3068 = vmatmul.mubr.f32.gmra.mxu0 %v2930
        %v3069 = vpop.f32.mrf.mxu0
        %v3070 = vadd.f32 0.0, %v3069
        %v3071 = vpop.f32.mrf.mxu0
        %v3072 = vadd.f32 0.0, %v3071
        %3073 = vdwg.mxu0
        %v3078 = vcombine.low %v2999, %v3001
        %v3079 = vcombine.low %v3070, %v3072
        %v3081 = vunpack.c.l.s4 1966171168
        %v3082 = vunpack.c.0.s8 %v3081
        %v3083 = vlaneseq
        %v3084 = vshrl.u32 %v3083, 7
        %v3085 = vsub.s32 %v3082, %v3084
        %v3086 = vrot.slane %v3078, %v3085
        %v3088 = vunpack.c.l.s4 1966171168
        %v3089 = vunpack.c.0.s8 %v3088
        %v3090 = vlaneseq
        %v3091 = vshrl.u32 %v3090, 7
        %v3092 = vsub.s32 %v3089, %v3091
        %v3093 = vrot.slane %v3079, %v3092
        %v3094 = vcombine.low %v3086, %v3093
        %v3096 = vunpack.c.l.s4 1966171168
        %v3097 = vunpack.c.0.s8 %v3096
        %v3098 = vlaneseq
        %v3099 = vshrl.u32 %v3098, 7
        %v3100 = vsub.s32 %v3097, %v3099
        %v3101 = vrot.slane %v3094, %v3100
        %v3103 = vadd.f32 %v2912, %v3101
        %v3104 = vtanh.pop %v3103
        %v3105 = vmul.f32 %v3104, 0.5
        %v3106 = vadd.f32 %v3105, 0.5
        %v3108 = vrot.slane %v3104, 1
        %v3110 = vmul.f32 %v3108, 0.5
        %v3111 = vadd.f32 %v3110, 0.5
        %v3112 = vrot.slane %v3104, 3
        %v3114 = vmul.f32 %v3112, 0.5
        %v3115 = vadd.f32 %v3114, 0.5
        %v3116 = vmul.f32 %v3111, %v2694
        %v3117 = vrot.slane %v3104, 2
        %v3119 = vmul.f32 %v3106, %v3117
        %v3120 = vadd.f32 %v3116, %v3119
        %v3121 = vtanh.pop %v3120
        %v3122 = vmul.f32 %v3115, %v3121
        %s3123 = scalar_lea.vmem [#allocation5], 2
        %v3124 = vld [vmem:[%s3123] ss:$8 sm:$0xf]
        %v3125 = vld [vmem:[%s996] sm:$0xff]
        %v3126 = vld [vmem:[%s996 + $0x8] sm:$0xff]
        %v3127 = vld [vmem:[%s996 + $0x10] sm:$0xff]
        %v3128 = vld [vmem:[%s996 + $0x18] sm:$0xff]
        %v3129 = vld [vmem:[%s996 + $0x20] sm:$0xff]
        %v3130 = vld [vmem:[%s996 + $0x28] sm:$0xff]
        %v3131 = vld [vmem:[%s996 + $0x30] sm:$0xff]
        %v3132 = vld [vmem:[%s996 + $0x38] sm:$0xff]
        %v3133 = vld [vmem:[%s996 + $0x40] sm:$0xff]
        %v3134 = vld [vmem:[%s996 + $0x48] sm:$0xff]
        %v3135 = vld [vmem:[%s996 + $0x50] sm:$0xff]
        %v3136 = vld [vmem:[%s996 + $0x58] sm:$0xff]
        %v3137 = vld [vmem:[%s996 + $0x60] sm:$0xff]
        %v3138 = vld [vmem:[%s996 + $0x68] sm:$0xff]
        %v3139 = vld [vmem:[%s996 + $0x70] sm:$0xff]
        %v3140 = vld [vmem:[%s996 + $0x78] sm:$0xff]
        %v3142 = vsel %vm799, %v2908, 0
        %3144 = vmatprep.subr.mxu0 0.0
        %3145 = vmatpush1.msra.mxu0 0.0
        %3146 = vmatprep.subr.mxu0 0.0
        %3147 = vmatpush1.msra.mxu0 0.0
        %3148 = vmatprep.subr.mxu0 0.0
        %3149 = vmatpush1.msra.mxu0 0.0
        %3150 = vmatprep.subr.mxu0 0.0
        %3151 = vmatpush1.msra.mxu0 0.0
        %3152 = vmatprep.subr.mxu0 0.0
        %3153 = vmatpush1.msra.mxu0 0.0
        %3154 = vmatprep.subr.mxu0 0.0
        %3155 = vmatpush1.msra.mxu0 0.0
        %3156 = vmatprep.subr.mxu0 0.0
        %3157 = vmatpush1.msra.mxu0 0.0
        %3158 = vmatprep.subr.mxu0 0.0
        %3159 = vmatpush1.msra.mxu0 0.0
        %3160 = vmatprep.subr.mxu0 0.0
        %3161 = vmatpush1.msra.mxu0 0.0
        %3162 = vmatprep.subr.mxu0 0.0
        %3163 = vmatpush1.msra.mxu0 0.0
        %3164 = vmatprep.subr.mxu0 0.0
        %3165 = vmatpush1.msra.mxu0 0.0
        %3166 = vmatprep.subr.mxu0 0.0
        %3167 = vmatpush1.msra.mxu0 0.0
        %3168 = vmatprep.subr.mxu0 %v3138
        %3169 = vmatpush1.msra.mxu0 %v3137
        %3170 = vmatprep.subr.mxu0 %v3134
        %3171 = vmatpush1.msra.mxu0 %v3133
        %3172 = vmatprep.subr.mxu0 %v3130
        %3173 = vmatpush1.msra.mxu0 %v3129
        %3174 = vmatprep.subr.mxu0 %v3126
        %3175 = vmatpush1.msra.mxu0 %v3125
        %3176 = vmatprep.subr.mxu0 0.0
        %3177 = vmatpush2.msra.mxu0 0.0
        %3178 = vmatprep.subr.mxu0 0.0
        %3179 = vmatpush2.msra.mxu0 0.0
        %3180 = vmatprep.subr.mxu0 0.0
        %3181 = vmatpush2.msra.mxu0 0.0
        %3182 = vmatprep.subr.mxu0 0.0
        %3183 = vmatpush2.msra.mxu0 0.0
        %3184 = vmatprep.subr.mxu0 0.0
        %3185 = vmatpush2.msra.mxu0 0.0
        %3186 = vmatprep.subr.mxu0 0.0
        %3187 = vmatpush2.msra.mxu0 0.0
        %3188 = vmatprep.subr.mxu0 0.0
        %3189 = vmatpush2.msra.mxu0 0.0
        %3190 = vmatprep.subr.mxu0 0.0
        %3191 = vmatpush2.msra.mxu0 0.0
        %3192 = vmatprep.subr.mxu0 0.0
        %3193 = vmatpush2.msra.mxu0 0.0
        %3194 = vmatprep.subr.mxu0 0.0
        %3195 = vmatpush2.msra.mxu0 0.0
        %3196 = vmatprep.subr.mxu0 0.0
        %3197 = vmatpush2.msra.mxu0 0.0
        %3198 = vmatprep.subr.mxu0 0.0
        %3199 = vmatpush2.msra.mxu0 0.0
        %3200 = vmatprep.subr.mxu0 0.0
        %3201 = vmatpush2.msra.mxu0 0.0
        %3202 = vmatprep.subr.mxu0 0.0
        %3203 = vmatpush2.msra.mxu0 0.0
        %3204 = vmatprep.subr.mxu0 0.0
        %3205 = vmatpush2.msra.mxu0 0.0
        %3206 = vmatprep.subr.mxu0 0.0
        %3207 = vmatpush2.msra.mxu0 0.0
        %3208 = vmatprep.mubr.f32.mxu0 0.0
        %3209 = vmatmul.mubr.f32.gmra.mxu0 %v3142
        %v3210 = vpop.f32.mrf.mxu0
        %v3211 = vadd.f32 0.0, %v3210
        %v3212 = vpop.f32.mrf.mxu0
        %v3213 = vadd.f32 0.0, %v3212
        %3214 = vdwg.mxu0
        %3215 = vmatprep.subr.mxu0 0.0
        %3216 = vmatpush1.msra.mxu0 0.0
        %3217 = vmatprep.subr.mxu0 0.0
        %3218 = vmatpush1.msra.mxu0 0.0
        %3219 = vmatprep.subr.mxu0 0.0
        %3220 = vmatpush1.msra.mxu0 0.0
        %3221 = vmatprep.subr.mxu0 0.0
        %3222 = vmatpush1.msra.mxu0 0.0
        %3223 = vmatprep.subr.mxu0 0.0
        %3224 = vmatpush1.msra.mxu0 0.0
        %3225 = vmatprep.subr.mxu0 0.0
        %3226 = vmatpush1.msra.mxu0 0.0
        %3227 = vmatprep.subr.mxu0 0.0
        %3228 = vmatpush1.msra.mxu0 0.0
        %3229 = vmatprep.subr.mxu0 0.0
        %3230 = vmatpush1.msra.mxu0 0.0
        %3231 = vmatprep.subr.mxu0 0.0
        %3232 = vmatpush1.msra.mxu0 0.0
        %3233 = vmatprep.subr.mxu0 0.0
        %3234 = vmatpush1.msra.mxu0 0.0
        %3235 = vmatprep.subr.mxu0 0.0
        %3236 = vmatpush1.msra.mxu0 0.0
        %3237 = vmatprep.subr.mxu0 0.0
        %3238 = vmatpush1.msra.mxu0 0.0
        %3239 = vmatprep.subr.mxu0 %v3140
        %3240 = vmatpush1.msra.mxu0 %v3139
        %3241 = vmatprep.subr.mxu0 %v3136
        %3242 = vmatpush1.msra.mxu0 %v3135
        %3243 = vmatprep.subr.mxu0 %v3132
        %3244 = vmatpush1.msra.mxu0 %v3131
        %3245 = vmatprep.subr.mxu0 %v3128
        %3246 = vmatpush1.msra.mxu0 %v3127
        %3247 = vmatprep.subr.mxu0 0.0
        %3248 = vmatpush2.msra.mxu0 0.0
        %3249 = vmatprep.subr.mxu0 0.0
        %3250 = vmatpush2.msra.mxu0 0.0
        %3251 = vmatprep.subr.mxu0 0.0
        %3252 = vmatpush2.msra.mxu0 0.0
        %3253 = vmatprep.subr.mxu0 0.0
        %3254 = vmatpush2.msra.mxu0 0.0
        %3255 = vmatprep.subr.mxu0 0.0
        %3256 = vmatpush2.msra.mxu0 0.0
        %3257 = vmatprep.subr.mxu0 0.0
        %3258 = vmatpush2.msra.mxu0 0.0
        %3259 = vmatprep.subr.mxu0 0.0
        %3260 = vmatpush2.msra.mxu0 0.0
        %3261 = vmatprep.subr.mxu0 0.0
        %3262 = vmatpush2.msra.mxu0 0.0
        %3263 = vmatprep.subr.mxu0 0.0
        %3264 = vmatpush2.msra.mxu0 0.0
        %3265 = vmatprep.subr.mxu0 0.0
        %3266 = vmatpush2.msra.mxu0 0.0
        %3267 = vmatprep.subr.mxu0 0.0
        %3268 = vmatpush2.msra.mxu0 0.0
        %3269 = vmatprep.subr.mxu0 0.0
        %3270 = vmatpush2.msra.mxu0 0.0
        %3271 = vmatprep.subr.mxu0 0.0
        %3272 = vmatpush2.msra.mxu0 0.0
        %3273 = vmatprep.subr.mxu0 0.0
        %3274 = vmatpush2.msra.mxu0 0.0
        %3275 = vmatprep.subr.mxu0 0.0
        %3276 = vmatpush2.msra.mxu0 0.0
        %3277 = vmatprep.subr.mxu0 0.0
        %3278 = vmatpush2.msra.mxu0 0.0
        %3279 = vmatprep.mubr.f32.mxu0 0.0
        %3280 = vmatmul.mubr.f32.gmra.mxu0 %v3142
        %v3281 = vpop.f32.mrf.mxu0
        %v3282 = vadd.f32 0.0, %v3281
        %v3283 = vpop.f32.mrf.mxu0
        %v3284 = vadd.f32 0.0, %v3283
        %3285 = vdwg.mxu0
        %v3290 = vcombine.low %v3211, %v3213
        %v3291 = vcombine.low %v3282, %v3284
        %v3293 = vunpack.c.l.s4 1966171168
        %v3294 = vunpack.c.0.s8 %v3293
        %v3295 = vlaneseq
        %v3296 = vshrl.u32 %v3295, 7
        %v3297 = vsub.s32 %v3294, %v3296
        %v3298 = vrot.slane %v3290, %v3297
        %v3300 = vunpack.c.l.s4 1966171168
        %v3301 = vunpack.c.0.s8 %v3300
        %v3302 = vlaneseq
        %v3303 = vshrl.u32 %v3302, 7
        %v3304 = vsub.s32 %v3301, %v3303
        %v3305 = vrot.slane %v3291, %v3304
        %v3306 = vcombine.low %v3298, %v3305
        %v3308 = vunpack.c.l.s4 1966171168
        %v3309 = vunpack.c.0.s8 %v3308
        %v3310 = vlaneseq
        %v3311 = vshrl.u32 %v3310, 7
        %v3312 = vsub.s32 %v3309, %v3311
        %v3313 = vrot.slane %v3306, %v3312
        %v3315 = vadd.f32 %v3124, %v3313
        %v3316 = vtanh.pop %v3315
        %v3317 = vmul.f32 %v3316, 0.5
        %v3318 = vadd.f32 %v3317, 0.5
        %v3320 = vrot.slane %v3316, 1
        %v3322 = vmul.f32 %v3320, 0.5
        %v3323 = vadd.f32 %v3322, 0.5
        %v3324 = vrot.slane %v3316, 3
        %v3326 = vmul.f32 %v3324, 0.5
        %v3327 = vadd.f32 %v3326, 0.5
        %v3328 = vmul.f32 %v3323, %v2906
        %v3329 = vrot.slane %v3316, 2
        %v3331 = vmul.f32 %v3318, %v3329
        %v3332 = vadd.f32 %v3328, %v3331
        %v3333 = vtanh.pop %v3332
        %v3334 = vmul.f32 %v3327, %v3333
        %3335 = vst.msk [vmem:[#allocation2 + $0x5] sm:$0x1] %vm1204, %v3122
        %3336 = vst.msk [vmem:[#allocation3 + $0x2] sm:$0x1] %vm1204, %v3334
        %s3337 = scalar_lea.vmem [#allocation4], 6
        %v3338 = vld [vmem:[%s3337] ss:$8 sm:$0xf]
        %v3339 = vld [vmem:[%s318] sm:$0xff]
        %v3340 = vld [vmem:[%s318 + $0x8] sm:$0xff]
        %v3341 = vld [vmem:[%s318 + $0x10] sm:$0xff]
        %v3342 = vld [vmem:[%s318 + $0x18] sm:$0xff]
        %v3343 = vld [vmem:[%s318 + $0x20] sm:$0xff]
        %v3344 = vld [vmem:[%s318 + $0x28] sm:$0xff]
        %v3345 = vld [vmem:[%s318 + $0x30] sm:$0xff]
        %v3346 = vld [vmem:[%s318 + $0x38] sm:$0xff]
        %v3347 = vld [vmem:[%s318 + $0x40] sm:$0xff]
        %v3348 = vld [vmem:[%s318 + $0x48] sm:$0xff]
        %v3349 = vld [vmem:[%s318 + $0x50] sm:$0xff]
        %v3350 = vld [vmem:[%s318 + $0x58] sm:$0xff]
        %v3351 = vld [vmem:[%s318 + $0x60] sm:$0xff]
        %v3352 = vld [vmem:[%s318 + $0x68] sm:$0xff]
        %v3353 = vld [vmem:[%s318 + $0x70] sm:$0xff]
        %v3354 = vld [vmem:[%s318 + $0x78] sm:$0xff]
        %v3356 = vsel %vm799, %v3122, 0
        %3358 = vmatprep.subr.mxu0 0.0
        %3359 = vmatpush1.msra.mxu0 0.0
        %3360 = vmatprep.subr.mxu0 0.0
        %3361 = vmatpush1.msra.mxu0 0.0
        %3362 = vmatprep.subr.mxu0 0.0
        %3363 = vmatpush1.msra.mxu0 0.0
        %3364 = vmatprep.subr.mxu0 0.0
        %3365 = vmatpush1.msra.mxu0 0.0
        %3366 = vmatprep.subr.mxu0 0.0
        %3367 = vmatpush1.msra.mxu0 0.0
        %3368 = vmatprep.subr.mxu0 0.0
        %3369 = vmatpush1.msra.mxu0 0.0
        %3370 = vmatprep.subr.mxu0 0.0
        %3371 = vmatpush1.msra.mxu0 0.0
        %3372 = vmatprep.subr.mxu0 0.0
        %3373 = vmatpush1.msra.mxu0 0.0
        %3374 = vmatprep.subr.mxu0 0.0
        %3375 = vmatpush1.msra.mxu0 0.0
        %3376 = vmatprep.subr.mxu0 0.0
        %3377 = vmatpush1.msra.mxu0 0.0
        %3378 = vmatprep.subr.mxu0 0.0
        %3379 = vmatpush1.msra.mxu0 0.0
        %3380 = vmatprep.subr.mxu0 0.0
        %3381 = vmatpush1.msra.mxu0 0.0
        %3382 = vmatprep.subr.mxu0 %v3352
        %3383 = vmatpush1.msra.mxu0 %v3351
        %3384 = vmatprep.subr.mxu0 %v3348
        %3385 = vmatpush1.msra.mxu0 %v3347
        %3386 = vmatprep.subr.mxu0 %v3344
        %3387 = vmatpush1.msra.mxu0 %v3343
        %3388 = vmatprep.subr.mxu0 %v3340
        %3389 = vmatpush1.msra.mxu0 %v3339
        %3390 = vmatprep.subr.mxu0 0.0
        %3391 = vmatpush2.msra.mxu0 0.0
        %3392 = vmatprep.subr.mxu0 0.0
        %3393 = vmatpush2.msra.mxu0 0.0
        %3394 = vmatprep.subr.mxu0 0.0
        %3395 = vmatpush2.msra.mxu0 0.0
        %3396 = vmatprep.subr.mxu0 0.0
        %3397 = vmatpush2.msra.mxu0 0.0
        %3398 = vmatprep.subr.mxu0 0.0
        %3399 = vmatpush2.msra.mxu0 0.0
        %3400 = vmatprep.subr.mxu0 0.0
        %3401 = vmatpush2.msra.mxu0 0.0
        %3402 = vmatprep.subr.mxu0 0.0
        %3403 = vmatpush2.msra.mxu0 0.0
        %3404 = vmatprep.subr.mxu0 0.0
        %3405 = vmatpush2.msra.mxu0 0.0
        %3406 = vmatprep.subr.mxu0 0.0
        %3407 = vmatpush2.msra.mxu0 0.0
        %3408 = vmatprep.subr.mxu0 0.0
        %3409 = vmatpush2.msra.mxu0 0.0
        %3410 = vmatprep.subr.mxu0 0.0
        %3411 = vmatpush2.msra.mxu0 0.0
        %3412 = vmatprep.subr.mxu0 0.0
        %3413 = vmatpush2.msra.mxu0 0.0
        %3414 = vmatprep.subr.mxu0 0.0
        %3415 = vmatpush2.msra.mxu0 0.0
        %3416 = vmatprep.subr.mxu0 0.0
        %3417 = vmatpush2.msra.mxu0 0.0
        %3418 = vmatprep.subr.mxu0 0.0
        %3419 = vmatpush2.msra.mxu0 0.0
        %3420 = vmatprep.subr.mxu0 0.0
        %3421 = vmatpush2.msra.mxu0 0.0
        %3422 = vmatprep.mubr.f32.mxu0 0.0
        %3423 = vmatmul.mubr.f32.gmra.mxu0 %v3356
        %v3424 = vpop.f32.mrf.mxu0
        %v3425 = vadd.f32 0.0, %v3424
        %v3426 = vpop.f32.mrf.mxu0
        %v3427 = vadd.f32 0.0, %v3426
        %3428 = vdwg.mxu0
        %3429 = vmatprep.subr.mxu0 0.0
        %3430 = vmatpush1.msra.mxu0 0.0
        %3431 = vmatprep.subr.mxu0 0.0
        %3432 = vmatpush1.msra.mxu0 0.0
        %3433 = vmatprep.subr.mxu0 0.0
        %3434 = vmatpush1.msra.mxu0 0.0
        %3435 = vmatprep.subr.mxu0 0.0
        %3436 = vmatpush1.msra.mxu0 0.0
        %3437 = vmatprep.subr.mxu0 0.0
        %3438 = vmatpush1.msra.mxu0 0.0
        %3439 = vmatprep.subr.mxu0 0.0
        %3440 = vmatpush1.msra.mxu0 0.0
        %3441 = vmatprep.subr.mxu0 0.0
        %3442 = vmatpush1.msra.mxu0 0.0
        %3443 = vmatprep.subr.mxu0 0.0
        %3444 = vmatpush1.msra.mxu0 0.0
        %3445 = vmatprep.subr.mxu0 0.0
        %3446 = vmatpush1.msra.mxu0 0.0
        %3447 = vmatprep.subr.mxu0 0.0
        %3448 = vmatpush1.msra.mxu0 0.0
        %3449 = vmatprep.subr.mxu0 0.0
        %3450 = vmatpush1.msra.mxu0 0.0
        %3451 = vmatprep.subr.mxu0 0.0
        %3452 = vmatpush1.msra.mxu0 0.0
        %3453 = vmatprep.subr.mxu0 %v3354
        %3454 = vmatpush1.msra.mxu0 %v3353
        %3455 = vmatprep.subr.mxu0 %v3350
        %3456 = vmatpush1.msra.mxu0 %v3349
        %3457 = vmatprep.subr.mxu0 %v3346
        %3458 = vmatpush1.msra.mxu0 %v3345
        %3459 = vmatprep.subr.mxu0 %v3342
        %3460 = vmatpush1.msra.mxu0 %v3341
        %3461 = vmatprep.subr.mxu0 0.0
        %3462 = vmatpush2.msra.mxu0 0.0
        %3463 = vmatprep.subr.mxu0 0.0
        %3464 = vmatpush2.msra.mxu0 0.0
        %3465 = vmatprep.subr.mxu0 0.0
        %3466 = vmatpush2.msra.mxu0 0.0
        %3467 = vmatprep.subr.mxu0 0.0
        %3468 = vmatpush2.msra.mxu0 0.0
        %3469 = vmatprep.subr.mxu0 0.0
        %3470 = vmatpush2.msra.mxu0 0.0
        %3471 = vmatprep.subr.mxu0 0.0
        %3472 = vmatpush2.msra.mxu0 0.0
        %3473 = vmatprep.subr.mxu0 0.0
        %3474 = vmatpush2.msra.mxu0 0.0
        %3475 = vmatprep.subr.mxu0 0.0
        %3476 = vmatpush2.msra.mxu0 0.0
        %3477 = vmatprep.subr.mxu0 0.0
        %3478 = vmatpush2.msra.mxu0 0.0
        %3479 = vmatprep.subr.mxu0 0.0
        %3480 = vmatpush2.msra.mxu0 0.0
        %3481 = vmatprep.subr.mxu0 0.0
        %3482 = vmatpush2.msra.mxu0 0.0
        %3483 = vmatprep.subr.mxu0 0.0
        %3484 = vmatpush2.msra.mxu0 0.0
        %3485 = vmatprep.subr.mxu0 0.0
        %3486 = vmatpush2.msra.mxu0 0.0
        %3487 = vmatprep.subr.mxu0 0.0
        %3488 = vmatpush2.msra.mxu0 0.0
        %3489 = vmatprep.subr.mxu0 0.0
        %3490 = vmatpush2.msra.mxu0 0.0
        %3491 = vmatprep.subr.mxu0 0.0
        %3492 = vmatpush2.msra.mxu0 0.0
        %3493 = vmatprep.mubr.f32.mxu0 0.0
        %3494 = vmatmul.mubr.f32.gmra.mxu0 %v3356
        %v3495 = vpop.f32.mrf.mxu0
        %v3496 = vadd.f32 0.0, %v3495
        %v3497 = vpop.f32.mrf.mxu0
        %v3498 = vadd.f32 0.0, %v3497
        %3499 = vdwg.mxu0
        %v3504 = vcombine.low %v3425, %v3427
        %v3505 = vcombine.low %v3496, %v3498
        %v3507 = vunpack.c.l.s4 1966171168
        %v3508 = vunpack.c.0.s8 %v3507
        %v3509 = vlaneseq
        %v3510 = vshrl.u32 %v3509, 7
        %v3511 = vsub.s32 %v3508, %v3510
        %v3512 = vrot.slane %v3504, %v3511
        %v3514 = vunpack.c.l.s4 1966171168
        %v3515 = vunpack.c.0.s8 %v3514
        %v3516 = vlaneseq
        %v3517 = vshrl.u32 %v3516, 7
        %v3518 = vsub.s32 %v3515, %v3517
        %v3519 = vrot.slane %v3505, %v3518
        %v3520 = vcombine.low %v3512, %v3519
        %v3522 = vunpack.c.l.s4 1966171168
        %v3523 = vunpack.c.0.s8 %v3522
        %v3524 = vlaneseq
        %v3525 = vshrl.u32 %v3524, 7
        %v3526 = vsub.s32 %v3523, %v3525
        %v3527 = vrot.slane %v3520, %v3526
        %v3529 = vadd.f32 %v3338, %v3527
        %v3530 = vtanh.pop %v3529
        %v3531 = vmul.f32 %v3530, 0.5
        %v3532 = vadd.f32 %v3531, 0.5
        %v3534 = vrot.slane %v3530, 1
        %v3536 = vmul.f32 %v3534, 0.5
        %v3537 = vadd.f32 %v3536, 0.5
        %v3538 = vrot.slane %v3530, 3
        %v3540 = vmul.f32 %v3538, 0.5
        %v3541 = vadd.f32 %v3540, 0.5
        %v3542 = vmul.f32 %v3537, %v3120
        %v3543 = vrot.slane %v3530, 2
        %v3545 = vmul.f32 %v3532, %v3543
        %v3546 = vadd.f32 %v3542, %v3545
        %v3547 = vtanh.pop %v3546
        %v3548 = vmul.f32 %v3541, %v3547
        %s3549 = scalar_lea.vmem [#allocation5], 1
        %v3550 = vld [vmem:[%s3549] ss:$8 sm:$0xf]
        %v3551 = vld [vmem:[%s996] sm:$0xff]
        %v3552 = vld [vmem:[%s996 + $0x8] sm:$0xff]
        %v3553 = vld [vmem:[%s996 + $0x10] sm:$0xff]
        %v3554 = vld [vmem:[%s996 + $0x18] sm:$0xff]
        %v3555 = vld [vmem:[%s996 + $0x20] sm:$0xff]
        %v3556 = vld [vmem:[%s996 + $0x28] sm:$0xff]
        %v3557 = vld [vmem:[%s996 + $0x30] sm:$0xff]
        %v3558 = vld [vmem:[%s996 + $0x38] sm:$0xff]
        %v3559 = vld [vmem:[%s996 + $0x40] sm:$0xff]
        %v3560 = vld [vmem:[%s996 + $0x48] sm:$0xff]
        %v3561 = vld [vmem:[%s996 + $0x50] sm:$0xff]
        %v3562 = vld [vmem:[%s996 + $0x58] sm:$0xff]
        %v3563 = vld [vmem:[%s996 + $0x60] sm:$0xff]
        %v3564 = vld [vmem:[%s996 + $0x68] sm:$0xff]
        %v3565 = vld [vmem:[%s996 + $0x70] sm:$0xff]
        %v3566 = vld [vmem:[%s996 + $0x78] sm:$0xff]
        %v3568 = vsel %vm799, %v3334, 0
        %3570 = vmatprep.subr.mxu0 0.0
        %3571 = vmatpush1.msra.mxu0 0.0
        %3572 = vmatprep.subr.mxu0 0.0
        %3573 = vmatpush1.msra.mxu0 0.0
        %3574 = vmatprep.subr.mxu0 0.0
        %3575 = vmatpush1.msra.mxu0 0.0
        %3576 = vmatprep.subr.mxu0 0.0
        %3577 = vmatpush1.msra.mxu0 0.0
        %3578 = vmatprep.subr.mxu0 0.0
        %3579 = vmatpush1.msra.mxu0 0.0
        %3580 = vmatprep.subr.mxu0 0.0
        %3581 = vmatpush1.msra.mxu0 0.0
        %3582 = vmatprep.subr.mxu0 0.0
        %3583 = vmatpush1.msra.mxu0 0.0
        %3584 = vmatprep.subr.mxu0 0.0
        %3585 = vmatpush1.msra.mxu0 0.0
        %3586 = vmatprep.subr.mxu0 0.0
        %3587 = vmatpush1.msra.mxu0 0.0
        %3588 = vmatprep.subr.mxu0 0.0
        %3589 = vmatpush1.msra.mxu0 0.0
        %3590 = vmatprep.subr.mxu0 0.0
        %3591 = vmatpush1.msra.mxu0 0.0
        %3592 = vmatprep.subr.mxu0 0.0
        %3593 = vmatpush1.msra.mxu0 0.0
        %3594 = vmatprep.subr.mxu0 %v3564
        %3595 = vmatpush1.msra.mxu0 %v3563
        %3596 = vmatprep.subr.mxu0 %v3560
        %3597 = vmatpush1.msra.mxu0 %v3559
        %3598 = vmatprep.subr.mxu0 %v3556
        %3599 = vmatpush1.msra.mxu0 %v3555
        %3600 = vmatprep.subr.mxu0 %v3552
        %3601 = vmatpush1.msra.mxu0 %v3551
        %3602 = vmatprep.subr.mxu0 0.0
        %3603 = vmatpush2.msra.mxu0 0.0
        %3604 = vmatprep.subr.mxu0 0.0
        %3605 = vmatpush2.msra.mxu0 0.0
        %3606 = vmatprep.subr.mxu0 0.0
        %3607 = vmatpush2.msra.mxu0 0.0
        %3608 = vmatprep.subr.mxu0 0.0
        %3609 = vmatpush2.msra.mxu0 0.0
        %3610 = vmatprep.subr.mxu0 0.0
        %3611 = vmatpush2.msra.mxu0 0.0
        %3612 = vmatprep.subr.mxu0 0.0
        %3613 = vmatpush2.msra.mxu0 0.0
        %3614 = vmatprep.subr.mxu0 0.0
        %3615 = vmatpush2.msra.mxu0 0.0
        %3616 = vmatprep.subr.mxu0 0.0
        %3617 = vmatpush2.msra.mxu0 0.0
        %3618 = vmatprep.subr.mxu0 0.0
        %3619 = vmatpush2.msra.mxu0 0.0
        %3620 = vmatprep.subr.mxu0 0.0
        %3621 = vmatpush2.msra.mxu0 0.0
        %3622 = vmatprep.subr.mxu0 0.0
        %3623 = vmatpush2.msra.mxu0 0.0
        %3624 = vmatprep.subr.mxu0 0.0
        %3625 = vmatpush2.msra.mxu0 0.0
        %3626 = vmatprep.subr.mxu0 0.0
        %3627 = vmatpush2.msra.mxu0 0.0
        %3628 = vmatprep.subr.mxu0 0.0
        %3629 = vmatpush2.msra.mxu0 0.0
        %3630 = vmatprep.subr.mxu0 0.0
        %3631 = vmatpush2.msra.mxu0 0.0
        %3632 = vmatprep.subr.mxu0 0.0
        %3633 = vmatpush2.msra.mxu0 0.0
        %3634 = vmatprep.mubr.f32.mxu0 0.0
        %3635 = vmatmul.mubr.f32.gmra.mxu0 %v3568
        %v3636 = vpop.f32.mrf.mxu0
        %v3637 = vadd.f32 0.0, %v3636
        %v3638 = vpop.f32.mrf.mxu0
        %v3639 = vadd.f32 0.0, %v3638
        %3640 = vdwg.mxu0
        %3641 = vmatprep.subr.mxu0 0.0
        %3642 = vmatpush1.msra.mxu0 0.0
        %3643 = vmatprep.subr.mxu0 0.0
        %3644 = vmatpush1.msra.mxu0 0.0
        %3645 = vmatprep.subr.mxu0 0.0
        %3646 = vmatpush1.msra.mxu0 0.0
        %3647 = vmatprep.subr.mxu0 0.0
        %3648 = vmatpush1.msra.mxu0 0.0
        %3649 = vmatprep.subr.mxu0 0.0
        %3650 = vmatpush1.msra.mxu0 0.0
        %3651 = vmatprep.subr.mxu0 0.0
        %3652 = vmatpush1.msra.mxu0 0.0
        %3653 = vmatprep.subr.mxu0 0.0
        %3654 = vmatpush1.msra.mxu0 0.0
        %3655 = vmatprep.subr.mxu0 0.0
        %3656 = vmatpush1.msra.mxu0 0.0
        %3657 = vmatprep.subr.mxu0 0.0
        %3658 = vmatpush1.msra.mxu0 0.0
        %3659 = vmatprep.subr.mxu0 0.0
        %3660 = vmatpush1.msra.mxu0 0.0
        %3661 = vmatprep.subr.mxu0 0.0
        %3662 = vmatpush1.msra.mxu0 0.0
        %3663 = vmatprep.subr.mxu0 0.0
        %3664 = vmatpush1.msra.mxu0 0.0
        %3665 = vmatprep.subr.mxu0 %v3566
        %3666 = vmatpush1.msra.mxu0 %v3565
        %3667 = vmatprep.subr.mxu0 %v3562
        %3668 = vmatpush1.msra.mxu0 %v3561
        %3669 = vmatprep.subr.mxu0 %v3558
        %3670 = vmatpush1.msra.mxu0 %v3557
        %3671 = vmatprep.subr.mxu0 %v3554
        %3672 = vmatpush1.msra.mxu0 %v3553
        %3673 = vmatprep.subr.mxu0 0.0
        %3674 = vmatpush2.msra.mxu0 0.0
        %3675 = vmatprep.subr.mxu0 0.0
        %3676 = vmatpush2.msra.mxu0 0.0
        %3677 = vmatprep.subr.mxu0 0.0
        %3678 = vmatpush2.msra.mxu0 0.0
        %3679 = vmatprep.subr.mxu0 0.0
        %3680 = vmatpush2.msra.mxu0 0.0
        %3681 = vmatprep.subr.mxu0 0.0
        %3682 = vmatpush2.msra.mxu0 0.0
        %3683 = vmatprep.subr.mxu0 0.0
        %3684 = vmatpush2.msra.mxu0 0.0
        %3685 = vmatprep.subr.mxu0 0.0
        %3686 = vmatpush2.msra.mxu0 0.0
        %3687 = vmatprep.subr.mxu0 0.0
        %3688 = vmatpush2.msra.mxu0 0.0
        %3689 = vmatprep.subr.mxu0 0.0
        %3690 = vmatpush2.msra.mxu0 0.0
        %3691 = vmatprep.subr.mxu0 0.0
        %3692 = vmatpush2.msra.mxu0 0.0
        %3693 = vmatprep.subr.mxu0 0.0
        %3694 = vmatpush2.msra.mxu0 0.0
        %3695 = vmatprep.subr.mxu0 0.0
        %3696 = vmatpush2.msra.mxu0 0.0
        %3697 = vmatprep.subr.mxu0 0.0
        %3698 = vmatpush2.msra.mxu0 0.0
        %3699 = vmatprep.subr.mxu0 0.0
        %3700 = vmatpush2.msra.mxu0 0.0
        %3701 = vmatprep.subr.mxu0 0.0
        %3702 = vmatpush2.msra.mxu0 0.0
        %3703 = vmatprep.subr.mxu0 0.0
        %3704 = vmatpush2.msra.mxu0 0.0
        %3705 = vmatprep.mubr.f32.mxu0 0.0
        %3706 = vmatmul.mubr.f32.gmra.mxu0 %v3568
        %v3707 = vpop.f32.mrf.mxu0
        %v3708 = vadd.f32 0.0, %v3707
        %v3709 = vpop.f32.mrf.mxu0
        %v3710 = vadd.f32 0.0, %v3709
        %3711 = vdwg.mxu0
        %v3716 = vcombine.low %v3637, %v3639
        %v3717 = vcombine.low %v3708, %v3710
        %v3719 = vunpack.c.l.s4 1966171168
        %v3720 = vunpack.c.0.s8 %v3719
        %v3721 = vlaneseq
        %v3722 = vshrl.u32 %v3721, 7
        %v3723 = vsub.s32 %v3720, %v3722
        %v3724 = vrot.slane %v3716, %v3723
        %v3726 = vunpack.c.l.s4 1966171168
        %v3727 = vunpack.c.0.s8 %v3726
        %v3728 = vlaneseq
        %v3729 = vshrl.u32 %v3728, 7
        %v3730 = vsub.s32 %v3727, %v3729
        %v3731 = vrot.slane %v3717, %v3730
        %v3732 = vcombine.low %v3724, %v3731
        %v3734 = vunpack.c.l.s4 1966171168
        %v3735 = vunpack.c.0.s8 %v3734
        %v3736 = vlaneseq
        %v3737 = vshrl.u32 %v3736, 7
        %v3738 = vsub.s32 %v3735, %v3737
        %v3739 = vrot.slane %v3732, %v3738
        %v3741 = vadd.f32 %v3550, %v3739
        %v3742 = vtanh.pop %v3741
        %v3743 = vmul.f32 %v3742, 0.5
        %v3744 = vadd.f32 %v3743, 0.5
        %v3746 = vrot.slane %v3742, 1
        %v3748 = vmul.f32 %v3746, 0.5
        %v3749 = vadd.f32 %v3748, 0.5
        %v3750 = vrot.slane %v3742, 3
        %v3752 = vmul.f32 %v3750, 0.5
        %v3753 = vadd.f32 %v3752, 0.5
        %v3754 = vmul.f32 %v3749, %v3332
        %v3755 = vrot.slane %v3742, 2
        %v3757 = vmul.f32 %v3744, %v3755
        %v3758 = vadd.f32 %v3754, %v3757
        %v3759 = vtanh.pop %v3758
        %v3760 = vmul.f32 %v3753, %v3759
        %3761 = vst.msk [vmem:[#allocation2 + $0x6] sm:$0x1] %vm1204, %v3548
        %3762 = vst.msk [vmem:[#allocation3 + $0x1] sm:$0x1] %vm1204, %v3760
        %s3763 = scalar_lea.vmem [#allocation4], 7
        %v3764 = vld [vmem:[%s3763] ss:$8 sm:$0xf]
        %v3765 = vld [vmem:[%s318] sm:$0xff]
        %v3766 = vld [vmem:[%s318 + $0x8] sm:$0xff]
        %v3767 = vld [vmem:[%s318 + $0x10] sm:$0xff]
        %v3768 = vld [vmem:[%s318 + $0x18] sm:$0xff]
        %v3769 = vld [vmem:[%s318 + $0x20] sm:$0xff]
        %v3770 = vld [vmem:[%s318 + $0x28] sm:$0xff]
        %v3771 = vld [vmem:[%s318 + $0x30] sm:$0xff]
        %v3772 = vld [vmem:[%s318 + $0x38] sm:$0xff]
        %v3773 = vld [vmem:[%s318 + $0x40] sm:$0xff]
        %v3774 = vld [vmem:[%s318 + $0x48] sm:$0xff]
        %v3775 = vld [vmem:[%s318 + $0x50] sm:$0xff]
        %v3776 = vld [vmem:[%s318 + $0x58] sm:$0xff]
        %v3777 = vld [vmem:[%s318 + $0x60] sm:$0xff]
        %v3778 = vld [vmem:[%s318 + $0x68] sm:$0xff]
        %v3779 = vld [vmem:[%s318 + $0x70] sm:$0xff]
        %v3780 = vld [vmem:[%s318 + $0x78] sm:$0xff]
        %v3782 = vsel %vm799, %v3548, 0
        %3784 = vmatprep.subr.mxu0 0.0
        %3785 = vmatpush1.msra.mxu0 0.0
        %3786 = vmatprep.subr.mxu0 0.0
        %3787 = vmatpush1.msra.mxu0 0.0
        %3788 = vmatprep.subr.mxu0 0.0
        %3789 = vmatpush1.msra.mxu0 0.0
        %3790 = vmatprep.subr.mxu0 0.0
        %3791 = vmatpush1.msra.mxu0 0.0
        %3792 = vmatprep.subr.mxu0 0.0
        %3793 = vmatpush1.msra.mxu0 0.0
        %3794 = vmatprep.subr.mxu0 0.0
        %3795 = vmatpush1.msra.mxu0 0.0
        %3796 = vmatprep.subr.mxu0 0.0
        %3797 = vmatpush1.msra.mxu0 0.0
        %3798 = vmatprep.subr.mxu0 0.0
        %3799 = vmatpush1.msra.mxu0 0.0
        %3800 = vmatprep.subr.mxu0 0.0
        %3801 = vmatpush1.msra.mxu0 0.0
        %3802 = vmatprep.subr.mxu0 0.0
        %3803 = vmatpush1.msra.mxu0 0.0
        %3804 = vmatprep.subr.mxu0 0.0
        %3805 = vmatpush1.msra.mxu0 0.0
        %3806 = vmatprep.subr.mxu0 0.0
        %3807 = vmatpush1.msra.mxu0 0.0
        %3808 = vmatprep.subr.mxu0 %v3778
        %3809 = vmatpush1.msra.mxu0 %v3777
        %3810 = vmatprep.subr.mxu0 %v3774
        %3811 = vmatpush1.msra.mxu0 %v3773
        %3812 = vmatprep.subr.mxu0 %v3770
        %3813 = vmatpush1.msra.mxu0 %v3769
        %3814 = vmatprep.subr.mxu0 %v3766
        %3815 = vmatpush1.msra.mxu0 %v3765
        %3816 = vmatprep.subr.mxu0 0.0
        %3817 = vmatpush2.msra.mxu0 0.0
        %3818 = vmatprep.subr.mxu0 0.0
        %3819 = vmatpush2.msra.mxu0 0.0
        %3820 = vmatprep.subr.mxu0 0.0
        %3821 = vmatpush2.msra.mxu0 0.0
        %3822 = vmatprep.subr.mxu0 0.0
        %3823 = vmatpush2.msra.mxu0 0.0
        %3824 = vmatprep.subr.mxu0 0.0
        %3825 = vmatpush2.msra.mxu0 0.0
        %3826 = vmatprep.subr.mxu0 0.0
        %3827 = vmatpush2.msra.mxu0 0.0
        %3828 = vmatprep.subr.mxu0 0.0
        %3829 = vmatpush2.msra.mxu0 0.0
        %3830 = vmatprep.subr.mxu0 0.0
        %3831 = vmatpush2.msra.mxu0 0.0
        %3832 = vmatprep.subr.mxu0 0.0
        %3833 = vmatpush2.msra.mxu0 0.0
        %3834 = vmatprep.subr.mxu0 0.0
        %3835 = vmatpush2.msra.mxu0 0.0
        %3836 = vmatprep.subr.mxu0 0.0
        %3837 = vmatpush2.msra.mxu0 0.0
        %3838 = vmatprep.subr.mxu0 0.0
        %3839 = vmatpush2.msra.mxu0 0.0
        %3840 = vmatprep.subr.mxu0 0.0
        %3841 = vmatpush2.msra.mxu0 0.0
        %3842 = vmatprep.subr.mxu0 0.0
        %3843 = vmatpush2.msra.mxu0 0.0
        %3844 = vmatprep.subr.mxu0 0.0
        %3845 = vmatpush2.msra.mxu0 0.0
        %3846 = vmatprep.subr.mxu0 0.0
        %3847 = vmatpush2.msra.mxu0 0.0
        %3848 = vmatprep.mubr.f32.mxu0 0.0
        %3849 = vmatmul.mubr.f32.gmra.mxu0 %v3782
        %v3850 = vpop.f32.mrf.mxu0
        %v3851 = vadd.f32 0.0, %v3850
        %v3852 = vpop.f32.mrf.mxu0
        %v3853 = vadd.f32 0.0, %v3852
        %3854 = vdwg.mxu0
        %3855 = vmatprep.subr.mxu0 0.0
        %3856 = vmatpush1.msra.mxu0 0.0
        %3857 = vmatprep.subr.mxu0 0.0
        %3858 = vmatpush1.msra.mxu0 0.0
        %3859 = vmatprep.subr.mxu0 0.0
        %3860 = vmatpush1.msra.mxu0 0.0
        %3861 = vmatprep.subr.mxu0 0.0
        %3862 = vmatpush1.msra.mxu0 0.0
        %3863 = vmatprep.subr.mxu0 0.0
        %3864 = vmatpush1.msra.mxu0 0.0
        %3865 = vmatprep.subr.mxu0 0.0
        %3866 = vmatpush1.msra.mxu0 0.0
        %3867 = vmatprep.subr.mxu0 0.0
        %3868 = vmatpush1.msra.mxu0 0.0
        %3869 = vmatprep.subr.mxu0 0.0
        %3870 = vmatpush1.msra.mxu0 0.0
        %3871 = vmatprep.subr.mxu0 0.0
        %3872 = vmatpush1.msra.mxu0 0.0
        %3873 = vmatprep.subr.mxu0 0.0
        %3874 = vmatpush1.msra.mxu0 0.0
        %3875 = vmatprep.subr.mxu0 0.0
        %3876 = vmatpush1.msra.mxu0 0.0
        %3877 = vmatprep.subr.mxu0 0.0
        %3878 = vmatpush1.msra.mxu0 0.0
        %3879 = vmatprep.subr.mxu0 %v3780
        %3880 = vmatpush1.msra.mxu0 %v3779
        %3881 = vmatprep.subr.mxu0 %v3776
        %3882 = vmatpush1.msra.mxu0 %v3775
        %3883 = vmatprep.subr.mxu0 %v3772
        %3884 = vmatpush1.msra.mxu0 %v3771
        %3885 = vmatprep.subr.mxu0 %v3768
        %3886 = vmatpush1.msra.mxu0 %v3767
        %3887 = vmatprep.subr.mxu0 0.0
        %3888 = vmatpush2.msra.mxu0 0.0
        %3889 = vmatprep.subr.mxu0 0.0
        %3890 = vmatpush2.msra.mxu0 0.0
        %3891 = vmatprep.subr.mxu0 0.0
        %3892 = vmatpush2.msra.mxu0 0.0
        %3893 = vmatprep.subr.mxu0 0.0
        %3894 = vmatpush2.msra.mxu0 0.0
        %3895 = vmatprep.subr.mxu0 0.0
        %3896 = vmatpush2.msra.mxu0 0.0
        %3897 = vmatprep.subr.mxu0 0.0
        %3898 = vmatpush2.msra.mxu0 0.0
        %3899 = vmatprep.subr.mxu0 0.0
        %3900 = vmatpush2.msra.mxu0 0.0
        %3901 = vmatprep.subr.mxu0 0.0
        %3902 = vmatpush2.msra.mxu0 0.0
        %3903 = vmatprep.subr.mxu0 0.0
        %3904 = vmatpush2.msra.mxu0 0.0
        %3905 = vmatprep.subr.mxu0 0.0
        %3906 = vmatpush2.msra.mxu0 0.0
        %3907 = vmatprep.subr.mxu0 0.0
        %3908 = vmatpush2.msra.mxu0 0.0
        %3909 = vmatprep.subr.mxu0 0.0
        %3910 = vmatpush2.msra.mxu0 0.0
        %3911 = vmatprep.subr.mxu0 0.0
        %3912 = vmatpush2.msra.mxu0 0.0
        %3913 = vmatprep.subr.mxu0 0.0
        %3914 = vmatpush2.msra.mxu0 0.0
        %3915 = vmatprep.subr.mxu0 0.0
        %3916 = vmatpush2.msra.mxu0 0.0
        %3917 = vmatprep.subr.mxu0 0.0
        %3918 = vmatpush2.msra.mxu0 0.0
        %3919 = vmatprep.mubr.f32.mxu0 0.0
        %3920 = vmatmul.mubr.f32.gmra.mxu0 %v3782
        %v3921 = vpop.f32.mrf.mxu0
        %v3922 = vadd.f32 0.0, %v3921
        %v3923 = vpop.f32.mrf.mxu0
        %v3924 = vadd.f32 0.0, %v3923
        %3925 = vdwg.mxu0
        %v3930 = vcombine.low %v3851, %v3853
        %v3931 = vcombine.low %v3922, %v3924
        %v3933 = vunpack.c.l.s4 1966171168
        %v3934 = vunpack.c.0.s8 %v3933
        %v3935 = vlaneseq
        %v3936 = vshrl.u32 %v3935, 7
        %v3937 = vsub.s32 %v3934, %v3936
        %v3938 = vrot.slane %v3930, %v3937
        %v3940 = vunpack.c.l.s4 1966171168
        %v3941 = vunpack.c.0.s8 %v3940
        %v3942 = vlaneseq
        %v3943 = vshrl.u32 %v3942, 7
        %v3944 = vsub.s32 %v3941, %v3943
        %v3945 = vrot.slane %v3931, %v3944
        %v3946 = vcombine.low %v3938, %v3945
        %v3948 = vunpack.c.l.s4 1966171168
        %v3949 = vunpack.c.0.s8 %v3948
        %v3950 = vlaneseq
        %v3951 = vshrl.u32 %v3950, 7
        %v3952 = vsub.s32 %v3949, %v3951
        %v3953 = vrot.slane %v3946, %v3952
        %v3955 = vadd.f32 %v3764, %v3953
        %v3956 = vtanh.pop %v3955
        %v3957 = vmul.f32 %v3956, 0.5
        %v3958 = vadd.f32 %v3957, 0.5
        %v3960 = vrot.slane %v3956, 1
        %v3962 = vmul.f32 %v3960, 0.5
        %v3963 = vadd.f32 %v3962, 0.5
        %v3964 = vrot.slane %v3956, 3
        %v3966 = vmul.f32 %v3964, 0.5
        %v3967 = vadd.f32 %v3966, 0.5
        %v3968 = vmul.f32 %v3963, %v3546
        %v3969 = vrot.slane %v3956, 2
        %v3971 = vmul.f32 %v3958, %v3969
        %v3972 = vadd.f32 %v3968, %v3971
        %v3973 = vtanh.pop %v3972
        %v3974 = vmul.f32 %v3967, %v3973
        %v3975 = vld [vmem:[#allocation5] ss:$8 sm:$0xf]
        %v3976 = vld [vmem:[%s996] sm:$0xff]
        %v3977 = vld [vmem:[%s996 + $0x8] sm:$0xff]
        %v3978 = vld [vmem:[%s996 + $0x10] sm:$0xff]
        %v3979 = vld [vmem:[%s996 + $0x18] sm:$0xff]
        %v3980 = vld [vmem:[%s996 + $0x20] sm:$0xff]
        %v3981 = vld [vmem:[%s996 + $0x28] sm:$0xff]
        %v3982 = vld [vmem:[%s996 + $0x30] sm:$0xff]
        %v3983 = vld [vmem:[%s996 + $0x38] sm:$0xff]
        %v3984 = vld [vmem:[%s996 + $0x40] sm:$0xff]
        %v3985 = vld [vmem:[%s996 + $0x48] sm:$0xff]
        %v3986 = vld [vmem:[%s996 + $0x50] sm:$0xff]
        %v3987 = vld [vmem:[%s996 + $0x58] sm:$0xff]
        %v3988 = vld [vmem:[%s996 + $0x60] sm:$0xff]
        %v3989 = vld [vmem:[%s996 + $0x68] sm:$0xff]
        %v3990 = vld [vmem:[%s996 + $0x70] sm:$0xff]
        %v3991 = vld [vmem:[%s996 + $0x78] sm:$0xff]
        %v3993 = vsel %vm799, %v3760, 0
        %3995 = vmatprep.subr.mxu0 0.0
        %3996 = vmatpush1.msra.mxu0 0.0
        %3997 = vmatprep.subr.mxu0 0.0
        %3998 = vmatpush1.msra.mxu0 0.0
        %3999 = vmatprep.subr.mxu0 0.0
        %4000 = vmatpush1.msra.mxu0 0.0
        %4001 = vmatprep.subr.mxu0 0.0
        %4002 = vmatpush1.msra.mxu0 0.0
        %4003 = vmatprep.subr.mxu0 0.0
        %4004 = vmatpush1.msra.mxu0 0.0
        %4005 = vmatprep.subr.mxu0 0.0
        %4006 = vmatpush1.msra.mxu0 0.0
        %4007 = vmatprep.subr.mxu0 0.0
        %4008 = vmatpush1.msra.mxu0 0.0
        %4009 = vmatprep.subr.mxu0 0.0
        %4010 = vmatpush1.msra.mxu0 0.0
        %4011 = vmatprep.subr.mxu0 0.0
        %4012 = vmatpush1.msra.mxu0 0.0
        %4013 = vmatprep.subr.mxu0 0.0
        %4014 = vmatpush1.msra.mxu0 0.0
        %4015 = vmatprep.subr.mxu0 0.0
        %4016 = vmatpush1.msra.mxu0 0.0
        %4017 = vmatprep.subr.mxu0 0.0
        %4018 = vmatpush1.msra.mxu0 0.0
        %4019 = vmatprep.subr.mxu0 %v3989
        %4020 = vmatpush1.msra.mxu0 %v3988
        %4021 = vmatprep.subr.mxu0 %v3985
        %4022 = vmatpush1.msra.mxu0 %v3984
        %4023 = vmatprep.subr.mxu0 %v3981
        %4024 = vmatpush1.msra.mxu0 %v3980
        %4025 = vmatprep.subr.mxu0 %v3977
        %4026 = vmatpush1.msra.mxu0 %v3976
        %4027 = vmatprep.subr.mxu0 0.0
        %4028 = vmatpush2.msra.mxu0 0.0
        %4029 = vmatprep.subr.mxu0 0.0
        %4030 = vmatpush2.msra.mxu0 0.0
        %4031 = vmatprep.subr.mxu0 0.0
        %4032 = vmatpush2.msra.mxu0 0.0
        %4033 = vmatprep.subr.mxu0 0.0
        %4034 = vmatpush2.msra.mxu0 0.0
        %4035 = vmatprep.subr.mxu0 0.0
        %4036 = vmatpush2.msra.mxu0 0.0
        %4037 = vmatprep.subr.mxu0 0.0
        %4038 = vmatpush2.msra.mxu0 0.0
        %4039 = vmatprep.subr.mxu0 0.0
        %4040 = vmatpush2.msra.mxu0 0.0
        %4041 = vmatprep.subr.mxu0 0.0
        %4042 = vmatpush2.msra.mxu0 0.0
        %4043 = vmatprep.subr.mxu0 0.0
        %4044 = vmatpush2.msra.mxu0 0.0
        %4045 = vmatprep.subr.mxu0 0.0
        %4046 = vmatpush2.msra.mxu0 0.0
        %4047 = vmatprep.subr.mxu0 0.0
        %4048 = vmatpush2.msra.mxu0 0.0
        %4049 = vmatprep.subr.mxu0 0.0
        %4050 = vmatpush2.msra.mxu0 0.0
        %4051 = vmatprep.subr.mxu0 0.0
        %4052 = vmatpush2.msra.mxu0 0.0
        %4053 = vmatprep.subr.mxu0 0.0
        %4054 = vmatpush2.msra.mxu0 0.0
        %4055 = vmatprep.subr.mxu0 0.0
        %4056 = vmatpush2.msra.mxu0 0.0
        %4057 = vmatprep.subr.mxu0 0.0
        %4058 = vmatpush2.msra.mxu0 0.0
        %4059 = vmatprep.mubr.f32.mxu0 0.0
        %4060 = vmatmul.mubr.f32.gmra.mxu0 %v3993
        %v4061 = vpop.f32.mrf.mxu0
        %v4062 = vadd.f32 0.0, %v4061
        %v4063 = vpop.f32.mrf.mxu0
        %v4064 = vadd.f32 0.0, %v4063
        %4065 = vdwg.mxu0
        %4066 = vmatprep.subr.mxu0 0.0
        %4067 = vmatpush1.msra.mxu0 0.0
        %4068 = vmatprep.subr.mxu0 0.0
        %4069 = vmatpush1.msra.mxu0 0.0
        %4070 = vmatprep.subr.mxu0 0.0
        %4071 = vmatpush1.msra.mxu0 0.0
        %4072 = vmatprep.subr.mxu0 0.0
        %4073 = vmatpush1.msra.mxu0 0.0
        %4074 = vmatprep.subr.mxu0 0.0
        %4075 = vmatpush1.msra.mxu0 0.0
        %4076 = vmatprep.subr.mxu0 0.0
        %4077 = vmatpush1.msra.mxu0 0.0
        %4078 = vmatprep.subr.mxu0 0.0
        %4079 = vmatpush1.msra.mxu0 0.0
        %4080 = vmatprep.subr.mxu0 0.0
        %4081 = vmatpush1.msra.mxu0 0.0
        %4082 = vmatprep.subr.mxu0 0.0
        %4083 = vmatpush1.msra.mxu0 0.0
        %4084 = vmatprep.subr.mxu0 0.0
        %4085 = vmatpush1.msra.mxu0 0.0
        %4086 = vmatprep.subr.mxu0 0.0
        %4087 = vmatpush1.msra.mxu0 0.0
        %4088 = vmatprep.subr.mxu0 0.0
        %4089 = vmatpush1.msra.mxu0 0.0
        %4090 = vmatprep.subr.mxu0 %v3991
        %4091 = vmatpush1.msra.mxu0 %v3990
        %4092 = vmatprep.subr.mxu0 %v3987
        %4093 = vmatpush1.msra.mxu0 %v3986
        %4094 = vmatprep.subr.mxu0 %v3983
        %4095 = vmatpush1.msra.mxu0 %v3982
        %4096 = vmatprep.subr.mxu0 %v3979
        %4097 = vmatpush1.msra.mxu0 %v3978
        %4098 = vmatprep.subr.mxu0 0.0
        %4099 = vmatpush2.msra.mxu0 0.0
        %4100 = vmatprep.subr.mxu0 0.0
        %4101 = vmatpush2.msra.mxu0 0.0
        %4102 = vmatprep.subr.mxu0 0.0
        %4103 = vmatpush2.msra.mxu0 0.0
        %4104 = vmatprep.subr.mxu0 0.0
        %4105 = vmatpush2.msra.mxu0 0.0
        %4106 = vmatprep.subr.mxu0 0.0
        %4107 = vmatpush2.msra.mxu0 0.0
        %4108 = vmatprep.subr.mxu0 0.0
        %4109 = vmatpush2.msra.mxu0 0.0
        %4110 = vmatprep.subr.mxu0 0.0
        %4111 = vmatpush2.msra.mxu0 0.0
        %4112 = vmatprep.subr.mxu0 0.0
        %4113 = vmatpush2.msra.mxu0 0.0
        %4114 = vmatprep.subr.mxu0 0.0
        %4115 = vmatpush2.msra.mxu0 0.0
        %4116 = vmatprep.subr.mxu0 0.0
        %4117 = vmatpush2.msra.mxu0 0.0
        %4118 = vmatprep.subr.mxu0 0.0
        %4119 = vmatpush2.msra.mxu0 0.0
        %4120 = vmatprep.subr.mxu0 0.0
        %4121 = vmatpush2.msra.mxu0 0.0
        %4122 = vmatprep.subr.mxu0 0.0
        %4123 = vmatpush2.msra.mxu0 0.0
        %4124 = vmatprep.subr.mxu0 0.0
        %4125 = vmatpush2.msra.mxu0 0.0
        %4126 = vmatprep.subr.mxu0 0.0
        %4127 = vmatpush2.msra.mxu0 0.0
        %4128 = vmatprep.subr.mxu0 0.0
        %4129 = vmatpush2.msra.mxu0 0.0
        %4130 = vmatprep.mubr.f32.mxu0 0.0
        %4131 = vmatmul.mubr.f32.gmra.mxu0 %v3993
        %v4132 = vpop.f32.mrf.mxu0
        %v4133 = vadd.f32 0.0, %v4132
        %v4134 = vpop.f32.mrf.mxu0
        %v4135 = vadd.f32 0.0, %v4134
        %4136 = vdwg.mxu0
        %v4141 = vcombine.low %v4062, %v4064
        %v4142 = vcombine.low %v4133, %v4135
        %v4144 = vunpack.c.l.s4 1966171168
        %v4145 = vunpack.c.0.s8 %v4144
        %v4146 = vlaneseq
        %v4147 = vshrl.u32 %v4146, 7
        %v4148 = vsub.s32 %v4145, %v4147
        %v4149 = vrot.slane %v4141, %v4148
        %v4151 = vunpack.c.l.s4 1966171168
        %v4152 = vunpack.c.0.s8 %v4151
        %v4153 = vlaneseq
        %v4154 = vshrl.u32 %v4153, 7
        %v4155 = vsub.s32 %v4152, %v4154
        %v4156 = vrot.slane %v4142, %v4155
        %v4157 = vcombine.low %v4149, %v4156
        %v4159 = vunpack.c.l.s4 1966171168
        %v4160 = vunpack.c.0.s8 %v4159
        %v4161 = vlaneseq
        %v4162 = vshrl.u32 %v4161, 7
        %v4163 = vsub.s32 %v4160, %v4162
        %v4164 = vrot.slane %v4157, %v4163
        %v4166 = vadd.f32 %v3975, %v4164
        %v4167 = vtanh.pop %v4166
        %v4168 = vmul.f32 %v4167, 0.5
        %v4169 = vadd.f32 %v4168, 0.5
        %v4171 = vrot.slane %v4167, 1
        %v4173 = vmul.f32 %v4171, 0.5
        %v4174 = vadd.f32 %v4173, 0.5
        %v4175 = vrot.slane %v4167, 3
        %v4177 = vmul.f32 %v4175, 0.5
        %v4178 = vadd.f32 %v4177, 0.5
        %v4179 = vmul.f32 %v4174, %v3758
        %v4180 = vrot.slane %v4167, 2
        %v4182 = vmul.f32 %v4169, %v4180
        %v4183 = vadd.f32 %v4179, %v4182
        %v4184 = vtanh.pop %v4183
        %v4185 = vmul.f32 %v4178, %v4184
        %4186 = vst.msk [vmem:[#allocation2 + $0x7] sm:$0x1] %vm1204, %v3974
        %4187 = vst.msk [vmem:[#allocation3] sm:$0x1] %vm1204, %v4185
        %v4188 = vld [vmem:[#allocation3] sm:$0xff]
        %4190 = vrot.lane.b32.xlu0 %v4188, 32
        %v4191 = vpop.permute.xlu0 %4190
        %vm4193 = vcmask 523520
        %4194 = vst.msk [vmem:[#allocation2] sm:$0xff] %vm4193, %v4191
        %p4195 = scmp.eq.s32.totalorder %s25, 2
        // Predicated region
        $region69: #{tpu_custom_call.1} parent=43 // pred_check
          %p4196 = pneg %p4195
        $region70: #{tpu_custom_call.1} parent=43 // pred_check_branch
          %4198 = sbr.rel (%p4196) target = $region72
        $region71: #{tpu_custom_call.1} parent=43 // pred_region
          %v4199 = vld [vmem:[#allocation2] sm:$0xff]
          %v4200 = vld [vmem:[#allocation14] sm:$0xff]
          %v4201 = vld [vmem:[#allocation14 + $0x8] sm:$0xff]
          %v4202 = vld [vmem:[#allocation14 + $0x10] sm:$0xff]
          %v4203 = vld [vmem:[#allocation14 + $0x18] sm:$0xff]
          %v4204 = vld [vmem:[#allocation14 + $0x20] sm:$0xff]
          %v4205 = vld [vmem:[#allocation14 + $0x28] sm:$0xff]
          %v4206 = vld [vmem:[#allocation14 + $0x30] sm:$0xff]
          %v4207 = vld [vmem:[#allocation14 + $0x38] sm:$0xff]
          %v4208 = vld [vmem:[%s5] sm:$0x1]
          %v4210 = vlaneseq
          %v4211 = vshrl.u32 %v4210, 7
          %v4212 = vsub.s32 0, %v4211
          %v4213 = vrot.slane %v4208, %v4212
          %v4216 = vsel %vm430, %v4199, 0
          %4218 = vmatprep.subr.mxu0 0.0
          %4219 = vmatpush1.msra.mxu0 0.0
          %4220 = vmatprep.subr.mxu0 0.0
          %4221 = vmatpush1.msra.mxu0 0.0
          %4222 = vmatprep.subr.mxu0 0.0
          %4223 = vmatpush1.msra.mxu0 0.0
          %4224 = vmatprep.subr.mxu0 0.0
          %4225 = vmatpush1.msra.mxu0 0.0
          %4226 = vmatprep.subr.mxu0 0.0
          %4227 = vmatpush1.msra.mxu0 0.0
          %4228 = vmatprep.subr.mxu0 0.0
          %4229 = vmatpush1.msra.mxu0 0.0
          %4230 = vmatprep.subr.mxu0 0.0
          %4231 = vmatpush1.msra.mxu0 0.0
          %4232 = vmatprep.subr.mxu0 0.0
          %4233 = vmatpush1.msra.mxu0 0.0
          %4234 = vmatprep.subr.mxu0 0.0
          %4235 = vmatpush1.msra.mxu0 %v4207
          %4236 = vmatprep.subr.mxu0 0.0
          %4237 = vmatpush1.msra.mxu0 %v4206
          %4238 = vmatprep.subr.mxu0 0.0
          %4239 = vmatpush1.msra.mxu0 %v4205
          %4240 = vmatprep.subr.mxu0 0.0
          %4241 = vmatpush1.msra.mxu0 %v4204
          %4242 = vmatprep.subr.mxu0 0.0
          %4243 = vmatpush1.msra.mxu0 %v4203
          %4244 = vmatprep.subr.mxu0 0.0
          %4245 = vmatpush1.msra.mxu0 %v4202
          %4246 = vmatprep.subr.mxu0 0.0
          %4247 = vmatpush1.msra.mxu0 %v4201
          %4248 = vmatprep.subr.mxu0 0.0
          %4249 = vmatpush1.msra.mxu0 %v4200
          %4250 = vmatprep.subr.mxu0 0.0
          %4251 = vmatpush2.msra.mxu0 0.0
          %4252 = vmatprep.subr.mxu0 0.0
          %4253 = vmatpush2.msra.mxu0 0.0
          %4254 = vmatprep.subr.mxu0 0.0
          %4255 = vmatpush2.msra.mxu0 0.0
          %4256 = vmatprep.subr.mxu0 0.0
          %4257 = vmatpush2.msra.mxu0 0.0
          %4258 = vmatprep.subr.mxu0 0.0
          %4259 = vmatpush2.msra.mxu0 0.0
          %4260 = vmatprep.subr.mxu0 0.0
          %4261 = vmatpush2.msra.mxu0 0.0
          %4262 = vmatprep.subr.mxu0 0.0
          %4263 = vmatpush2.msra.mxu0 0.0
          %4264 = vmatprep.subr.mxu0 0.0
          %4265 = vmatpush2.msra.mxu0 0.0
          %4266 = vmatprep.subr.mxu0 0.0
          %4267 = vmatpush2.msra.mxu0 0.0
          %4268 = vmatprep.subr.mxu0 0.0
          %4269 = vmatpush2.msra.mxu0 0.0
          %4270 = vmatprep.subr.mxu0 0.0
          %4271 = vmatpush2.msra.mxu0 0.0
          %4272 = vmatprep.subr.mxu0 0.0
          %4273 = vmatpush2.msra.mxu0 0.0
          %4274 = vmatprep.subr.mxu0 0.0
          %4275 = vmatpush2.msra.mxu0 0.0
          %4276 = vmatprep.subr.mxu0 0.0
          %4277 = vmatpush2.msra.mxu0 0.0
          %4278 = vmatprep.subr.mxu0 0.0
          %4279 = vmatpush2.msra.mxu0 0.0
          %4280 = vmatprep.subr.mxu0 0.0
          %4281 = vmatpush2.msra.mxu0 0.0
          %4282 = vmatprep.mubr.f32.mxu0 0.0
          %4283 = vmatmul.mubr.f32.gmra.mxu0 %v4216
          %v4284 = vpop.f32.mrf.mxu0
          %v4285 = vadd.f32 %v4213, %v4284
          %v4286 = vpop.f32.mrf.mxu0
          %4287 = vdwg.mxu0
          %4288 = vmax.xlane.f32.xlu0 %v4285
          %v4289 = vpop.xlane.xlu0 %4288
          %v4290 = vsub.f32 %v4285, %v4289
          %v4291 = vmul.f32 %v4290, 1.442695
          %v4292 = vpow.pop %v4291
          %4293 = vadd.xlane.f32.xlu0 %v4292
          %v4294 = vpop.xlane.xlu0 %4293
          %v4295 = vlog2.pop %v4294
          %v4296 = vmul.f32 %v4295, 0.6931472
          %v4297 = vsub.f32 %v4290, %v4296
          %4298 = vst [vmem:[#allocation15] sm:$0xff] %v4297
        $region72: #{tpu_custom_call.1} parent=43 // pred_fallthru
          _
        // Predicated region
        $region73: #{tpu_custom_call.1} parent=43 // pred_check
          %p4299 = pneg %p179
        $region74: #{tpu_custom_call.1} parent=43 // pred_check_branch
          %4301 = sbr.rel (%p4299) target = $region76
        $region75: #{tpu_custom_call.1} parent=43 // pred_region
          %s4303 = ssub.s32 128, 128
          %4304 = vsyncadd [#allocation8], %s4303
          %s4306 = sshll.u32 [#allocation15], 4
          %s4307 = int_to_ptr.vmem [resolvable:$true] %s4306
          %4309 = dma.vmem_to_hbm [thread:$0]  %s4307, 128, %s6, [#allocation8]
        $region76: #{tpu_custom_call.1} parent=43 // pred_fallthru
          _
        // Predicated region
        $region77: #{tpu_custom_call.1} parent=43 // pred_check
          %p4310 = pneg %p179
        $region78: #{tpu_custom_call.1} parent=43 // pred_check_branch
          %4312 = sbr.rel (%p4310) target = $region80
        $region79: #{tpu_custom_call.1} parent=43 // pred_region
          %4313 = dma.done [#allocation8], 128
        $region80: #{tpu_custom_call.1} parent=43 // pred_fallthru
          _
      $region44: #{tpu_custom_call.1} parent=5 // pred_fallthru
        _
      %p4314 = scmp.le.s32.totalorder 2, %s20
      // Predicated region
      $region81: #{tpu_custom_call.1} parent=5 // pred_check
        %p4315 = pneg %p4314
      $region82: #{tpu_custom_call.1} parent=5 // pred_check_branch
        %4317 = sbr.rel (%p4315) target = $region84
      $region83: #{tpu_custom_call.1} parent=5 // pred_region
        %s4318 = ssub.s32 %s20, 2
      $region84: #{tpu_custom_call.1} parent=5 // pred_fallthru
        _
    $region6: #{tpu_custom_call.1} parent=1 // loop_footer
      %s24 = sadd.s32 1, %s20
    $region7: #{tpu_custom_call.1} parent=1 // loop_footer_branch
      %19 = sbr.rel target = $region3
    $region8: #{tpu_custom_call.1} parent=1 // loop_exit
      _
    %4319 = vsyncpa [#allocation7], 1
    %s4320 = scalar_lea.sflag [#allocation7], 1
    %4321 = vsyncpa %s4320, 1
    %4322 = vsyncpa [#allocation10], 1
    %s4323 = scalar_lea.sflag [#allocation10], 1
    %4324 = vsyncpa %s4323, 1
    %4325 = vsyncpa [#allocation13], 1
    %s4326 = scalar_lea.sflag [#allocation13], 1
    %4327 = vsyncpa %s4326, 1
    %4328 = vsyncpa [#allocation8], 1
    %s4329 = scalar_lea.sflag [#allocation8], 1
    %4330 = vsyncpa %s4329, 1

</llo_original>
